<compile_context>
chip_gen: v7x
topology: tpu7x:2x2x1
jax: 0.10.0
libtpu: 0.0.40
codegen_flags: <defaults>
</compile_context>

<pallas_src>
import math
import functools
import numpy as np
import jax
import jax.numpy as jnp
from jax.experimental import pallas as pl
from jax.experimental.pallas import tpu as pltpu

STATE_DIM = 12
ACTION_DIM = 6
HIDDEN_DIM = 32
NUM_HEADS = 4
BATCH = 2
SEQ = 8
BP = 8          # batch padded to a full sublane group


def robot_arm_kernel(
    x_ref,          # (T*BP, D)  time-major, batch padded to BP=8 sublanes
    wih0_ref,       # (D, 4H)    layer-0 input weights (pre-transposed)
    whh0_ref,       # (H, 4H)    layer-0 recurrent weights (pre-transposed)
    b0_ref,         # (1, 4H)    b_ih0 + b_hh0
    wih1_ref,       # (H, 4H)    layer-1 input weights (pre-transposed)
    whh1_ref,       # (H, 4H)    layer-1 recurrent weights (pre-transposed)
    b1_ref,         # (1, 4H)    b_ih1 + b_hh1
    wtail_ref,      # (H, H)     wv.T @ out_proj.T @ fc1.T  (length-1 softmax == 1)
    btail_ref,      # (1, H)
    w2_ref,         # (H, A)
    b2_ref,         # (1, A)
    out_ref,        # (B, A)
):
    TB, D = x_ref.shape
    H = whh0_ref.shape[0]
    B = out_ref.shape[0]
    T = TB // BP

    whh0 = whh0_ref[...]
    wih1 = wih1_ref[...]
    whh1 = whh1_ref[...]
    # Pre-broadcast layer-1 bias once (JAX does not CSE broadcast_in_dim).
    b1 = jnp.broadcast_to(b1_ref[...], (BP, 4 * H))

    # Hoisted layer-0 input projection for ALL timesteps: one MXU matmul, off
    # the recurrent critical path.  Layer-0 bias folded in here.
    gates_in0 = (
        jnp.dot(x_ref[...], wih0_ref[...], preferred_element_type=jnp.float32)
        + b0_ref[...]
    )  # (T*BP, 4H)

    def apply_gates(gates, c):
        # PyTorch gate order: i, f, g, o.  sigmoid via a single EUP tanh push
        # (0.5*tanh(0.5*x)+0.5 == sigmoid(x)); whole-vreg nonlinearity then
        # 32-lane slices (full-vreg EUP op costs the same as a sliced one).
        s = 0.5 * jnp.tanh(0.5 * gates) + 0.5
        tg = jnp.tanh(gates)
        i = s[:, 0 * H:1 * H]
        f = s[:, 1 * H:2 * H]
        g = tg[:, 2 * H:3 * H]
        o = s[:, 3 * H:4 * H]
        c_new = f * c + i * g
        h_new = o * jnp.tanh(c_new)
        return h_new, c_new

    zeros = jnp.zeros((BP, H), jnp.float32)
    h0, c0, h1, c1 = zeros, zeros, zeros, zeros

    # Static unroll over time (T is a compile-time constant) so the LLO
    # scheduler can interleave MXU / EUP / VPU work across timesteps.
    for t in range(T):
        # Layer-1 recurrent contribution: depends only on h1_{t-1}, so it can
        # issue a full cell ahead of the h0_t crossover; b1 folded in here.
        g1_pre = jnp.dot(h1, whh1, preferred_element_type=jnp.float32) + b1
        # Layer 0: input projection precomputed; only h0 @ W_hh0 on the chain.
        # The per-step slice is a vreg-aligned (BP, 4H) tile.
        g0 = gates_in0[t * BP:(t + 1) * BP, :] + jnp.dot(
            h0, whh0, preferred_element_type=jnp.float32)
        h0, c0 = apply_gates(g0, c0)
        # Layer-1 crossover: just one K=32 matmul + one add after h0_t.
        g1 = g1_pre + jnp.dot(h0, wih1, preferred_element_type=jnp.float32)
        h1, c1 = apply_gates(g1, c1)

    last = h1   # rows 0..B-1 == lstm_out[:, -1, :]; rows B..BP are padding

    # Length-1 self-attention: softmax over a single key is identically 1, so
    # the attention output equals the V projection; V-proj + out_proj + fc1
    # were fused into one (H, H) weight in prepare_params().  Then ReLU + fc2.
    hidden = jnp.maximum(
        jnp.dot(last, wtail_ref[...], preferred_element_type=jnp.float32)
        + btail_ref[...],
        0.0)
    result = (
        jnp.dot(hidden, w2_ref[...], preferred_element_type=jnp.float32)
        + b2_ref[...])
    out_ref[...] = result[:B, :]


def init_params(key, state_dim=STATE_DIM, action_dim=ACTION_DIM, hidden_dim=HIDDEN_DIM):
    H = hidden_dim
    ks = jax.random.split(key, 16)
    s = 1.0 / math.sqrt(H)

    def u(k, shape):
        return jax.random.uniform(k, shape, jnp.float32, -s, s)

    return dict(
        w_ih0=u(ks[0], (4 * H, state_dim)), w_hh0=u(ks[1], (4 * H, H)),
        b_ih0=u(ks[2], (4 * H,)),           b_hh0=u(ks[3], (4 * H,)),
        w_ih1=u(ks[4], (4 * H, H)),         w_hh1=u(ks[5], (4 * H, H)),
        b_ih1=u(ks[6], (4 * H,)),           b_hh1=u(ks[7], (4 * H,)),
        in_proj_w=u(ks[8], (3 * H, H)),     in_proj_b=jnp.zeros((3 * H,), jnp.float32),
        out_proj_w=u(ks[9], (H, H)),        out_proj_b=jnp.zeros((H,), jnp.float32),
        fc1_w=u(ks[10], (H, H)),            fc1_b=u(ks[11], (H,)),
        fc2_w=u(ks[12], (action_dim, H)),   fc2_b=u(ks[13], (action_dim,)),
    )


def prepare_params(params):
    """One-time weight prep, outside the per-inference hot path."""
    H = HIDDEN_DIM
    p = params
    # Fuse attention V-proj + out_proj + fc1 (length-1 softmax is exactly 1).
    wv = p["in_proj_w"][2 * H:3 * H]            # (H, H)
    bv = p["in_proj_b"][2 * H:3 * H]
    wtail = wv.T @ p["out_proj_w"].T @ p["fc1_w"].T                          # (H, H)
    btail = (bv @ p["out_proj_w"].T + p["out_proj_b"]) @ p["fc1_w"].T + p["fc1_b"]
    prep = dict(
        wih0=p["w_ih0"].T, whh0=p["w_hh0"].T,
        b0=(p["b_ih0"] + p["b_hh0"])[None, :],
        wih1=p["w_ih1"].T, whh1=p["w_hh1"].T,
        b1=(p["b_ih1"] + p["b_hh1"])[None, :],
        wtail=wtail, btail=btail[None, :],
        w2=p["fc2_w"].T, b2=p["fc2_b"][None, :],
    )
    return jax.tree_util.tree_map(jax.block_until_ready, prep)


def robot_arm_forward(prep, x):
    B, T, D = x.shape
    assert B <= BP
    A = prep["w2"].shape[1]

    # Time-major, batch padded to 8 sublanes so each timestep's slice of the
    # precomputed layer-0 gates is one full vreg-aligned tile.
    x_tm = jnp.transpose(x, (1, 0, 2))                               # (T, B, D)
    x_pad = jnp.pad(x_tm, ((0, 0), (0, BP - B), (0, 0))).reshape(T * BP, D)

    args = (
        x_pad,
        prep["wih0"], prep["whh0"], prep["b0"],
        prep["wih1"], prep["whh1"], prep["b1"],
        prep["wtail"], prep["btail"],
        prep["w2"], prep["b2"],
    )

    # Tiny, latency-bound kernel: total operand footprint ~70 KiB, so no grid /
    # BlockSpec tiling / pipelining — keep all operands VMEM-resident.
    vmem = pl.BlockSpec(memory_space=pltpu.MemorySpace.VMEM)
    return pl.pallas_call(
        robot_arm_kernel,
        out_shape=jax.ShapeDtypeStruct((B, A), jnp.float32),
        in_specs=[vmem] * len(args),
        out_specs=vmem,
    )(*args)


def reference_forward(params, x):
    """Pure-JAX reference replicating the PyTorch forward exactly."""
    B, T, D = x.shape
    H = HIDDEN_DIM
    p = params

    def cell(x_t, h, c, wih, whh, bih, bhh):
        gates = x_t @ wih.T + bih + h @ whh.T + bhh
        i = jax.nn.sigmoid(gates[:, 0 * H:1 * H])
        f = jax.nn.sigmoid(gates[:, 1 * H:2 * H])
        g = jnp.tanh(gates[:, 2 * H:3 * H])
        o = jax.nn.sigmoid(gates[:, 3 * H:4 * H])
        c = f * c + i * g
        return o * jnp.tanh(c), c

    h0 = c0 = h1 = c1 = jnp.zeros((B, H), jnp.float32)
    for t in range(T):
        h0, c0 = cell(x[:, t, :], h0, c0, p["w_ih0"], p["w_hh0"], p["b_ih0"], p["b_hh0"])
        h1, c1 = cell(h0, h1, c1, p["w_ih1"], p["w_hh1"], p["b_ih1"], p["b_hh1"])
    last = h1

    nh, hd = NUM_HEADS, H // NUM_HEADS
    qkv = last @ p["in_proj_w"].T + p["in_proj_b"]
    q, k, v = qkv[:, :H], qkv[:, H:2 * H], qkv[:, 2 * H:]
    q3, k3, v3 = (a.reshape(B, nh, hd) for a in (q, k, v))
    scores = jnp.sum(q3 * k3, -1, keepdims=True) / math.sqrt(hd)
    w = jax.nn.softmax(scores, axis=-1)              # length-1 key axis -> 1.0
    attn = (w * v3).reshape(B, H) @ p["out_proj_w"].T + p["out_proj_b"]
    fc1 = jax.nn.relu(attn @ p["fc1_w"].T + p["fc1_b"])
    return fc1 @ p["fc2_w"].T + p["fc2_b"]


if __name__ == "__main__":
    key = jax.random.PRNGKey(0)
    k_param, k_x = jax.random.split(key)
    params = init_params(k_param)
    x = jax.random.normal(k_x, (BATCH, SEQ, STATE_DIM), jnp.float32)

    # One-time weight prep outside the hot path; per-call path is just the
    # x transpose/pad + pallas_call (jitted into a single program).
    prep = prepare_params(params)
    forward = jax.jit(functools.partial(robot_arm_forward, prep))

    out = jax.block_until_ready(forward(x))

    ref = jax.block_until_ready(reference_forward(params, x))
    assert out.shape == (BATCH, ACTION_DIM)
    np.testing.assert_allclose(np.asarray(out), np.asarray(ref), atol=2e-5, rtol=2e-5)

    print("KERNEL_OK")
</pallas_src>

<mosaic_0001>
module attributes {stable_mosaic.version = 11 : i64} {
  func.func @robot_arm_kernel(%arg0: memref<64x12xf32, #tpu.memory_space<vmem>>, %arg1: memref<12x128xf32, #tpu.memory_space<vmem>>, %arg2: memref<32x128xf32, #tpu.memory_space<vmem>>, %arg3: memref<1x128xf32, #tpu.memory_space<vmem>>, %arg4: memref<32x128xf32, #tpu.memory_space<vmem>>, %arg5: memref<32x128xf32, #tpu.memory_space<vmem>>, %arg6: memref<1x128xf32, #tpu.memory_space<vmem>>, %arg7: memref<32x32xf32, #tpu.memory_space<vmem>>, %arg8: memref<1x32xf32, #tpu.memory_space<vmem>>, %arg9: memref<32x6xf32, #tpu.memory_space<vmem>>, %arg10: memref<1x6xf32, #tpu.memory_space<vmem>>, %arg11: memref<2x6xf32, #tpu.memory_space<vmem>>) attributes {dimension_semantics = [], scalar_prefetch = 0 : i64, scratch_operands = 0 : i64, tpu.core_type = #tpu.core_type<tc>} {
    %c0 = arith.constant 0 : index
    %c0_0 = arith.constant 0 : index
    %0 = vector.load %arg2[%c0, %c0_0] : memref<32x128xf32, #tpu.memory_space<vmem>>, vector<32x128xf32>
    %c0_1 = arith.constant 0 : index
    %c0_2 = arith.constant 0 : index
    %1 = vector.load %arg4[%c0_1, %c0_2] : memref<32x128xf32, #tpu.memory_space<vmem>>, vector<32x128xf32>
    %c0_3 = arith.constant 0 : index
    %c0_4 = arith.constant 0 : index
    %2 = vector.load %arg5[%c0_3, %c0_4] : memref<32x128xf32, #tpu.memory_space<vmem>>, vector<32x128xf32>
    %c0_5 = arith.constant 0 : index
    %c0_6 = arith.constant 0 : index
    %3 = vector.load %arg6[%c0_5, %c0_6] : memref<1x128xf32, #tpu.memory_space<vmem>>, vector<1x128xf32>
    %4 = vector.shape_cast %3 : vector<1x128xf32> to vector<1x128xf32>
    %5 = vector.broadcast %4 : vector<1x128xf32> to vector<8x128xf32>
    %c0_7 = arith.constant 0 : index
    %c0_8 = arith.constant 0 : index
    %6 = vector.load %arg0[%c0_7, %c0_8] : memref<64x12xf32, #tpu.memory_space<vmem>>, vector<64x12xf32>
    %c0_9 = arith.constant 0 : index
    %c0_10 = arith.constant 0 : index
    %7 = vector.load %arg1[%c0_9, %c0_10] : memref<12x128xf32, #tpu.memory_space<vmem>>, vector<12x128xf32>
    %cst = arith.constant dense<0.000000e+00> : vector<64x128xf32>
    %8 = tpu.matmul %6, %7, %cst {dimension_numbers = #tpu.dot_dimension_numbers<[1], [0], [0], [1], [0, 0, 1, 1], [], []>} : vector<64x12xf32>, vector<12x128xf32>, vector<64x128xf32> -> vector<64x128xf32>
    %c0_11 = arith.constant 0 : index
    %c0_12 = arith.constant 0 : index
    %9 = vector.load %arg3[%c0_11, %c0_12] : memref<1x128xf32, #tpu.memory_space<vmem>>, vector<1x128xf32>
    %10 = vector.broadcast %9 : vector<1x128xf32> to vector<64x128xf32>
    %11 = arith.addf %8, %10 : vector<64x128xf32>
    %cst_13 = arith.constant 0.000000e+00 : f32
    %12 = vector.broadcast %cst_13 : f32 to vector<8x32xf32>
    %cst_14 = arith.constant dense<0.000000e+00> : vector<8x128xf32>
    %13 = tpu.matmul %12, %2, %cst_14 {dimension_numbers = #tpu.dot_dimension_numbers<[1], [0], [0], [1], [0, 0, 1, 1], [], []>} : vector<8x32xf32>, vector<32x128xf32>, vector<8x128xf32> -> vector<8x128xf32>
    %14 = arith.addf %13, %5 : vector<8x128xf32>
    %15 = vector.extract_strided_slice %11 {offsets = [0, 0], sizes = [8, 128], strides = [1, 1]} : vector<64x128xf32> to vector<8x128xf32>
    %cst_15 = arith.constant dense<0.000000e+00> : vector<8x128xf32>
    %16 = tpu.matmul %12, %0, %cst_15 {dimension_numbers = #tpu.dot_dimension_numbers<[1], [0], [0], [1], [0, 0, 1, 1], [], []>} : vector<8x32xf32>, vector<32x128xf32>, vector<8x128xf32> -> vector<8x128xf32>
    %17 = arith.addf %15, %16 : vector<8x128xf32>
    %cst_16 = arith.constant 5.000000e-01 : f32
    %18 = vector.broadcast %cst_16 : f32 to vector<8x128xf32>
    %19 = arith.mulf %18, %17 : vector<8x128xf32>
    %20 = math.tanh %19 : vector<8x128xf32>
    %cst_17 = arith.constant 5.000000e-01 : f32
    %21 = vector.broadcast %cst_17 : f32 to vector<8x128xf32>
    %22 = arith.mulf %21, %20 : vector<8x128xf32>
    %cst_18 = arith.constant 5.000000e-01 : f32
    %23 = vector.broadcast %cst_18 : f32 to vector<8x128xf32>
    %24 = arith.addf %22, %23 : vector<8x128xf32>
    %25 = math.tanh %17 : vector<8x128xf32>
    %26 = vector.extract_strided_slice %24 {offsets = [0, 0], sizes = [8, 32], strides = [1, 1]} : vector<8x128xf32> to vector<8x32xf32>
    %27 = vector.extract_strided_slice %24 {offsets = [0, 32], sizes = [8, 32], strides = [1, 1]} : vector<8x128xf32> to vector<8x32xf32>
    %28 = vector.extract_strided_slice %25 {offsets = [0, 64], sizes = [8, 32], strides = [1, 1]} : vector<8x128xf32> to vector<8x32xf32>
    %29 = vector.extract_strided_slice %24 {offsets = [0, 96], sizes = [8, 32], strides = [1, 1]} : vector<8x128xf32> to vector<8x32xf32>
    %30 = arith.mulf %27, %12 : vector<8x32xf32>
    %31 = arith.mulf %26, %28 : vector<8x32xf32>
    %32 = arith.addf %30, %31 : vector<8x32xf32>
    %33 = math.tanh %32 : vector<8x32xf32>
    %34 = arith.mulf %29, %33 : vector<8x32xf32>
    %cst_19 = arith.constant dense<0.000000e+00> : vector<8x128xf32>
    %35 = tpu.matmul %34, %1, %cst_19 {dimension_numbers = #tpu.dot_dimension_numbers<[1], [0], [0], [1], [0, 0, 1, 1], [], []>} : vector<8x32xf32>, vector<32x128xf32>, vector<8x128xf32> -> vector<8x128xf32>
    %36 = arith.addf %14, %35 : vector<8x128xf32>
    %cst_20 = arith.constant 5.000000e-01 : f32
    %37 = vector.broadcast %cst_20 : f32 to vector<8x128xf32>
    %38 = arith.mulf %37, %36 : vector<8x128xf32>
    %39 = math.tanh %38 : vector<8x128xf32>
    %cst_21 = arith.constant 5.000000e-01 : f32
    %40 = vector.broadcast %cst_21 : f32 to vector<8x128xf32>
    %41 = arith.mulf %40, %39 : vector<8x128xf32>
    %cst_22 = arith.constant 5.000000e-01 : f32
    %42 = vector.broadcast %cst_22 : f32 to vector<8x128xf32>
    %43 = arith.addf %41, %42 : vector<8x128xf32>
    %44 = math.tanh %36 : vector<8x128xf32>
    %45 = vector.extract_strided_slice %43 {offsets = [0, 0], sizes = [8, 32], strides = [1, 1]} : vector<8x128xf32> to vector<8x32xf32>
    %46 = vector.extract_strided_slice %43 {offsets = [0, 32], sizes = [8, 32], strides = [1, 1]} : vector<8x128xf32> to vector<8x32xf32>
    %47 = vector.extract_strided_slice %44 {offsets = [0, 64], sizes = [8, 32], strides = [1, 1]} : vector<8x128xf32> to vector<8x32xf32>
    %48 = vector.extract_strided_slice %43 {offsets = [0, 96], sizes = [8, 32], strides = [1, 1]} : vector<8x128xf32> to vector<8x32xf32>
    %49 = arith.mulf %46, %12 : vector<8x32xf32>
    %50 = arith.mulf %45, %47 : vector<8x32xf32>
    %51 = arith.addf %49, %50 : vector<8x32xf32>
    %52 = math.tanh %51 : vector<8x32xf32>
    %53 = arith.mulf %48, %52 : vector<8x32xf32>
    %cst_23 = arith.constant dense<0.000000e+00> : vector<8x128xf32>
    %54 = tpu.matmul %53, %2, %cst_23 {dimension_numbers = #tpu.dot_dimension_numbers<[1], [0], [0], [1], [0, 0, 1, 1], [], []>} : vector<8x32xf32>, vector<32x128xf32>, vector<8x128xf32> -> vector<8x128xf32>
    %55 = arith.addf %54, %5 : vector<8x128xf32>
    %56 = vector.extract_strided_slice %11 {offsets = [8, 0], sizes = [8, 128], strides = [1, 1]} : vector<64x128xf32> to vector<8x128xf32>
    %cst_24 = arith.constant dense<0.000000e+00> : vector<8x128xf32>
    %57 = tpu.matmul %34, %0, %cst_24 {dimension_numbers = #tpu.dot_dimension_numbers<[1], [0], [0], [1], [0, 0, 1, 1], [], []>} : vector<8x32xf32>, vector<32x128xf32>, vector<8x128xf32> -> vector<8x128xf32>
    %58 = arith.addf %56, %57 : vector<8x128xf32>
    %cst_25 = arith.constant 5.000000e-01 : f32
    %59 = vector.broadcast %cst_25 : f32 to vector<8x128xf32>
    %60 = arith.mulf %59, %58 : vector<8x128xf32>
    %61 = math.tanh %60 : vector<8x128xf32>
    %cst_26 = arith.constant 5.000000e-01 : f32
    %62 = vector.broadcast %cst_26 : f32 to vector<8x128xf32>
    %63 = arith.mulf %62, %61 : vector<8x128xf32>
    %cst_27 = arith.constant 5.000000e-01 : f32
    %64 = vector.broadcast %cst_27 : f32 to vector<8x128xf32>
    %65 = arith.addf %63, %64 : vector<8x128xf32>
    %66 = math.tanh %58 : vector<8x128xf32>
    %67 = vector.extract_strided_slice %65 {offsets = [0, 0], sizes = [8, 32], strides = [1, 1]} : vector<8x128xf32> to vector<8x32xf32>
    %68 = vector.extract_strided_slice %65 {offsets = [0, 32], sizes = [8, 32], strides = [1, 1]} : vector<8x128xf32> to vector<8x32xf32>
    %69 = vector.extract_strided_slice %66 {offsets = [0, 64], sizes = [8, 32], strides = [1, 1]} : vector<8x128xf32> to vector<8x32xf32>
    %70 = vector.extract_strided_slice %65 {offsets = [0, 96], sizes = [8, 32], strides = [1, 1]} : vector<8x128xf32> to vector<8x32xf32>
    %71 = arith.mulf %68, %32 : vector<8x32xf32>
    %72 = arith.mulf %67, %69 : vector<8x32xf32>
    %73 = arith.addf %71, %72 : vector<8x32xf32>
    %74 = math.tanh %73 : vector<8x32xf32>
    %75 = arith.mulf %70, %74 : vector<8x32xf32>
    %cst_28 = arith.constant dense<0.000000e+00> : vector<8x128xf32>
    %76 = tpu.matmul %75, %1, %cst_28 {dimension_numbers = #tpu.dot_dimension_numbers<[1], [0], [0], [1], [0, 0, 1, 1], [], []>} : vector<8x32xf32>, vector<32x128xf32>, vector<8x128xf32> -> vector<8x128xf32>
    %77 = arith.addf %55, %76 : vector<8x128xf32>
    %cst_29 = arith.constant 5.000000e-01 : f32
    %78 = vector.broadcast %cst_29 : f32 to vector<8x128xf32>
    %79 = arith.mulf %78, %77 : vector<8x128xf32>
    %80 = math.tanh %79 : vector<8x128xf32>
    %cst_30 = arith.constant 5.000000e-01 : f32
    %81 = vector.broadcast %cst_30 : f32 to vector<8x128xf32>
    %82 = arith.mulf %81, %80 : vector<8x128xf32>
    %cst_31 = arith.constant 5.000000e-01 : f32
    %83 = vector.broadcast %cst_31 : f32 to vector<8x128xf32>
    %84 = arith.addf %82, %83 : vector<8x128xf32>
    %85 = math.tanh %77 : vector<8x128xf32>
    %86 = vector.extract_strided_slice %84 {offsets = [0, 0], sizes = [8, 32], strides = [1, 1]} : vector<8x128xf32> to vector<8x32xf32>
    %87 = vector.extract_strided_slice %84 {offsets = [0, 32], sizes = [8, 32], strides = [1, 1]} : vector<8x128xf32> to vector<8x32xf32>
    %88 = vector.extract_strided_slice %85 {offsets = [0, 64], sizes = [8, 32], strides = [1, 1]} : vector<8x128xf32> to vector<8x32xf32>
    %89 = vector.extract_strided_slice %84 {offsets = [0, 96], sizes = [8, 32], strides = [1, 1]} : vector<8x128xf32> to vector<8x32xf32>
    %90 = arith.mulf %87, %51 : vector<8x32xf32>
    %91 = arith.mulf %86, %88 : vector<8x32xf32>
    %92 = arith.addf %90, %91 : vector<8x32xf32>
    %93 = math.tanh %92 : vector<8x32xf32>
    %94 = arith.mulf %89, %93 : vector<8x32xf32>
    %cst_32 = arith.constant dense<0.000000e+00> : vector<8x128xf32>
    %95 = tpu.matmul %94, %2, %cst_32 {dimension_numbers = #tpu.dot_dimension_numbers<[1], [0], [0], [1], [0, 0, 1, 1], [], []>} : vector<8x32xf32>, vector<32x128xf32>, vector<8x128xf32> -> vector<8x128xf32>
    %96 = arith.addf %95, %5 : vector<8x128xf32>
    %97 = vector.extract_strided_slice %11 {offsets = [16, 0], sizes = [8, 128], strides = [1, 1]} : vector<64x128xf32> to vector<8x128xf32>
    %cst_33 = arith.constant dense<0.000000e+00> : vector<8x128xf32>
    %98 = tpu.matmul %75, %0, %cst_33 {dimension_numbers = #tpu.dot_dimension_numbers<[1], [0], [0], [1], [0, 0, 1, 1], [], []>} : vector<8x32xf32>, vector<32x128xf32>, vector<8x128xf32> -> vector<8x128xf32>
    %99 = arith.addf %97, %98 : vector<8x128xf32>
    %cst_34 = arith.constant 5.000000e-01 : f32
    %100 = vector.broadcast %cst_34 : f32 to vector<8x128xf32>
    %101 = arith.mulf %100, %99 : vector<8x128xf32>
    %102 = math.tanh %101 : vector<8x128xf32>
    %cst_35 = arith.constant 5.000000e-01 : f32
    %103 = vector.broadcast %cst_35 : f32 to vector<8x128xf32>
    %104 = arith.mulf %103, %102 : vector<8x128xf32>
    %cst_36 = arith.constant 5.000000e-01 : f32
    %105 = vector.broadcast %cst_36 : f32 to vector<8x128xf32>
    %106 = arith.addf %104, %105 : vector<8x128xf32>
    %107 = math.tanh %99 : vector<8x128xf32>
    %108 = vector.extract_strided_slice %106 {offsets = [0, 0], sizes = [8, 32], strides = [1, 1]} : vector<8x128xf32> to vector<8x32xf32>
    %109 = vector.extract_strided_slice %106 {offsets = [0, 32], sizes = [8, 32], strides = [1, 1]} : vector<8x128xf32> to vector<8x32xf32>
    %110 = vector.extract_strided_slice %107 {offsets = [0, 64], sizes = [8, 32], strides = [1, 1]} : vector<8x128xf32> to vector<8x32xf32>
    %111 = vector.extract_strided_slice %106 {offsets = [0, 96], sizes = [8, 32], strides = [1, 1]} : vector<8x128xf32> to vector<8x32xf32>
    %112 = arith.mulf %109, %73 : vector<8x32xf32>
    %113 = arith.mulf %108, %110 : vector<8x32xf32>
    %114 = arith.addf %112, %113 : vector<8x32xf32>
    %115 = math.tanh %114 : vector<8x32xf32>
    %116 = arith.mulf %111, %115 : vector<8x32xf32>
    %cst_37 = arith.constant dense<0.000000e+00> : vector<8x128xf32>
    %117 = tpu.matmul %116, %1, %cst_37 {dimension_numbers = #tpu.dot_dimension_numbers<[1], [0], [0], [1], [0, 0, 1, 1], [], []>} : vector<8x32xf32>, vector<32x128xf32>, vector<8x128xf32> -> vector<8x128xf32>
    %118 = arith.addf %96, %117 : vector<8x128xf32>
    %cst_38 = arith.constant 5.000000e-01 : f32
    %119 = vector.broadcast %cst_38 : f32 to vector<8x128xf32>
    %120 = arith.mulf %119, %118 : vector<8x128xf32>
    %121 = math.tanh %120 : vector<8x128xf32>
    %cst_39 = arith.constant 5.000000e-01 : f32
    %122 = vector.broadcast %cst_39 : f32 to vector<8x128xf32>
    %123 = arith.mulf %122, %121 : vector<8x128xf32>
    %cst_40 = arith.constant 5.000000e-01 : f32
    %124 = vector.broadcast %cst_40 : f32 to vector<8x128xf32>
    %125 = arith.addf %123, %124 : vector<8x128xf32>
    %126 = math.tanh %118 : vector<8x128xf32>
    %127 = vector.extract_strided_slice %125 {offsets = [0, 0], sizes = [8, 32], strides = [1, 1]} : vector<8x128xf32> to vector<8x32xf32>
    %128 = vector.extract_strided_slice %125 {offsets = [0, 32], sizes = [8, 32], strides = [1, 1]} : vector<8x128xf32> to vector<8x32xf32>
    %129 = vector.extract_strided_slice %126 {offsets = [0, 64], sizes = [8, 32], strides = [1, 1]} : vector<8x128xf32> to vector<8x32xf32>
    %130 = vector.extract_strided_slice %125 {offsets = [0, 96], sizes = [8, 32], strides = [1, 1]} : vector<8x128xf32> to vector<8x32xf32>
    %131 = arith.mulf %128, %92 : vector<8x32xf32>
    %132 = arith.mulf %127, %129 : vector<8x32xf32>
    %133 = arith.addf %131, %132 : vector<8x32xf32>
    %134 = math.tanh %133 : vector<8x32xf32>
    %135 = arith.mulf %130, %134 : vector<8x32xf32>
    %cst_41 = arith.constant dense<0.000000e+00> : vector<8x128xf32>
    %136 = tpu.matmul %135, %2, %cst_41 {dimension_numbers = #tpu.dot_dimension_numbers<[1], [0], [0], [1], [0, 0, 1, 1], [], []>} : vector<8x32xf32>, vector<32x128xf32>, vector<8x128xf32> -> vector<8x128xf32>
    %137 = arith.addf %136, %5 : vector<8x128xf32>
    %138 = vector.extract_strided_slice %11 {offsets = [24, 0], sizes = [8, 128], strides = [1, 1]} : vector<64x128xf32> to vector<8x128xf32>
    %cst_42 = arith.constant dense<0.000000e+00> : vector<8x128xf32>
    %139 = tpu.matmul %116, %0, %cst_42 {dimension_numbers = #tpu.dot_dimension_numbers<[1], [0], [0], [1], [0, 0, 1, 1], [], []>} : vector<8x32xf32>, vector<32x128xf32>, vector<8x128xf32> -> vector<8x128xf32>
    %140 = arith.addf %138, %139 : vector<8x128xf32>
    %cst_43 = arith.constant 5.000000e-01 : f32
    %141 = vector.broadcast %cst_43 : f32 to vector<8x128xf32>
    %142 = arith.mulf %141, %140 : vector<8x128xf32>
    %143 = math.tanh %142 : vector<8x128xf32>
    %cst_44 = arith.constant 5.000000e-01 : f32
    %144 = vector.broadcast %cst_44 : f32 to vector<8x128xf32>
    %145 = arith.mulf %144, %143 : vector<8x128xf32>
    %cst_45 = arith.constant 5.000000e-01 : f32
    %146 = vector.broadcast %cst_45 : f32 to vector<8x128xf32>
    %147 = arith.addf %145, %146 : vector<8x128xf32>
    %148 = math.tanh %140 : vector<8x128xf32>
    %149 = vector.extract_strided_slice %147 {offsets = [0, 0], sizes = [8, 32], strides = [1, 1]} : vector<8x128xf32> to vector<8x32xf32>
    %150 = vector.extract_strided_slice %147 {offsets = [0, 32], sizes = [8, 32], strides = [1, 1]} : vector<8x128xf32> to vector<8x32xf32>
    %151 = vector.extract_strided_slice %148 {offsets = [0, 64], sizes = [8, 32], strides = [1, 1]} : vector<8x128xf32> to vector<8x32xf32>
    %152 = vector.extract_strided_slice %147 {offsets = [0, 96], sizes = [8, 32], strides = [1, 1]} : vector<8x128xf32> to vector<8x32xf32>
    %153 = arith.mulf %150, %114 : vector<8x32xf32>
    %154 = arith.mulf %149, %151 : vector<8x32xf32>
    %155 = arith.addf %153, %154 : vector<8x32xf32>
    %156 = math.tanh %155 : vector<8x32xf32>
    %157 = arith.mulf %152, %156 : vector<8x32xf32>
    %cst_46 = arith.constant dense<0.000000e+00> : vector<8x128xf32>
    %158 = tpu.matmul %157, %1, %cst_46 {dimension_numbers = #tpu.dot_dimension_numbers<[1], [0], [0], [1], [0, 0, 1, 1], [], []>} : vector<8x32xf32>, vector<32x128xf32>, vector<8x128xf32> -> vector<8x128xf32>
    %159 = arith.addf %137, %158 : vector<8x128xf32>
    %cst_47 = arith.constant 5.000000e-01 : f32
    %160 = vector.broadcast %cst_47 : f32 to vector<8x128xf32>
    %161 = arith.mulf %160, %159 : vector<8x128xf32>
    %162 = math.tanh %161 : vector<8x128xf32>
    %cst_48 = arith.constant 5.000000e-01 : f32
    %163 = vector.broadcast %cst_48 : f32 to vector<8x128xf32>
    %164 = arith.mulf %163, %162 : vector<8x128xf32>
    %cst_49 = arith.constant 5.000000e-01 : f32
    %165 = vector.broadcast %cst_49 : f32 to vector<8x128xf32>
    %166 = arith.addf %164, %165 : vector<8x128xf32>
    %167 = math.tanh %159 : vector<8x128xf32>
    %168 = vector.extract_strided_slice %166 {offsets = [0, 0], sizes = [8, 32], strides = [1, 1]} : vector<8x128xf32> to vector<8x32xf32>
    %169 = vector.extract_strided_slice %166 {offsets = [0, 32], sizes = [8, 32], strides = [1, 1]} : vector<8x128xf32> to vector<8x32xf32>
    %170 = vector.extract_strided_slice %167 {offsets = [0, 64], sizes = [8, 32], strides = [1, 1]} : vector<8x128xf32> to vector<8x32xf32>
    %171 = vector.extract_strided_slice %166 {offsets = [0, 96], sizes = [8, 32], strides = [1, 1]} : vector<8x128xf32> to vector<8x32xf32>
    %172 = arith.mulf %169, %133 : vector<8x32xf32>
    %173 = arith.mulf %168, %170 : vector<8x32xf32>
    %174 = arith.addf %172, %173 : vector<8x32xf32>
    %175 = math.tanh %174 : vector<8x32xf32>
    %176 = arith.mulf %171, %175 : vector<8x32xf32>
    %cst_50 = arith.constant dense<0.000000e+00> : vector<8x128xf32>
    %177 = tpu.matmul %176, %2, %cst_50 {dimension_numbers = #tpu.dot_dimension_numbers<[1], [0], [0], [1], [0, 0, 1, 1], [], []>} : vector<8x32xf32>, vector<32x128xf32>, vector<8x128xf32> -> vector<8x128xf32>
    %178 = arith.addf %177, %5 : vector<8x128xf32>
    %179 = vector.extract_strided_slice %11 {offsets = [32, 0], sizes = [8, 128], strides = [1, 1]} : vector<64x128xf32> to vector<8x128xf32>
    %cst_51 = arith.constant dense<0.000000e+00> : vector<8x128xf32>
    %180 = tpu.matmul %157, %0, %cst_51 {dimension_numbers = #tpu.dot_dimension_numbers<[1], [0], [0], [1], [0, 0, 1, 1], [], []>} : vector<8x32xf32>, vector<32x128xf32>, vector<8x128xf32> -> vector<8x128xf32>
    %181 = arith.addf %179, %180 : vector<8x128xf32>
    %cst_52 = arith.constant 5.000000e-01 : f32
    %182 = vector.broadcast %cst_52 : f32 to vector<8x128xf32>
    %183 = arith.mulf %182, %181 : vector<8x128xf32>
    %184 = math.tanh %183 : vector<8x128xf32>
    %cst_53 = arith.constant 5.000000e-01 : f32
    %185 = vector.broadcast %cst_53 : f32 to vector<8x128xf32>
    %186 = arith.mulf %185, %184 : vector<8x128xf32>
    %cst_54 = arith.constant 5.000000e-01 : f32
    %187 = vector.broadcast %cst_54 : f32 to vector<8x128xf32>
    %188 = arith.addf %186, %187 : vector<8x128xf32>
    %189 = math.tanh %181 : vector<8x128xf32>
    %190 = vector.extract_strided_slice %188 {offsets = [0, 0], sizes = [8, 32], strides = [1, 1]} : vector<8x128xf32> to vector<8x32xf32>
    %191 = vector.extract_strided_slice %188 {offsets = [0, 32], sizes = [8, 32], strides = [1, 1]} : vector<8x128xf32> to vector<8x32xf32>
    %192 = vector.extract_strided_slice %189 {offsets = [0, 64], sizes = [8, 32], strides = [1, 1]} : vector<8x128xf32> to vector<8x32xf32>
    %193 = vector.extract_strided_slice %188 {offsets = [0, 96], sizes = [8, 32], strides = [1, 1]} : vector<8x128xf32> to vector<8x32xf32>
    %194 = arith.mulf %191, %155 : vector<8x32xf32>
    %195 = arith.mulf %190, %192 : vector<8x32xf32>
    %196 = arith.addf %194, %195 : vector<8x32xf32>
    %197 = math.tanh %196 : vector<8x32xf32>
    %198 = arith.mulf %193, %197 : vector<8x32xf32>
    %cst_55 = arith.constant dense<0.000000e+00> : vector<8x128xf32>
    %199 = tpu.matmul %198, %1, %cst_55 {dimension_numbers = #tpu.dot_dimension_numbers<[1], [0], [0], [1], [0, 0, 1, 1], [], []>} : vector<8x32xf32>, vector<32x128xf32>, vector<8x128xf32> -> vector<8x128xf32>
    %200 = arith.addf %178, %199 : vector<8x128xf32>
    %cst_56 = arith.constant 5.000000e-01 : f32
    %201 = vector.broadcast %cst_56 : f32 to vector<8x128xf32>
    %202 = arith.mulf %201, %200 : vector<8x128xf32>
    %203 = math.tanh %202 : vector<8x128xf32>
    %cst_57 = arith.constant 5.000000e-01 : f32
    %204 = vector.broadcast %cst_57 : f32 to vector<8x128xf32>
    %205 = arith.mulf %204, %203 : vector<8x128xf32>
    %cst_58 = arith.constant 5.000000e-01 : f32
    %206 = vector.broadcast %cst_58 : f32 to vector<8x128xf32>
    %207 = arith.addf %205, %206 : vector<8x128xf32>
    %208 = math.tanh %200 : vector<8x128xf32>
    %209 = vector.extract_strided_slice %207 {offsets = [0, 0], sizes = [8, 32], strides = [1, 1]} : vector<8x128xf32> to vector<8x32xf32>
    %210 = vector.extract_strided_slice %207 {offsets = [0, 32], sizes = [8, 32], strides = [1, 1]} : vector<8x128xf32> to vector<8x32xf32>
    %211 = vector.extract_strided_slice %208 {offsets = [0, 64], sizes = [8, 32], strides = [1, 1]} : vector<8x128xf32> to vector<8x32xf32>
    %212 = vector.extract_strided_slice %207 {offsets = [0, 96], sizes = [8, 32], strides = [1, 1]} : vector<8x128xf32> to vector<8x32xf32>
    %213 = arith.mulf %210, %174 : vector<8x32xf32>
    %214 = arith.mulf %209, %211 : vector<8x32xf32>
    %215 = arith.addf %213, %214 : vector<8x32xf32>
    %216 = math.tanh %215 : vector<8x32xf32>
    %217 = arith.mulf %212, %216 : vector<8x32xf32>
    %cst_59 = arith.constant dense<0.000000e+00> : vector<8x128xf32>
    %218 = tpu.matmul %217, %2, %cst_59 {dimension_numbers = #tpu.dot_dimension_numbers<[1], [0], [0], [1], [0, 0, 1, 1], [], []>} : vector<8x32xf32>, vector<32x128xf32>, vector<8x128xf32> -> vector<8x128xf32>
    %219 = arith.addf %218, %5 : vector<8x128xf32>
    %220 = vector.extract_strided_slice %11 {offsets = [40, 0], sizes = [8, 128], strides = [1, 1]} : vector<64x128xf32> to vector<8x128xf32>
    %cst_60 = arith.constant dense<0.000000e+00> : vector<8x128xf32>
    %221 = tpu.matmul %198, %0, %cst_60 {dimension_numbers = #tpu.dot_dimension_numbers<[1], [0], [0], [1], [0, 0, 1, 1], [], []>} : vector<8x32xf32>, vector<32x128xf32>, vector<8x128xf32> -> vector<8x128xf32>
    %222 = arith.addf %220, %221 : vector<8x128xf32>
    %cst_61 = arith.constant 5.000000e-01 : f32
    %223 = vector.broadcast %cst_61 : f32 to vector<8x128xf32>
    %224 = arith.mulf %223, %222 : vector<8x128xf32>
    %225 = math.tanh %224 : vector<8x128xf32>
    %cst_62 = arith.constant 5.000000e-01 : f32
    %226 = vector.broadcast %cst_62 : f32 to vector<8x128xf32>
    %227 = arith.mulf %226, %225 : vector<8x128xf32>
    %cst_63 = arith.constant 5.000000e-01 : f32
    %228 = vector.broadcast %cst_63 : f32 to vector<8x128xf32>
    %229 = arith.addf %227, %228 : vector<8x128xf32>
    %230 = math.tanh %222 : vector<8x128xf32>
    %231 = vector.extract_strided_slice %229 {offsets = [0, 0], sizes = [8, 32], strides = [1, 1]} : vector<8x128xf32> to vector<8x32xf32>
    %232 = vector.extract_strided_slice %229 {offsets = [0, 32], sizes = [8, 32], strides = [1, 1]} : vector<8x128xf32> to vector<8x32xf32>
    %233 = vector.extract_strided_slice %230 {offsets = [0, 64], sizes = [8, 32], strides = [1, 1]} : vector<8x128xf32> to vector<8x32xf32>
    %234 = vector.extract_strided_slice %229 {offsets = [0, 96], sizes = [8, 32], strides = [1, 1]} : vector<8x128xf32> to vector<8x32xf32>
    %235 = arith.mulf %232, %196 : vector<8x32xf32>
    %236 = arith.mulf %231, %233 : vector<8x32xf32>
    %237 = arith.addf %235, %236 : vector<8x32xf32>
    %238 = math.tanh %237 : vector<8x32xf32>
    %239 = arith.mulf %234, %238 : vector<8x32xf32>
    %cst_64 = arith.constant dense<0.000000e+00> : vector<8x128xf32>
    %240 = tpu.matmul %239, %1, %cst_64 {dimension_numbers = #tpu.dot_dimension_numbers<[1], [0], [0], [1], [0, 0, 1, 1], [], []>} : vector<8x32xf32>, vector<32x128xf32>, vector<8x128xf32> -> vector<8x128xf32>
    %241 = arith.addf %219, %240 : vector<8x128xf32>
    %cst_65 = arith.constant 5.000000e-01 : f32
    %242 = vector.broadcast %cst_65 : f32 to vector<8x128xf32>
    %243 = arith.mulf %242, %241 : vector<8x128xf32>
    %244 = math.tanh %243 : vector<8x128xf32>
    %cst_66 = arith.constant 5.000000e-01 : f32
    %245 = vector.broadcast %cst_66 : f32 to vector<8x128xf32>
    %246 = arith.mulf %245, %244 : vector<8x128xf32>
    %cst_67 = arith.constant 5.000000e-01 : f32
    %247 = vector.broadcast %cst_67 : f32 to vector<8x128xf32>
    %248 = arith.addf %246, %247 : vector<8x128xf32>
    %249 = math.tanh %241 : vector<8x128xf32>
    %250 = vector.extract_strided_slice %248 {offsets = [0, 0], sizes = [8, 32], strides = [1, 1]} : vector<8x128xf32> to vector<8x32xf32>
    %251 = vector.extract_strided_slice %248 {offsets = [0, 32], sizes = [8, 32], strides = [1, 1]} : vector<8x128xf32> to vector<8x32xf32>
    %252 = vector.extract_strided_slice %249 {offsets = [0, 64], sizes = [8, 32], strides = [1, 1]} : vector<8x128xf32> to vector<8x32xf32>
    %253 = vector.extract_strided_slice %248 {offsets = [0, 96], sizes = [8, 32], strides = [1, 1]} : vector<8x128xf32> to vector<8x32xf32>
    %254 = arith.mulf %251, %215 : vector<8x32xf32>
    %255 = arith.mulf %250, %252 : vector<8x32xf32>
    %256 = arith.addf %254, %255 : vector<8x32xf32>
    %257 = math.tanh %256 : vector<8x32xf32>
    %258 = arith.mulf %253, %257 : vector<8x32xf32>
    %cst_68 = arith.constant dense<0.000000e+00> : vector<8x128xf32>
    %259 = tpu.matmul %258, %2, %cst_68 {dimension_numbers = #tpu.dot_dimension_numbers<[1], [0], [0], [1], [0, 0, 1, 1], [], []>} : vector<8x32xf32>, vector<32x128xf32>, vector<8x128xf32> -> vector<8x128xf32>
    %260 = arith.addf %259, %5 : vector<8x128xf32>
    %261 = vector.extract_strided_slice %11 {offsets = [48, 0], sizes = [8, 128], strides = [1, 1]} : vector<64x128xf32> to vector<8x128xf32>
    %cst_69 = arith.constant dense<0.000000e+00> : vector<8x128xf32>
    %262 = tpu.matmul %239, %0, %cst_69 {dimension_numbers = #tpu.dot_dimension_numbers<[1], [0], [0], [1], [0, 0, 1, 1], [], []>} : vector<8x32xf32>, vector<32x128xf32>, vector<8x128xf32> -> vector<8x128xf32>
    %263 = arith.addf %261, %262 : vector<8x128xf32>
    %cst_70 = arith.constant 5.000000e-01 : f32
    %264 = vector.broadcast %cst_70 : f32 to vector<8x128xf32>
    %265 = arith.mulf %264, %263 : vector<8x128xf32>
    %266 = math.tanh %265 : vector<8x128xf32>
    %cst_71 = arith.constant 5.000000e-01 : f32
    %267 = vector.broadcast %cst_71 : f32 to vector<8x128xf32>
    %268 = arith.mulf %267, %266 : vector<8x128xf32>
    %cst_72 = arith.constant 5.000000e-01 : f32
    %269 = vector.broadcast %cst_72 : f32 to vector<8x128xf32>
    %270 = arith.addf %268, %269 : vector<8x128xf32>
    %271 = math.tanh %263 : vector<8x128xf32>
    %272 = vector.extract_strided_slice %270 {offsets = [0, 0], sizes = [8, 32], strides = [1, 1]} : vector<8x128xf32> to vector<8x32xf32>
    %273 = vector.extract_strided_slice %270 {offsets = [0, 32], sizes = [8, 32], strides = [1, 1]} : vector<8x128xf32> to vector<8x32xf32>
    %274 = vector.extract_strided_slice %271 {offsets = [0, 64], sizes = [8, 32], strides = [1, 1]} : vector<8x128xf32> to vector<8x32xf32>
    %275 = vector.extract_strided_slice %270 {offsets = [0, 96], sizes = [8, 32], strides = [1, 1]} : vector<8x128xf32> to vector<8x32xf32>
    %276 = arith.mulf %273, %237 : vector<8x32xf32>
    %277 = arith.mulf %272, %274 : vector<8x32xf32>
    %278 = arith.addf %276, %277 : vector<8x32xf32>
    %279 = math.tanh %278 : vector<8x32xf32>
    %280 = arith.mulf %275, %279 : vector<8x32xf32>
    %cst_73 = arith.constant dense<0.000000e+00> : vector<8x128xf32>
    %281 = tpu.matmul %280, %1, %cst_73 {dimension_numbers = #tpu.dot_dimension_numbers<[1], [0], [0], [1], [0, 0, 1, 1], [], []>} : vector<8x32xf32>, vector<32x128xf32>, vector<8x128xf32> -> vector<8x128xf32>
    %282 = arith.addf %260, %281 : vector<8x128xf32>
    %cst_74 = arith.constant 5.000000e-01 : f32
    %283 = vector.broadcast %cst_74 : f32 to vector<8x128xf32>
    %284 = arith.mulf %283, %282 : vector<8x128xf32>
    %285 = math.tanh %284 : vector<8x128xf32>
    %cst_75 = arith.constant 5.000000e-01 : f32
    %286 = vector.broadcast %cst_75 : f32 to vector<8x128xf32>
    %287 = arith.mulf %286, %285 : vector<8x128xf32>
    %cst_76 = arith.constant 5.000000e-01 : f32
    %288 = vector.broadcast %cst_76 : f32 to vector<8x128xf32>
    %289 = arith.addf %287, %288 : vector<8x128xf32>
    %290 = math.tanh %282 : vector<8x128xf32>
    %291 = vector.extract_strided_slice %289 {offsets = [0, 0], sizes = [8, 32], strides = [1, 1]} : vector<8x128xf32> to vector<8x32xf32>
    %292 = vector.extract_strided_slice %289 {offsets = [0, 32], sizes = [8, 32], strides = [1, 1]} : vector<8x128xf32> to vector<8x32xf32>
    %293 = vector.extract_strided_slice %290 {offsets = [0, 64], sizes = [8, 32], strides = [1, 1]} : vector<8x128xf32> to vector<8x32xf32>
    %294 = vector.extract_strided_slice %289 {offsets = [0, 96], sizes = [8, 32], strides = [1, 1]} : vector<8x128xf32> to vector<8x32xf32>
    %295 = arith.mulf %292, %256 : vector<8x32xf32>
    %296 = arith.mulf %291, %293 : vector<8x32xf32>
    %297 = arith.addf %295, %296 : vector<8x32xf32>
    %298 = math.tanh %297 : vector<8x32xf32>
    %299 = arith.mulf %294, %298 : vector<8x32xf32>
    %cst_77 = arith.constant dense<0.000000e+00> : vector<8x128xf32>
    %300 = tpu.matmul %299, %2, %cst_77 {dimension_numbers = #tpu.dot_dimension_numbers<[1], [0], [0], [1], [0, 0, 1, 1], [], []>} : vector<8x32xf32>, vector<32x128xf32>, vector<8x128xf32> -> vector<8x128xf32>
    %301 = arith.addf %300, %5 : vector<8x128xf32>
    %302 = vector.extract_strided_slice %11 {offsets = [56, 0], sizes = [8, 128], strides = [1, 1]} : vector<64x128xf32> to vector<8x128xf32>
    %cst_78 = arith.constant dense<0.000000e+00> : vector<8x128xf32>
    %303 = tpu.matmul %280, %0, %cst_78 {dimension_numbers = #tpu.dot_dimension_numbers<[1], [0], [0], [1], [0, 0, 1, 1], [], []>} : vector<8x32xf32>, vector<32x128xf32>, vector<8x128xf32> -> vector<8x128xf32>
    %304 = arith.addf %302, %303 : vector<8x128xf32>
    %cst_79 = arith.constant 5.000000e-01 : f32
    %305 = vector.broadcast %cst_79 : f32 to vector<8x128xf32>
    %306 = arith.mulf %305, %304 : vector<8x128xf32>
    %307 = math.tanh %306 : vector<8x128xf32>
    %cst_80 = arith.constant 5.000000e-01 : f32
    %308 = vector.broadcast %cst_80 : f32 to vector<8x128xf32>
    %309 = arith.mulf %308, %307 : vector<8x128xf32>
    %cst_81 = arith.constant 5.000000e-01 : f32
    %310 = vector.broadcast %cst_81 : f32 to vector<8x128xf32>
    %311 = arith.addf %309, %310 : vector<8x128xf32>
    %312 = math.tanh %304 : vector<8x128xf32>
    %313 = vector.extract_strided_slice %311 {offsets = [0, 0], sizes = [8, 32], strides = [1, 1]} : vector<8x128xf32> to vector<8x32xf32>
    %314 = vector.extract_strided_slice %311 {offsets = [0, 32], sizes = [8, 32], strides = [1, 1]} : vector<8x128xf32> to vector<8x32xf32>
    %315 = vector.extract_strided_slice %312 {offsets = [0, 64], sizes = [8, 32], strides = [1, 1]} : vector<8x128xf32> to vector<8x32xf32>
    %316 = vector.extract_strided_slice %311 {offsets = [0, 96], sizes = [8, 32], strides = [1, 1]} : vector<8x128xf32> to vector<8x32xf32>
    %317 = arith.mulf %314, %278 : vector<8x32xf32>
    %318 = arith.mulf %313, %315 : vector<8x32xf32>
    %319 = arith.addf %317, %318 : vector<8x32xf32>
    %320 = math.tanh %319 : vector<8x32xf32>
    %321 = arith.mulf %316, %320 : vector<8x32xf32>
    %cst_82 = arith.constant dense<0.000000e+00> : vector<8x128xf32>
    %322 = tpu.matmul %321, %1, %cst_82 {dimension_numbers = #tpu.dot_dimension_numbers<[1], [0], [0], [1], [0, 0, 1, 1], [], []>} : vector<8x32xf32>, vector<32x128xf32>, vector<8x128xf32> -> vector<8x128xf32>
    %323 = arith.addf %301, %322 : vector<8x128xf32>
    %cst_83 = arith.constant 5.000000e-01 : f32
    %324 = vector.broadcast %cst_83 : f32 to vector<8x128xf32>
    %325 = arith.mulf %324, %323 : vector<8x128xf32>
    %326 = math.tanh %325 : vector<8x128xf32>
    %cst_84 = arith.constant 5.000000e-01 : f32
    %327 = vector.broadcast %cst_84 : f32 to vector<8x128xf32>
    %328 = arith.mulf %327, %326 : vector<8x128xf32>
    %cst_85 = arith.constant 5.000000e-01 : f32
    %329 = vector.broadcast %cst_85 : f32 to vector<8x128xf32>
    %330 = arith.addf %328, %329 : vector<8x128xf32>
    %331 = math.tanh %323 : vector<8x128xf32>
    %332 = vector.extract_strided_slice %330 {offsets = [0, 0], sizes = [8, 32], strides = [1, 1]} : vector<8x128xf32> to vector<8x32xf32>
    %333 = vector.extract_strided_slice %330 {offsets = [0, 32], sizes = [8, 32], strides = [1, 1]} : vector<8x128xf32> to vector<8x32xf32>
    %334 = vector.extract_strided_slice %331 {offsets = [0, 64], sizes = [8, 32], strides = [1, 1]} : vector<8x128xf32> to vector<8x32xf32>
    %335 = vector.extract_strided_slice %330 {offsets = [0, 96], sizes = [8, 32], strides = [1, 1]} : vector<8x128xf32> to vector<8x32xf32>
    %336 = arith.mulf %333, %297 : vector<8x32xf32>
    %337 = arith.mulf %332, %334 : vector<8x32xf32>
    %338 = arith.addf %336, %337 : vector<8x32xf32>
    %339 = math.tanh %338 : vector<8x32xf32>
    %340 = arith.mulf %335, %339 : vector<8x32xf32>
    %c0_86 = arith.constant 0 : index
    %c0_87 = arith.constant 0 : index
    %341 = vector.load %arg7[%c0_86, %c0_87] : memref<32x32xf32, #tpu.memory_space<vmem>>, vector<32x32xf32>
    %cst_88 = arith.constant dense<0.000000e+00> : vector<8x32xf32>
    %342 = tpu.matmul %340, %341, %cst_88 {dimension_numbers = #tpu.dot_dimension_numbers<[1], [0], [0], [1], [0, 0, 1, 1], [], []>} : vector<8x32xf32>, vector<32x32xf32>, vector<8x32xf32> -> vector<8x32xf32>
    %c0_89 = arith.constant 0 : index
    %c0_90 = arith.constant 0 : index
    %343 = vector.load %arg8[%c0_89, %c0_90] : memref<1x32xf32, #tpu.memory_space<vmem>>, vector<1x32xf32>
    %344 = vector.broadcast %343 : vector<1x32xf32> to vector<8x32xf32>
    %345 = arith.addf %342, %344 : vector<8x32xf32>
    %cst_91 = arith.constant 0.000000e+00 : f32
    %346 = vector.broadcast %cst_91 : f32 to vector<8x32xf32>
    %347 = arith.maximumf %345, %346 : vector<8x32xf32>
    %c0_92 = arith.constant 0 : index
    %c0_93 = arith.constant 0 : index
    %348 = vector.load %arg9[%c0_92, %c0_93] : memref<32x6xf32, #tpu.memory_space<vmem>>, vector<32x6xf32>
    %cst_94 = arith.constant dense<0.000000e+00> : vector<8x6xf32>
    %349 = tpu.matmul %347, %348, %cst_94 {dimension_numbers = #tpu.dot_dimension_numbers<[1], [0], [0], [1], [0, 0, 1, 1], [], []>} : vector<8x32xf32>, vector<32x6xf32>, vector<8x6xf32> -> vector<8x6xf32>
    %c0_95 = arith.constant 0 : index
    %c0_96 = arith.constant 0 : index
    %350 = vector.load %arg10[%c0_95, %c0_96] : memref<1x6xf32, #tpu.memory_space<vmem>>, vector<1x6xf32>
    %351 = vector.broadcast %350 : vector<1x6xf32> to vector<8x6xf32>
    %352 = arith.addf %349, %351 : vector<8x6xf32>
    %353 = vector.extract_strided_slice %352 {offsets = [0, 0], sizes = [2, 6], strides = [1, 1]} : vector<8x6xf32> to vector<2x6xf32>
    %c0_97 = arith.constant 0 : index
    %c0_98 = arith.constant 0 : index
    %354 = vector.load %arg11[%c0_97, %c0_98] : memref<2x6xf32, #tpu.memory_space<vmem>>, vector<2x6xf32>
    tpu.vector_store %arg11[%c0_97, %c0_98], %353 {strides = array<i32>} : memref<2x6xf32, #tpu.memory_space<vmem>>, vector<2x6xf32>,
    return
  }
}

</mosaic_0001>

<llo_original>
// kernel: robot_arm_forward.1
$region0: #{robot_arm_forward.1}
  #allocation0 [shape = 'u32[]', space=smem, size = 0x4, offset = 0x4, fixed_abs, tag = 'smem constant byte address 0x4 - core index']
  #allocation1 [shape = 'u32[144,128]{1,0:T(1,128)}', space=vmem, size = 0x12000, scoped, tag = 'internal scratch']
  %s0 = inlined_call_operand.vmem [shape: f32[64,12], index: 0, kind: input, shape index: {}]
  %s1 = inlined_call_operand.hbm [shape: f32[12,128], index: 1, kind: input, shape index: {}]
  %s2 = inlined_call_operand.hbm [shape: f32[32,128], index: 2, kind: input, shape index: {}]
  %s3 = inlined_call_operand.hbm [shape: f32[1,128], index: 3, kind: input, shape index: {}]
  %s4 = inlined_call_operand.vmem [shape: f32[32,128], index: 4, kind: input, shape index: {}]
  %s5 = inlined_call_operand.vmem [shape: f32[32,128], index: 5, kind: input, shape index: {}]
  %s6 = inlined_call_operand.vmem [shape: f32[1,128], index: 6, kind: input, shape index: {}]
  %s7 = inlined_call_operand.vmem [shape: f32[32,32], index: 7, kind: input, shape index: {}]
  %s8 = inlined_call_operand.vmem [shape: f32[1,32], index: 8, kind: input, shape index: {}]
  %s9 = inlined_call_operand.vmem [shape: f32[32,6], index: 9, kind: input, shape index: {}]
  %s10 = inlined_call_operand.vmem [shape: f32[1,6], index: 10, kind: input, shape index: {}]
  %s11 = inlined_call_operand.hbm [shape: f32[2,6], index: 11, kind: output, shape index: {}]
  %s12 = sld [smem:[#allocation0]]
  $region66: #{robot_arm_forward.1} parent=0
    _
  %s14 = ssub.s32 1, %s12
  %s15 = scalar_select 0, %s14, %s12
  $region1: #{robot_arm_forward.1} parent=0
    #allocation2 [shape = 'u8[8192]{0}', space=vmem, size = 0x2000, scoped, tag = 'input window, operand 1, single buffered']
    #allocation3 [shape = 's32[1]{0}', space=sflag, size = 0x4, scoped, tag = 'scoped memory for robot_arm_forward.1']
    #allocation4 [shape = 's32[1]{0}', space=sflag, size = 0x4, scoped, tag = 'scoped memory for robot_arm_forward.1']
    #allocation5 [shape = 'u8[16384]{0}', space=vmem, size = 0x4000, scoped, tag = 'input window, operand 2, single buffered']
    #allocation6 [shape = 's32[1]{0}', space=sflag, size = 0x4, scoped, tag = 'scoped memory for robot_arm_forward.1']
    #allocation7 [shape = 'u8[512]{0}', space=vmem, size = 0x400, scoped, tag = 'input window, operand 3, single buffered']
    #allocation8 [shape = 'u8[1024]{0}', space=vmem, size = 0x400, scoped, tag = 'output window, operand 0, single buffered']
    %16 = vsyncpa [#allocation3], 0
    %17 = vsyncpa [#allocation6], 0
    %18 = vsyncpa [#allocation4], 0
    // Predicated region
    $region2: #{robot_arm_forward.1} parent=1 // pred_check
      _
    $region3: #{robot_arm_forward.1} parent=1 // pred_check_branch
      %20 = sbr.rel (0) target = $region5
    $region4: #{robot_arm_forward.1} parent=1 // pred_region
      _
    $region5: #{robot_arm_forward.1} parent=1 // pred_fallthru
      _
    // Predicated region
    $region6: #{robot_arm_forward.1} parent=1 // pred_check
      _
    $region7: #{robot_arm_forward.1} parent=1 // pred_check_branch
      %22 = sbr.rel (0) target = $region9
    $region8: #{robot_arm_forward.1} parent=1 // pred_region
      %s24 = ssub.s32 256, 256
      %25 = vsyncadd [#allocation3], %s24
      %s26 = sshll.u32 [#allocation2], 4
      %s27 = int_to_ptr.vmem [resolvable:$true] %s26
      %32 = dma.hbm_to_vmem [thread:$0]  %s1, 256, %s27, [#allocation3], 128, 128, 8
    $region9: #{robot_arm_forward.1} parent=1 // pred_fallthru
      _
    // Predicated region
    $region10: #{robot_arm_forward.1} parent=1 // pred_check
      _
    $region11: #{robot_arm_forward.1} parent=1 // pred_check_branch
      %34 = sbr.rel (0) target = $region13
    $region12: #{robot_arm_forward.1} parent=1 // pred_region
      %s36 = ssub.s32 512, 512
      %37 = vsyncadd [#allocation6], %s36
      %s38 = sshll.u32 [#allocation5], 4
      %s39 = int_to_ptr.vmem [resolvable:$true] %s38
      %44 = dma.hbm_to_vmem [thread:$0]  %s2, 512, %s39, [#allocation6], 128, 128, 8
    $region13: #{robot_arm_forward.1} parent=1 // pred_fallthru
      _
    // Predicated region
    $region14: #{robot_arm_forward.1} parent=1 // pred_check
      _
    $region15: #{robot_arm_forward.1} parent=1 // pred_check_branch
      %46 = sbr.rel (0) target = $region17
    $region16: #{robot_arm_forward.1} parent=1 // pred_region
      %s48 = ssub.s32 16, 16
      %49 = vsyncadd [#allocation6], %s48
      %s51 = sshll.u32 [#allocation7], 4
      %s52 = int_to_ptr.vmem [resolvable:$true] %s51
      %54 = dma.hbm_to_vmem [thread:$0]  %s3, 16, %s52, [#allocation6]
    $region17: #{robot_arm_forward.1} parent=1 // pred_fallthru
      _
    // Predicated region
    $region18: #{robot_arm_forward.1} parent=1 // pred_check
      _
    $region19: #{robot_arm_forward.1} parent=1 // pred_check_branch
      %56 = sbr.rel (0) target = $region21
    $region20: #{robot_arm_forward.1} parent=1 // pred_region
      _
    $region21: #{robot_arm_forward.1} parent=1 // pred_fallthru
      _
    // Predicated region
    $region22: #{robot_arm_forward.1} parent=1 // pred_check
      _
    $region23: #{robot_arm_forward.1} parent=1 // pred_check_branch
      %58 = sbr.rel (0) target = $region25
    $region24: #{robot_arm_forward.1} parent=1 // pred_region
      _
    $region25: #{robot_arm_forward.1} parent=1 // pred_fallthru
      _
    // Predicated region
    $region26: #{robot_arm_forward.1} parent=1 // pred_check
      _
    $region27: #{robot_arm_forward.1} parent=1 // pred_check_branch
      %60 = sbr.rel (0) target = $region29
    $region28: #{robot_arm_forward.1} parent=1 // pred_region
      _
    $region29: #{robot_arm_forward.1} parent=1 // pred_fallthru
      _
    // Predicated region
    $region30: #{robot_arm_forward.1} parent=1 // pred_check
      _
    $region31: #{robot_arm_forward.1} parent=1 // pred_check_branch
      %62 = sbr.rel (0) target = $region33
    $region32: #{robot_arm_forward.1} parent=1 // pred_region
      _
    $region33: #{robot_arm_forward.1} parent=1 // pred_fallthru
      _
    // Predicated region
    $region34: #{robot_arm_forward.1} parent=1 // pred_check
      _
    $region35: #{robot_arm_forward.1} parent=1 // pred_check_branch
      %64 = sbr.rel (0) target = $region37
    $region36: #{robot_arm_forward.1} parent=1 // pred_region
      _
    $region37: #{robot_arm_forward.1} parent=1 // pred_fallthru
      _
    // Predicated region
    $region38: #{robot_arm_forward.1} parent=1 // pred_check
      _
    $region39: #{robot_arm_forward.1} parent=1 // pred_check_branch
      %66 = sbr.rel (0) target = $region41
    $region40: #{robot_arm_forward.1} parent=1 // pred_region
      _
    $region41: #{robot_arm_forward.1} parent=1 // pred_fallthru
      _
    // Predicated region
    $region42: #{robot_arm_forward.1} parent=1 // pred_check
      _
    $region43: #{robot_arm_forward.1} parent=1 // pred_check_branch
      %68 = sbr.rel (0) target = $region45
    $region44: #{robot_arm_forward.1} parent=1 // pred_region
      _
    $region45: #{robot_arm_forward.1} parent=1 // pred_fallthru
      _
    // Predicated region
    $region46: #{robot_arm_forward.1} parent=1 // pred_check
      _
    $region47: #{robot_arm_forward.1} parent=1 // pred_check_branch
      %70 = sbr.rel (0) target = $region49
    $region48: #{robot_arm_forward.1} parent=1 // pred_region
      %71 = dma.done [#allocation3], 256
    $region49: #{robot_arm_forward.1} parent=1 // pred_fallthru
      _
    // Predicated region
    $region50: #{robot_arm_forward.1} parent=1 // pred_check
      _
    $region51: #{robot_arm_forward.1} parent=1 // pred_check_branch
      %73 = sbr.rel (0) target = $region53
    $region52: #{robot_arm_forward.1} parent=1 // pred_region
      %74 = dma.done [#allocation6], 512
    $region53: #{robot_arm_forward.1} parent=1 // pred_fallthru
      _
    // Predicated region
    $region54: #{robot_arm_forward.1} parent=1 // pred_check
      _
    $region55: #{robot_arm_forward.1} parent=1 // pred_check_branch
      %76 = sbr.rel (0) target = $region57
    $region56: #{robot_arm_forward.1} parent=1 // pred_region
      %77 = dma.done [#allocation6], 16
    $region57: #{robot_arm_forward.1} parent=1 // pred_fallthru
      _
    %v78 = vld [vmem:[#allocation5] sm:$0xff]
    %v79 = vld [vmem:[#allocation5 + $0x8] sm:$0xff]
    %v80 = vld [vmem:[#allocation5 + $0x10] sm:$0xff]
    %v81 = vld [vmem:[#allocation5 + $0x18] sm:$0xff]
    %v82 = vld [vmem:[%s4] sm:$0xff]
    %v83 = vld [vmem:[%s4 + $0x8] sm:$0xff]
    %v84 = vld [vmem:[%s4 + $0x10] sm:$0xff]
    %v85 = vld [vmem:[%s4 + $0x18] sm:$0xff]
    %v86 = vld [vmem:[%s5] sm:$0xff]
    %v87 = vld [vmem:[%s5 + $0x8] sm:$0xff]
    %v88 = vld [vmem:[%s5 + $0x10] sm:$0xff]
    %v89 = vld [vmem:[%s5 + $0x18] sm:$0xff]
    %v90 = vld [vmem:[%s6] sm:$0x1]
    %v92 = vlaneseq
    %v93 = vshrl.u32 %v92, 7
    %v94 = vsub.s32 0, %v93
    %v95 = vrot.slane %v90, %v94
    %v97 = vld [vmem:[%s0] sm:$0xff]
    %v98 = vld [vmem:[%s0 + $0x8] sm:$0xff]
    %v99 = vld [vmem:[%s0 + $0x10] sm:$0xff]
    %v100 = vld [vmem:[%s0 + $0x18] sm:$0xff]
    %v101 = vld [vmem:[%s0 + $0x20] sm:$0xff]
    %v102 = vld [vmem:[%s0 + $0x28] sm:$0xff]
    %v103 = vld [vmem:[%s0 + $0x30] sm:$0xff]
    %v104 = vld [vmem:[%s0 + $0x38] sm:$0xff]
    %v105 = vld [vmem:[#allocation2] sm:$0xff]
    %v106 = vld [vmem:[#allocation2 + $0x8] sm:$0xf]
    %v107 = vld [vmem:[#allocation7] sm:$0x1]
    %v109 = vlaneseq
    %v110 = vshrl.u32 %v109, 7
    %v111 = vsub.s32 0, %v110
    %v112 = vrot.slane %v107, %v111
    %vm114 = vcmask 97280
    %v116 = vsel %vm114, %v97, 0
    %v119 = vsel %vm114, %v98, 0
    %v122 = vsel %vm114, %v99, 0
    %v125 = vsel %vm114, %v100, 0
    %v128 = vsel %vm114, %v101, 0
    %v131 = vsel %vm114, %v102, 0
    %v134 = vsel %vm114, %v103, 0
    %v137 = vsel %vm114, %v104, 0
    %vm139 = vcmask 1043456
    %v141 = vsel %vm139, %v106, 0
    %143 = vmatprep.subr.mxu0 0.0
    %144 = vmatpush1.msra.mxu0 %v105
    %145 = vmatprep.subr.mxu0 0.0
    %146 = vmatpush1.msra.mxu0 %v141
    %147 = vmatprep.subr.mxu0 0.0
    %148 = vmatpush1.msra.mxu0 0.0
    %149 = vmatprep.subr.mxu0 0.0
    %150 = vmatpush1.msra.mxu0 0.0
    %151 = vmatprep.subr.mxu0 0.0
    %152 = vmatpush1.msra.mxu0 0.0
    %153 = vmatprep.subr.mxu0 0.0
    %154 = vmatpush1.msra.mxu0 0.0
    %155 = vmatprep.subr.mxu0 0.0
    %156 = vmatpush1.msra.mxu0 0.0
    %157 = vmatprep.subr.mxu0 0.0
    %158 = vmatpush1.msra.mxu0 0.0
    %159 = vmatprep.subr.mxu0 0.0
    %160 = vmatpush1.msra.mxu0 0.0
    %161 = vmatprep.subr.mxu0 0.0
    %162 = vmatpush1.msra.mxu0 0.0
    %163 = vmatprep.subr.mxu0 0.0
    %164 = vmatpush1.msra.mxu0 0.0
    %165 = vmatprep.subr.mxu0 0.0
    %166 = vmatpush1.msra.mxu0 0.0
    %167 = vmatprep.subr.mxu0 0.0
    %168 = vmatpush1.msra.mxu0 0.0
    %169 = vmatprep.subr.mxu0 0.0
    %170 = vmatpush1.msra.mxu0 0.0
    %171 = vmatprep.subr.mxu0 0.0
    %172 = vmatpush1.msra.mxu0 0.0
    %173 = vmatprep.subr.mxu0 0.0
    %174 = vmatpush1.msra.mxu0 0.0
    %175 = vmatprep.subr.mxu0 0.0
    %176 = vmatpush1.msra.mxu0 0.0
    %177 = vmatprep.subr.mxu0 0.0
    %178 = vmatpush1.msra.mxu0 0.0
    %179 = vmatprep.subr.mxu0 0.0
    %180 = vmatpush1.msra.mxu0 0.0
    %181 = vmatprep.subr.mxu0 0.0
    %182 = vmatpush1.msra.mxu0 0.0
    %183 = vmatprep.subr.mxu0 0.0
    %184 = vmatpush1.msra.mxu0 0.0
    %185 = vmatprep.subr.mxu0 0.0
    %186 = vmatpush1.msra.mxu0 0.0
    %187 = vmatprep.subr.mxu0 0.0
    %188 = vmatpush1.msra.mxu0 0.0
    %189 = vmatprep.subr.mxu0 0.0
    %190 = vmatpush1.msra.mxu0 0.0
    %191 = vmatprep.subr.mxu0 0.0
    %192 = vmatpush1.msra.mxu0 0.0
    %193 = vmatprep.subr.mxu0 0.0
    %194 = vmatpush1.msra.mxu0 0.0
    %195 = vmatprep.subr.mxu0 0.0
    %196 = vmatpush1.msra.mxu0 0.0
    %197 = vmatprep.subr.mxu0 0.0
    %198 = vmatpush1.msra.mxu0 0.0
    %199 = vmatprep.subr.mxu0 0.0
    %200 = vmatpush1.msra.mxu0 0.0
    %201 = vmatprep.subr.mxu0 0.0
    %202 = vmatpush1.msra.mxu0 0.0
    %203 = vmatprep.subr.mxu0 0.0
    %204 = vmatpush1.msra.mxu0 0.0
    %205 = vmatprep.subr.mxu0 0.0
    %206 = vmatpush1.msra.mxu0 0.0
    %207 = vmatprep.mubr.f32.mxu0 0.0
    %208 = vmatmul.mubr.f32.gmra.mrb[0].mxu0 %v116
    %v209 = vpop.f32.mrb[0].mxu0
    %v210 = vadd.f32 %v112, %v209
    %v211 = vpop.f32.mrb[0].mxu0
    %212 = vmatprep.mubr.f32.mxu0 0.0
    %213 = vmatmul.mubr.f32.gmra.mrb[0].mxu0 %v119
    %v214 = vpop.f32.mrb[0].mxu0
    %v215 = vadd.f32 %v112, %v214
    %v216 = vpop.f32.mrb[0].mxu0
    %217 = vmatprep.mubr.f32.mxu0 0.0
    %218 = vmatmul.mubr.f32.gmra.mrb[0].mxu0 %v122
    %v219 = vpop.f32.mrb[0].mxu0
    %v220 = vadd.f32 %v112, %v219
    %v221 = vpop.f32.mrb[0].mxu0
    %222 = vmatprep.mubr.f32.mxu0 0.0
    %223 = vmatmul.mubr.f32.gmra.mrb[0].mxu0 %v125
    %v224 = vpop.f32.mrb[0].mxu0
    %v225 = vadd.f32 %v112, %v224
    %v226 = vpop.f32.mrb[0].mxu0
    %227 = vmatprep.mubr.f32.mxu0 0.0
    %228 = vmatmul.mubr.f32.gmra.mrb[0].mxu0 %v128
    %v229 = vpop.f32.mrb[0].mxu0
    %v230 = vadd.f32 %v112, %v229
    %v231 = vpop.f32.mrb[0].mxu0
    %232 = vmatprep.mubr.f32.mxu0 0.0
    %233 = vmatmul.mubr.f32.gmra.mrb[0].mxu0 %v131
    %v234 = vpop.f32.mrb[0].mxu0
    %v235 = vadd.f32 %v112, %v234
    %v236 = vpop.f32.mrb[0].mxu0
    %237 = vmatprep.mubr.f32.mxu0 0.0
    %238 = vmatmul.mubr.f32.gmra.mrb[0].mxu0 %v134
    %v239 = vpop.f32.mrb[0].mxu0
    %v240 = vadd.f32 %v112, %v239
    %v241 = vpop.f32.mrb[0].mxu0
    %242 = vmatprep.mubr.f32.mxu0 0.0
    %243 = vmatmul.mubr.f32.gmra.mrb[0].mxu0 %v137
    %v244 = vpop.f32.mrb[0].mxu0
    %v245 = vadd.f32 %v112, %v244
    %v246 = vpop.f32.mrb[0].mxu0
    %247 = vdwg.mxu0
    %vm248 = vcmask 261120
    %v250 = vsel %vm248, 0.0, 0
    %252 = vmatprep.subr.mxu0 0.0
    %253 = vmatpush1.msra.mxu0 %v86
    %254 = vmatprep.subr.mxu0 0.0
    %255 = vmatpush1.msra.mxu0 %v87
    %256 = vmatprep.subr.mxu0 0.0
    %257 = vmatpush1.msra.mxu0 %v88
    %258 = vmatprep.subr.mxu0 0.0
    %259 = vmatpush1.msra.mxu0 %v89
    %260 = vmatprep.subr.mxu0 0.0
    %261 = vmatpush1.msra.mxu0 0.0
    %262 = vmatprep.subr.mxu0 0.0
    %263 = vmatpush1.msra.mxu0 0.0
    %264 = vmatprep.subr.mxu0 0.0
    %265 = vmatpush1.msra.mxu0 0.0
    %266 = vmatprep.subr.mxu0 0.0
    %267 = vmatpush1.msra.mxu0 0.0
    %268 = vmatprep.subr.mxu0 0.0
    %269 = vmatpush1.msra.mxu0 0.0
    %270 = vmatprep.subr.mxu0 0.0
    %271 = vmatpush1.msra.mxu0 0.0
    %272 = vmatprep.subr.mxu0 0.0
    %273 = vmatpush1.msra.mxu0 0.0
    %274 = vmatprep.subr.mxu0 0.0
    %275 = vmatpush1.msra.mxu0 0.0
    %276 = vmatprep.subr.mxu0 0.0
    %277 = vmatpush1.msra.mxu0 0.0
    %278 = vmatprep.subr.mxu0 0.0
    %279 = vmatpush1.msra.mxu0 0.0
    %280 = vmatprep.subr.mxu0 0.0
    %281 = vmatpush1.msra.mxu0 0.0
    %282 = vmatprep.subr.mxu0 0.0
    %283 = vmatpush1.msra.mxu0 0.0
    %284 = vmatprep.subr.mxu0 0.0
    %285 = vmatpush1.msra.mxu0 0.0
    %286 = vmatprep.subr.mxu0 0.0
    %287 = vmatpush1.msra.mxu0 0.0
    %288 = vmatprep.subr.mxu0 0.0
    %289 = vmatpush1.msra.mxu0 0.0
    %290 = vmatprep.subr.mxu0 0.0
    %291 = vmatpush1.msra.mxu0 0.0
    %292 = vmatprep.subr.mxu0 0.0
    %293 = vmatpush1.msra.mxu0 0.0
    %294 = vmatprep.subr.mxu0 0.0
    %295 = vmatpush1.msra.mxu0 0.0
    %296 = vmatprep.subr.mxu0 0.0
    %297 = vmatpush1.msra.mxu0 0.0
    %298 = vmatprep.subr.mxu0 0.0
    %299 = vmatpush1.msra.mxu0 0.0
    %300 = vmatprep.subr.mxu0 0.0
    %301 = vmatpush1.msra.mxu0 0.0
    %302 = vmatprep.subr.mxu0 0.0
    %303 = vmatpush1.msra.mxu0 0.0
    %304 = vmatprep.subr.mxu0 0.0
    %305 = vmatpush1.msra.mxu0 0.0
    %306 = vmatprep.subr.mxu0 0.0
    %307 = vmatpush1.msra.mxu0 0.0
    %308 = vmatprep.subr.mxu0 0.0
    %309 = vmatpush1.msra.mxu0 0.0
    %310 = vmatprep.subr.mxu0 0.0
    %311 = vmatpush1.msra.mxu0 0.0
    %312 = vmatprep.subr.mxu0 0.0
    %313 = vmatpush1.msra.mxu0 0.0
    %314 = vmatprep.subr.mxu0 0.0
    %315 = vmatpush1.msra.mxu0 0.0
    %316 = vmatprep.mubr.f32.mxu0 0.0
    %317 = vmatmul.mubr.f32.gmra.mrb[0].mxu0 %v250
    %v318 = vpop.f32.mrb[0].mxu0
    %v319 = vadd.f32 %v95, %v318
    %v320 = vpop.f32.mrb[0].mxu0
    %321 = vdwg.mxu0
    %322 = vmatprep.subr.mxu0 0.0
    %323 = vmatpush1.msra.mxu0 %v78
    %324 = vmatprep.subr.mxu0 0.0
    %325 = vmatpush1.msra.mxu0 %v79
    %326 = vmatprep.subr.mxu0 0.0
    %327 = vmatpush1.msra.mxu0 %v80
    %328 = vmatprep.subr.mxu0 0.0
    %329 = vmatpush1.msra.mxu0 %v81
    %330 = vmatprep.subr.mxu0 0.0
    %331 = vmatpush1.msra.mxu0 0.0
    %332 = vmatprep.subr.mxu0 0.0
    %333 = vmatpush1.msra.mxu0 0.0
    %334 = vmatprep.subr.mxu0 0.0
    %335 = vmatpush1.msra.mxu0 0.0
    %336 = vmatprep.subr.mxu0 0.0
    %337 = vmatpush1.msra.mxu0 0.0
    %338 = vmatprep.subr.mxu0 0.0
    %339 = vmatpush1.msra.mxu0 0.0
    %340 = vmatprep.subr.mxu0 0.0
    %341 = vmatpush1.msra.mxu0 0.0
    %342 = vmatprep.subr.mxu0 0.0
    %343 = vmatpush1.msra.mxu0 0.0
    %344 = vmatprep.subr.mxu0 0.0
    %345 = vmatpush1.msra.mxu0 0.0
    %346 = vmatprep.subr.mxu0 0.0
    %347 = vmatpush1.msra.mxu0 0.0
    %348 = vmatprep.subr.mxu0 0.0
    %349 = vmatpush1.msra.mxu0 0.0
    %350 = vmatprep.subr.mxu0 0.0
    %351 = vmatpush1.msra.mxu0 0.0
    %352 = vmatprep.subr.mxu0 0.0
    %353 = vmatpush1.msra.mxu0 0.0
    %354 = vmatprep.subr.mxu0 0.0
    %355 = vmatpush1.msra.mxu0 0.0
    %356 = vmatprep.subr.mxu0 0.0
    %357 = vmatpush1.msra.mxu0 0.0
    %358 = vmatprep.subr.mxu0 0.0
    %359 = vmatpush1.msra.mxu0 0.0
    %360 = vmatprep.subr.mxu0 0.0
    %361 = vmatpush1.msra.mxu0 0.0
    %362 = vmatprep.subr.mxu0 0.0
    %363 = vmatpush1.msra.mxu0 0.0
    %364 = vmatprep.subr.mxu0 0.0
    %365 = vmatpush1.msra.mxu0 0.0
    %366 = vmatprep.subr.mxu0 0.0
    %367 = vmatpush1.msra.mxu0 0.0
    %368 = vmatprep.subr.mxu0 0.0
    %369 = vmatpush1.msra.mxu0 0.0
    %370 = vmatprep.subr.mxu0 0.0
    %371 = vmatpush1.msra.mxu0 0.0
    %372 = vmatprep.subr.mxu0 0.0
    %373 = vmatpush1.msra.mxu0 0.0
    %374 = vmatprep.subr.mxu0 0.0
    %375 = vmatpush1.msra.mxu0 0.0
    %376 = vmatprep.subr.mxu0 0.0
    %377 = vmatpush1.msra.mxu0 0.0
    %378 = vmatprep.subr.mxu0 0.0
    %379 = vmatpush1.msra.mxu0 0.0
    %380 = vmatprep.subr.mxu0 0.0
    %381 = vmatpush1.msra.mxu0 0.0
    %382 = vmatprep.subr.mxu0 0.0
    %383 = vmatpush1.msra.mxu0 0.0
    %384 = vmatprep.subr.mxu0 0.0
    %385 = vmatpush1.msra.mxu0 0.0
    %386 = vmatprep.mubr.f32.mxu0 0.0
    %387 = vmatmul.mubr.f32.gmra.mrb[0].mxu0 %v250
    %v388 = vpop.f32.mrb[0].mxu0
    %v389 = vadd.f32 0.0, %v388
    %v390 = vpop.f32.mrb[0].mxu0
    %391 = vdwg.mxu0
    %v392 = vadd.f32 %v210, %v389
    %v393 = vmul.f32 %v392, 0.5
    %v394 = vtanh.pop %v393
    %v395 = vmul.f32 %v394, 0.5
    %v396 = vadd.f32 %v395, 0.5
    %v397 = vtanh.pop %v392
    %v398 = vmul.f32 %v396, 0.0
    %400 = vrot.lane.b32.xlu0 %v397, 64
    %v401 = vpop.permute.xlu0 %400
    %v403 = vmul.f32 %v396, %v401
    %405 = vrot.lane.b32.xlu0 %v403, 32
    %v406 = vpop.permute.xlu0 %405
    %v408 = vadd.f32 %v398, %v406
    %v409 = vtanh.pop %v408
    %411 = vrot.lane.b32.xlu0 %v409, 64
    %v412 = vpop.permute.xlu0 %411
    %v414 = vmul.f32 %v396, %v412
    %416 = vrot.lane.b32.xlu0 %v414, 32
    %v417 = vpop.permute.xlu0 %416
    %v418 = vsel %vm248, %v417, 0
    %420 = vmatprep.subr.mxu0 0.0
    %421 = vmatpush1.msra.mxu0 %v82
    %422 = vmatprep.subr.mxu0 0.0
    %423 = vmatpush1.msra.mxu0 %v83
    %424 = vmatprep.subr.mxu0 0.0
    %425 = vmatpush1.msra.mxu0 %v84
    %426 = vmatprep.subr.mxu0 0.0
    %427 = vmatpush1.msra.mxu0 %v85
    %428 = vmatprep.subr.mxu0 0.0
    %429 = vmatpush1.msra.mxu0 0.0
    %430 = vmatprep.subr.mxu0 0.0
    %431 = vmatpush1.msra.mxu0 0.0
    %432 = vmatprep.subr.mxu0 0.0
    %433 = vmatpush1.msra.mxu0 0.0
    %434 = vmatprep.subr.mxu0 0.0
    %435 = vmatpush1.msra.mxu0 0.0
    %436 = vmatprep.subr.mxu0 0.0
    %437 = vmatpush1.msra.mxu0 0.0
    %438 = vmatprep.subr.mxu0 0.0
    %439 = vmatpush1.msra.mxu0 0.0
    %440 = vmatprep.subr.mxu0 0.0
    %441 = vmatpush1.msra.mxu0 0.0
    %442 = vmatprep.subr.mxu0 0.0
    %443 = vmatpush1.msra.mxu0 0.0
    %444 = vmatprep.subr.mxu0 0.0
    %445 = vmatpush1.msra.mxu0 0.0
    %446 = vmatprep.subr.mxu0 0.0
    %447 = vmatpush1.msra.mxu0 0.0
    %448 = vmatprep.subr.mxu0 0.0
    %449 = vmatpush1.msra.mxu0 0.0
    %450 = vmatprep.subr.mxu0 0.0
    %451 = vmatpush1.msra.mxu0 0.0
    %452 = vmatprep.subr.mxu0 0.0
    %453 = vmatpush1.msra.mxu0 0.0
    %454 = vmatprep.subr.mxu0 0.0
    %455 = vmatpush1.msra.mxu0 0.0
    %456 = vmatprep.subr.mxu0 0.0
    %457 = vmatpush1.msra.mxu0 0.0
    %458 = vmatprep.subr.mxu0 0.0
    %459 = vmatpush1.msra.mxu0 0.0
    %460 = vmatprep.subr.mxu0 0.0
    %461 = vmatpush1.msra.mxu0 0.0
    %462 = vmatprep.subr.mxu0 0.0
    %463 = vmatpush1.msra.mxu0 0.0
    %464 = vmatprep.subr.mxu0 0.0
    %465 = vmatpush1.msra.mxu0 0.0
    %466 = vmatprep.subr.mxu0 0.0
    %467 = vmatpush1.msra.mxu0 0.0
    %468 = vmatprep.subr.mxu0 0.0
    %469 = vmatpush1.msra.mxu0 0.0
    %470 = vmatprep.subr.mxu0 0.0
    %471 = vmatpush1.msra.mxu0 0.0
    %472 = vmatprep.subr.mxu0 0.0
    %473 = vmatpush1.msra.mxu0 0.0
    %474 = vmatprep.subr.mxu0 0.0
    %475 = vmatpush1.msra.mxu0 0.0
    %476 = vmatprep.subr.mxu0 0.0
    %477 = vmatpush1.msra.mxu0 0.0
    %478 = vmatprep.subr.mxu0 0.0
    %479 = vmatpush1.msra.mxu0 0.0
    %480 = vmatprep.subr.mxu0 0.0
    %481 = vmatpush1.msra.mxu0 0.0
    %482 = vmatprep.subr.mxu0 0.0
    %483 = vmatpush1.msra.mxu0 0.0
    %484 = vmatprep.mubr.f32.mxu0 0.0
    %485 = vmatmul.mubr.f32.gmra.mrb[0].mxu0 %v418
    %v486 = vpop.f32.mrb[0].mxu0
    %v487 = vadd.f32 0.0, %v486
    %v488 = vpop.f32.mrb[0].mxu0
    %489 = vdwg.mxu0
    %v490 = vadd.f32 %v319, %v487
    %v491 = vmul.f32 %v490, 0.5
    %v492 = vtanh.pop %v491
    %v493 = vmul.f32 %v492, 0.5
    %v494 = vadd.f32 %v493, 0.5
    %v495 = vtanh.pop %v490
    %v496 = vmul.f32 %v494, 0.0
    %498 = vrot.lane.b32.xlu0 %v495, 64
    %v499 = vpop.permute.xlu0 %498
    %v501 = vmul.f32 %v494, %v499
    %503 = vrot.lane.b32.xlu0 %v501, 32
    %v504 = vpop.permute.xlu0 %503
    %v506 = vadd.f32 %v496, %v504
    %v507 = vtanh.pop %v506
    %509 = vrot.lane.b32.xlu0 %v507, 64
    %v510 = vpop.permute.xlu0 %509
    %v512 = vmul.f32 %v494, %v510
    %514 = vrot.lane.b32.xlu0 %v512, 32
    %v515 = vpop.permute.xlu0 %514
    %v516 = vsel %vm248, %v515, 0
    %518 = vmatprep.subr.mxu0 0.0
    %519 = vmatpush1.msra.mxu0 %v86
    %520 = vmatprep.subr.mxu0 0.0
    %521 = vmatpush1.msra.mxu0 %v87
    %522 = vmatprep.subr.mxu0 0.0
    %523 = vmatpush1.msra.mxu0 %v88
    %524 = vmatprep.subr.mxu0 0.0
    %525 = vmatpush1.msra.mxu0 %v89
    %526 = vmatprep.subr.mxu0 0.0
    %527 = vmatpush1.msra.mxu0 0.0
    %528 = vmatprep.subr.mxu0 0.0
    %529 = vmatpush1.msra.mxu0 0.0
    %530 = vmatprep.subr.mxu0 0.0
    %531 = vmatpush1.msra.mxu0 0.0
    %532 = vmatprep.subr.mxu0 0.0
    %533 = vmatpush1.msra.mxu0 0.0
    %534 = vmatprep.subr.mxu0 0.0
    %535 = vmatpush1.msra.mxu0 0.0
    %536 = vmatprep.subr.mxu0 0.0
    %537 = vmatpush1.msra.mxu0 0.0
    %538 = vmatprep.subr.mxu0 0.0
    %539 = vmatpush1.msra.mxu0 0.0
    %540 = vmatprep.subr.mxu0 0.0
    %541 = vmatpush1.msra.mxu0 0.0
    %542 = vmatprep.subr.mxu0 0.0
    %543 = vmatpush1.msra.mxu0 0.0
    %544 = vmatprep.subr.mxu0 0.0
    %545 = vmatpush1.msra.mxu0 0.0
    %546 = vmatprep.subr.mxu0 0.0
    %547 = vmatpush1.msra.mxu0 0.0
    %548 = vmatprep.subr.mxu0 0.0
    %549 = vmatpush1.msra.mxu0 0.0
    %550 = vmatprep.subr.mxu0 0.0
    %551 = vmatpush1.msra.mxu0 0.0
    %552 = vmatprep.subr.mxu0 0.0
    %553 = vmatpush1.msra.mxu0 0.0
    %554 = vmatprep.subr.mxu0 0.0
    %555 = vmatpush1.msra.mxu0 0.0
    %556 = vmatprep.subr.mxu0 0.0
    %557 = vmatpush1.msra.mxu0 0.0
    %558 = vmatprep.subr.mxu0 0.0
    %559 = vmatpush1.msra.mxu0 0.0
    %560 = vmatprep.subr.mxu0 0.0
    %561 = vmatpush1.msra.mxu0 0.0
    %562 = vmatprep.subr.mxu0 0.0
    %563 = vmatpush1.msra.mxu0 0.0
    %564 = vmatprep.subr.mxu0 0.0
    %565 = vmatpush1.msra.mxu0 0.0
    %566 = vmatprep.subr.mxu0 0.0
    %567 = vmatpush1.msra.mxu0 0.0
    %568 = vmatprep.subr.mxu0 0.0
    %569 = vmatpush1.msra.mxu0 0.0
    %570 = vmatprep.subr.mxu0 0.0
    %571 = vmatpush1.msra.mxu0 0.0
    %572 = vmatprep.subr.mxu0 0.0
    %573 = vmatpush1.msra.mxu0 0.0
    %574 = vmatprep.subr.mxu0 0.0
    %575 = vmatpush1.msra.mxu0 0.0
    %576 = vmatprep.subr.mxu0 0.0
    %577 = vmatpush1.msra.mxu0 0.0
    %578 = vmatprep.subr.mxu0 0.0
    %579 = vmatpush1.msra.mxu0 0.0
    %580 = vmatprep.subr.mxu0 0.0
    %581 = vmatpush1.msra.mxu0 0.0
    %582 = vmatprep.mubr.f32.mxu0 0.0
    %583 = vmatmul.mubr.f32.gmra.mrb[0].mxu0 %v516
    %v584 = vpop.f32.mrb[0].mxu0
    %v585 = vadd.f32 %v95, %v584
    %v586 = vpop.f32.mrb[0].mxu0
    %587 = vdwg.mxu0
    %588 = vmatprep.subr.mxu0 0.0
    %589 = vmatpush1.msra.mxu0 %v78
    %590 = vmatprep.subr.mxu0 0.0
    %591 = vmatpush1.msra.mxu0 %v79
    %592 = vmatprep.subr.mxu0 0.0
    %593 = vmatpush1.msra.mxu0 %v80
    %594 = vmatprep.subr.mxu0 0.0
    %595 = vmatpush1.msra.mxu0 %v81
    %596 = vmatprep.subr.mxu0 0.0
    %597 = vmatpush1.msra.mxu0 0.0
    %598 = vmatprep.subr.mxu0 0.0
    %599 = vmatpush1.msra.mxu0 0.0
    %600 = vmatprep.subr.mxu0 0.0
    %601 = vmatpush1.msra.mxu0 0.0
    %602 = vmatprep.subr.mxu0 0.0
    %603 = vmatpush1.msra.mxu0 0.0
    %604 = vmatprep.subr.mxu0 0.0
    %605 = vmatpush1.msra.mxu0 0.0
    %606 = vmatprep.subr.mxu0 0.0
    %607 = vmatpush1.msra.mxu0 0.0
    %608 = vmatprep.subr.mxu0 0.0
    %609 = vmatpush1.msra.mxu0 0.0
    %610 = vmatprep.subr.mxu0 0.0
    %611 = vmatpush1.msra.mxu0 0.0
    %612 = vmatprep.subr.mxu0 0.0
    %613 = vmatpush1.msra.mxu0 0.0
    %614 = vmatprep.subr.mxu0 0.0
    %615 = vmatpush1.msra.mxu0 0.0
    %616 = vmatprep.subr.mxu0 0.0
    %617 = vmatpush1.msra.mxu0 0.0
    %618 = vmatprep.subr.mxu0 0.0
    %619 = vmatpush1.msra.mxu0 0.0
    %620 = vmatprep.subr.mxu0 0.0
    %621 = vmatpush1.msra.mxu0 0.0
    %622 = vmatprep.subr.mxu0 0.0
    %623 = vmatpush1.msra.mxu0 0.0
    %624 = vmatprep.subr.mxu0 0.0
    %625 = vmatpush1.msra.mxu0 0.0
    %626 = vmatprep.subr.mxu0 0.0
    %627 = vmatpush1.msra.mxu0 0.0
    %628 = vmatprep.subr.mxu0 0.0
    %629 = vmatpush1.msra.mxu0 0.0
    %630 = vmatprep.subr.mxu0 0.0
    %631 = vmatpush1.msra.mxu0 0.0
    %632 = vmatprep.subr.mxu0 0.0
    %633 = vmatpush1.msra.mxu0 0.0
    %634 = vmatprep.subr.mxu0 0.0
    %635 = vmatpush1.msra.mxu0 0.0
    %636 = vmatprep.subr.mxu0 0.0
    %637 = vmatpush1.msra.mxu0 0.0
    %638 = vmatprep.subr.mxu0 0.0
    %639 = vmatpush1.msra.mxu0 0.0
    %640 = vmatprep.subr.mxu0 0.0
    %641 = vmatpush1.msra.mxu0 0.0
    %642 = vmatprep.subr.mxu0 0.0
    %643 = vmatpush1.msra.mxu0 0.0
    %644 = vmatprep.subr.mxu0 0.0
    %645 = vmatpush1.msra.mxu0 0.0
    %646 = vmatprep.subr.mxu0 0.0
    %647 = vmatpush1.msra.mxu0 0.0
    %648 = vmatprep.subr.mxu0 0.0
    %649 = vmatpush1.msra.mxu0 0.0
    %650 = vmatprep.subr.mxu0 0.0
    %651 = vmatpush1.msra.mxu0 0.0
    %652 = vmatprep.mubr.f32.mxu0 0.0
    %653 = vmatmul.mubr.f32.gmra.mrb[0].mxu0 %v418
    %v654 = vpop.f32.mrb[0].mxu0
    %v655 = vadd.f32 0.0, %v654
    %v656 = vpop.f32.mrb[0].mxu0
    %657 = vdwg.mxu0
    %v658 = vadd.f32 %v215, %v655
    %v659 = vmul.f32 %v658, 0.5
    %v660 = vtanh.pop %v659
    %v661 = vmul.f32 %v660, 0.5
    %v662 = vadd.f32 %v661, 0.5
    %v663 = vtanh.pop %v658
    %v664 = vmul.f32 %v662, %v408
    %666 = vrot.lane.b32.xlu0 %v663, 64
    %v667 = vpop.permute.xlu0 %666
    %v669 = vmul.f32 %v662, %v667
    %671 = vrot.lane.b32.xlu0 %v669, 32
    %v672 = vpop.permute.xlu0 %671
    %v674 = vadd.f32 %v664, %v672
    %v675 = vtanh.pop %v674
    %677 = vrot.lane.b32.xlu0 %v675, 64
    %v678 = vpop.permute.xlu0 %677
    %v680 = vmul.f32 %v662, %v678
    %682 = vrot.lane.b32.xlu0 %v680, 32
    %v683 = vpop.permute.xlu0 %682
    %v684 = vsel %vm248, %v683, 0
    %686 = vmatprep.subr.mxu0 0.0
    %687 = vmatpush1.msra.mxu0 %v82
    %688 = vmatprep.subr.mxu0 0.0
    %689 = vmatpush1.msra.mxu0 %v83
    %690 = vmatprep.subr.mxu0 0.0
    %691 = vmatpush1.msra.mxu0 %v84
    %692 = vmatprep.subr.mxu0 0.0
    %693 = vmatpush1.msra.mxu0 %v85
    %694 = vmatprep.subr.mxu0 0.0
    %695 = vmatpush1.msra.mxu0 0.0
    %696 = vmatprep.subr.mxu0 0.0
    %697 = vmatpush1.msra.mxu0 0.0
    %698 = vmatprep.subr.mxu0 0.0
    %699 = vmatpush1.msra.mxu0 0.0
    %700 = vmatprep.subr.mxu0 0.0
    %701 = vmatpush1.msra.mxu0 0.0
    %702 = vmatprep.subr.mxu0 0.0
    %703 = vmatpush1.msra.mxu0 0.0
    %704 = vmatprep.subr.mxu0 0.0
    %705 = vmatpush1.msra.mxu0 0.0
    %706 = vmatprep.subr.mxu0 0.0
    %707 = vmatpush1.msra.mxu0 0.0
    %708 = vmatprep.subr.mxu0 0.0
    %709 = vmatpush1.msra.mxu0 0.0
    %710 = vmatprep.subr.mxu0 0.0
    %711 = vmatpush1.msra.mxu0 0.0
    %712 = vmatprep.subr.mxu0 0.0
    %713 = vmatpush1.msra.mxu0 0.0
    %714 = vmatprep.subr.mxu0 0.0
    %715 = vmatpush1.msra.mxu0 0.0
    %716 = vmatprep.subr.mxu0 0.0
    %717 = vmatpush1.msra.mxu0 0.0
    %718 = vmatprep.subr.mxu0 0.0
    %719 = vmatpush1.msra.mxu0 0.0
    %720 = vmatprep.subr.mxu0 0.0
    %721 = vmatpush1.msra.mxu0 0.0
    %722 = vmatprep.subr.mxu0 0.0
    %723 = vmatpush1.msra.mxu0 0.0
    %724 = vmatprep.subr.mxu0 0.0
    %725 = vmatpush1.msra.mxu0 0.0
    %726 = vmatprep.subr.mxu0 0.0
    %727 = vmatpush1.msra.mxu0 0.0
    %728 = vmatprep.subr.mxu0 0.0
    %729 = vmatpush1.msra.mxu0 0.0
    %730 = vmatprep.subr.mxu0 0.0
    %731 = vmatpush1.msra.mxu0 0.0
    %732 = vmatprep.subr.mxu0 0.0
    %733 = vmatpush1.msra.mxu0 0.0
    %734 = vmatprep.subr.mxu0 0.0
    %735 = vmatpush1.msra.mxu0 0.0
    %736 = vmatprep.subr.mxu0 0.0
    %737 = vmatpush1.msra.mxu0 0.0
    %738 = vmatprep.subr.mxu0 0.0
    %739 = vmatpush1.msra.mxu0 0.0
    %740 = vmatprep.subr.mxu0 0.0
    %741 = vmatpush1.msra.mxu0 0.0
    %742 = vmatprep.subr.mxu0 0.0
    %743 = vmatpush1.msra.mxu0 0.0
    %744 = vmatprep.subr.mxu0 0.0
    %745 = vmatpush1.msra.mxu0 0.0
    %746 = vmatprep.subr.mxu0 0.0
    %747 = vmatpush1.msra.mxu0 0.0
    %748 = vmatprep.subr.mxu0 0.0
    %749 = vmatpush1.msra.mxu0 0.0
    %750 = vmatprep.mubr.f32.mxu0 0.0
    %751 = vmatmul.mubr.f32.gmra.mrb[0].mxu0 %v684
    %v752 = vpop.f32.mrb[0].mxu0
    %v753 = vadd.f32 0.0, %v752
    %v754 = vpop.f32.mrb[0].mxu0
    %755 = vdwg.mxu0
    %v756 = vadd.f32 %v585, %v753
    %v757 = vmul.f32 %v756, 0.5
    %v758 = vtanh.pop %v757
    %v759 = vmul.f32 %v758, 0.5
    %v760 = vadd.f32 %v759, 0.5
    %v761 = vtanh.pop %v756
    %v762 = vmul.f32 %v760, %v506
    %764 = vrot.lane.b32.xlu0 %v761, 64
    %v765 = vpop.permute.xlu0 %764
    %v767 = vmul.f32 %v760, %v765
    %769 = vrot.lane.b32.xlu0 %v767, 32
    %v770 = vpop.permute.xlu0 %769
    %v772 = vadd.f32 %v762, %v770
    %v773 = vtanh.pop %v772
    %775 = vrot.lane.b32.xlu0 %v773, 64
    %v776 = vpop.permute.xlu0 %775
    %v778 = vmul.f32 %v760, %v776
    %780 = vrot.lane.b32.xlu0 %v778, 32
    %v781 = vpop.permute.xlu0 %780
    %v782 = vsel %vm248, %v781, 0
    %784 = vmatprep.subr.mxu0 0.0
    %785 = vmatpush1.msra.mxu0 %v86
    %786 = vmatprep.subr.mxu0 0.0
    %787 = vmatpush1.msra.mxu0 %v87
    %788 = vmatprep.subr.mxu0 0.0
    %789 = vmatpush1.msra.mxu0 %v88
    %790 = vmatprep.subr.mxu0 0.0
    %791 = vmatpush1.msra.mxu0 %v89
    %792 = vmatprep.subr.mxu0 0.0
    %793 = vmatpush1.msra.mxu0 0.0
    %794 = vmatprep.subr.mxu0 0.0
    %795 = vmatpush1.msra.mxu0 0.0
    %796 = vmatprep.subr.mxu0 0.0
    %797 = vmatpush1.msra.mxu0 0.0
    %798 = vmatprep.subr.mxu0 0.0
    %799 = vmatpush1.msra.mxu0 0.0
    %800 = vmatprep.subr.mxu0 0.0
    %801 = vmatpush1.msra.mxu0 0.0
    %802 = vmatprep.subr.mxu0 0.0
    %803 = vmatpush1.msra.mxu0 0.0
    %804 = vmatprep.subr.mxu0 0.0
    %805 = vmatpush1.msra.mxu0 0.0
    %806 = vmatprep.subr.mxu0 0.0
    %807 = vmatpush1.msra.mxu0 0.0
    %808 = vmatprep.subr.mxu0 0.0
    %809 = vmatpush1.msra.mxu0 0.0
    %810 = vmatprep.subr.mxu0 0.0
    %811 = vmatpush1.msra.mxu0 0.0
    %812 = vmatprep.subr.mxu0 0.0
    %813 = vmatpush1.msra.mxu0 0.0
    %814 = vmatprep.subr.mxu0 0.0
    %815 = vmatpush1.msra.mxu0 0.0
    %816 = vmatprep.subr.mxu0 0.0
    %817 = vmatpush1.msra.mxu0 0.0
    %818 = vmatprep.subr.mxu0 0.0
    %819 = vmatpush1.msra.mxu0 0.0
    %820 = vmatprep.subr.mxu0 0.0
    %821 = vmatpush1.msra.mxu0 0.0
    %822 = vmatprep.subr.mxu0 0.0
    %823 = vmatpush1.msra.mxu0 0.0
    %824 = vmatprep.subr.mxu0 0.0
    %825 = vmatpush1.msra.mxu0 0.0
    %826 = vmatprep.subr.mxu0 0.0
    %827 = vmatpush1.msra.mxu0 0.0
    %828 = vmatprep.subr.mxu0 0.0
    %829 = vmatpush1.msra.mxu0 0.0
    %830 = vmatprep.subr.mxu0 0.0
    %831 = vmatpush1.msra.mxu0 0.0
    %832 = vmatprep.subr.mxu0 0.0
    %833 = vmatpush1.msra.mxu0 0.0
    %834 = vmatprep.subr.mxu0 0.0
    %835 = vmatpush1.msra.mxu0 0.0
    %836 = vmatprep.subr.mxu0 0.0
    %837 = vmatpush1.msra.mxu0 0.0
    %838 = vmatprep.subr.mxu0 0.0
    %839 = vmatpush1.msra.mxu0 0.0
    %840 = vmatprep.subr.mxu0 0.0
    %841 = vmatpush1.msra.mxu0 0.0
    %842 = vmatprep.subr.mxu0 0.0
    %843 = vmatpush1.msra.mxu0 0.0
    %844 = vmatprep.subr.mxu0 0.0
    %845 = vmatpush1.msra.mxu0 0.0
    %846 = vmatprep.subr.mxu0 0.0
    %847 = vmatpush1.msra.mxu0 0.0
    %848 = vmatprep.mubr.f32.mxu0 0.0
    %849 = vmatmul.mubr.f32.gmra.mrb[0].mxu0 %v782
    %v850 = vpop.f32.mrb[0].mxu0
    %v851 = vadd.f32 %v95, %v850
    %v852 = vpop.f32.mrb[0].mxu0
    %853 = vdwg.mxu0
    %854 = vmatprep.subr.mxu0 0.0
    %855 = vmatpush1.msra.mxu0 %v78
    %856 = vmatprep.subr.mxu0 0.0
    %857 = vmatpush1.msra.mxu0 %v79
    %858 = vmatprep.subr.mxu0 0.0
    %859 = vmatpush1.msra.mxu0 %v80
    %860 = vmatprep.subr.mxu0 0.0
    %861 = vmatpush1.msra.mxu0 %v81
    %862 = vmatprep.subr.mxu0 0.0
    %863 = vmatpush1.msra.mxu0 0.0
    %864 = vmatprep.subr.mxu0 0.0
    %865 = vmatpush1.msra.mxu0 0.0
    %866 = vmatprep.subr.mxu0 0.0
    %867 = vmatpush1.msra.mxu0 0.0
    %868 = vmatprep.subr.mxu0 0.0
    %869 = vmatpush1.msra.mxu0 0.0
    %870 = vmatprep.subr.mxu0 0.0
    %871 = vmatpush1.msra.mxu0 0.0
    %872 = vmatprep.subr.mxu0 0.0
    %873 = vmatpush1.msra.mxu0 0.0
    %874 = vmatprep.subr.mxu0 0.0
    %875 = vmatpush1.msra.mxu0 0.0
    %876 = vmatprep.subr.mxu0 0.0
    %877 = vmatpush1.msra.mxu0 0.0
    %878 = vmatprep.subr.mxu0 0.0
    %879 = vmatpush1.msra.mxu0 0.0
    %880 = vmatprep.subr.mxu0 0.0
    %881 = vmatpush1.msra.mxu0 0.0
    %882 = vmatprep.subr.mxu0 0.0
    %883 = vmatpush1.msra.mxu0 0.0
    %884 = vmatprep.subr.mxu0 0.0
    %885 = vmatpush1.msra.mxu0 0.0
    %886 = vmatprep.subr.mxu0 0.0
    %887 = vmatpush1.msra.mxu0 0.0
    %888 = vmatprep.subr.mxu0 0.0
    %889 = vmatpush1.msra.mxu0 0.0
    %890 = vmatprep.subr.mxu0 0.0
    %891 = vmatpush1.msra.mxu0 0.0
    %892 = vmatprep.subr.mxu0 0.0
    %893 = vmatpush1.msra.mxu0 0.0
    %894 = vmatprep.subr.mxu0 0.0
    %895 = vmatpush1.msra.mxu0 0.0
    %896 = vmatprep.subr.mxu0 0.0
    %897 = vmatpush1.msra.mxu0 0.0
    %898 = vmatprep.subr.mxu0 0.0
    %899 = vmatpush1.msra.mxu0 0.0
    %900 = vmatprep.subr.mxu0 0.0
    %901 = vmatpush1.msra.mxu0 0.0
    %902 = vmatprep.subr.mxu0 0.0
    %903 = vmatpush1.msra.mxu0 0.0
    %904 = vmatprep.subr.mxu0 0.0
    %905 = vmatpush1.msra.mxu0 0.0
    %906 = vmatprep.subr.mxu0 0.0
    %907 = vmatpush1.msra.mxu0 0.0
    %908 = vmatprep.subr.mxu0 0.0
    %909 = vmatpush1.msra.mxu0 0.0
    %910 = vmatprep.subr.mxu0 0.0
    %911 = vmatpush1.msra.mxu0 0.0
    %912 = vmatprep.subr.mxu0 0.0
    %913 = vmatpush1.msra.mxu0 0.0
    %914 = vmatprep.subr.mxu0 0.0
    %915 = vmatpush1.msra.mxu0 0.0
    %916 = vmatprep.subr.mxu0 0.0
    %917 = vmatpush1.msra.mxu0 0.0
    %918 = vmatprep.mubr.f32.mxu0 0.0
    %919 = vmatmul.mubr.f32.gmra.mrb[0].mxu0 %v684
    %v920 = vpop.f32.mrb[0].mxu0
    %v921 = vadd.f32 0.0, %v920
    %v922 = vpop.f32.mrb[0].mxu0
    %923 = vdwg.mxu0
    %v924 = vadd.f32 %v220, %v921
    %v925 = vmul.f32 %v924, 0.5
    %v926 = vtanh.pop %v925
    %v927 = vmul.f32 %v926, 0.5
    %v928 = vadd.f32 %v927, 0.5
    %v929 = vtanh.pop %v924
    %v930 = vmul.f32 %v928, %v674
    %932 = vrot.lane.b32.xlu0 %v929, 64
    %v933 = vpop.permute.xlu0 %932
    %v935 = vmul.f32 %v928, %v933
    %937 = vrot.lane.b32.xlu0 %v935, 32
    %v938 = vpop.permute.xlu0 %937
    %v940 = vadd.f32 %v930, %v938
    %v941 = vtanh.pop %v940
    %943 = vrot.lane.b32.xlu0 %v941, 64
    %v944 = vpop.permute.xlu0 %943
    %v946 = vmul.f32 %v928, %v944
    %948 = vrot.lane.b32.xlu0 %v946, 32
    %v949 = vpop.permute.xlu0 %948
    %v950 = vsel %vm248, %v949, 0
    %952 = vmatprep.subr.mxu0 0.0
    %953 = vmatpush1.msra.mxu0 %v82
    %954 = vmatprep.subr.mxu0 0.0
    %955 = vmatpush1.msra.mxu0 %v83
    %956 = vmatprep.subr.mxu0 0.0
    %957 = vmatpush1.msra.mxu0 %v84
    %958 = vmatprep.subr.mxu0 0.0
    %959 = vmatpush1.msra.mxu0 %v85
    %960 = vmatprep.subr.mxu0 0.0
    %961 = vmatpush1.msra.mxu0 0.0
    %962 = vmatprep.subr.mxu0 0.0
    %963 = vmatpush1.msra.mxu0 0.0
    %964 = vmatprep.subr.mxu0 0.0
    %965 = vmatpush1.msra.mxu0 0.0
    %966 = vmatprep.subr.mxu0 0.0
    %967 = vmatpush1.msra.mxu0 0.0
    %968 = vmatprep.subr.mxu0 0.0
    %969 = vmatpush1.msra.mxu0 0.0
    %970 = vmatprep.subr.mxu0 0.0
    %971 = vmatpush1.msra.mxu0 0.0
    %972 = vmatprep.subr.mxu0 0.0
    %973 = vmatpush1.msra.mxu0 0.0
    %974 = vmatprep.subr.mxu0 0.0
    %975 = vmatpush1.msra.mxu0 0.0
    %976 = vmatprep.subr.mxu0 0.0
    %977 = vmatpush1.msra.mxu0 0.0
    %978 = vmatprep.subr.mxu0 0.0
    %979 = vmatpush1.msra.mxu0 0.0
    %980 = vmatprep.subr.mxu0 0.0
    %981 = vmatpush1.msra.mxu0 0.0
    %982 = vmatprep.subr.mxu0 0.0
    %983 = vmatpush1.msra.mxu0 0.0
    %984 = vmatprep.subr.mxu0 0.0
    %985 = vmatpush1.msra.mxu0 0.0
    %986 = vmatprep.subr.mxu0 0.0
    %987 = vmatpush1.msra.mxu0 0.0
    %988 = vmatprep.subr.mxu0 0.0
    %989 = vmatpush1.msra.mxu0 0.0
    %990 = vmatprep.subr.mxu0 0.0
    %991 = vmatpush1.msra.mxu0 0.0
    %992 = vmatprep.subr.mxu0 0.0
    %993 = vmatpush1.msra.mxu0 0.0
    %994 = vmatprep.subr.mxu0 0.0
    %995 = vmatpush1.msra.mxu0 0.0
    %996 = vmatprep.subr.mxu0 0.0
    %997 = vmatpush1.msra.mxu0 0.0
    %998 = vmatprep.subr.mxu0 0.0
    %999 = vmatpush1.msra.mxu0 0.0
    %1000 = vmatprep.subr.mxu0 0.0
    %1001 = vmatpush1.msra.mxu0 0.0
    %1002 = vmatprep.subr.mxu0 0.0
    %1003 = vmatpush1.msra.mxu0 0.0
    %1004 = vmatprep.subr.mxu0 0.0
    %1005 = vmatpush1.msra.mxu0 0.0
    %1006 = vmatprep.subr.mxu0 0.0
    %1007 = vmatpush1.msra.mxu0 0.0
    %1008 = vmatprep.subr.mxu0 0.0
    %1009 = vmatpush1.msra.mxu0 0.0
    %1010 = vmatprep.subr.mxu0 0.0
    %1011 = vmatpush1.msra.mxu0 0.0
    %1012 = vmatprep.subr.mxu0 0.0
    %1013 = vmatpush1.msra.mxu0 0.0
    %1014 = vmatprep.subr.mxu0 0.0
    %1015 = vmatpush1.msra.mxu0 0.0
    %1016 = vmatprep.mubr.f32.mxu0 0.0
    %1017 = vmatmul.mubr.f32.gmra.mrb[0].mxu0 %v950
    %v1018 = vpop.f32.mrb[0].mxu0
    %v1019 = vadd.f32 0.0, %v1018
    %v1020 = vpop.f32.mrb[0].mxu0
    %1021 = vdwg.mxu0
    %v1022 = vadd.f32 %v851, %v1019
    %v1023 = vmul.f32 %v1022, 0.5
    %v1024 = vtanh.pop %v1023
    %v1025 = vmul.f32 %v1024, 0.5
    %v1026 = vadd.f32 %v1025, 0.5
    %v1027 = vtanh.pop %v1022
    %v1028 = vmul.f32 %v1026, %v772
    %1030 = vrot.lane.b32.xlu0 %v1027, 64
    %v1031 = vpop.permute.xlu0 %1030
    %v1033 = vmul.f32 %v1026, %v1031
    %1035 = vrot.lane.b32.xlu0 %v1033, 32
    %v1036 = vpop.permute.xlu0 %1035
    %v1038 = vadd.f32 %v1028, %v1036
    %v1039 = vtanh.pop %v1038
    %1041 = vrot.lane.b32.xlu0 %v1039, 64
    %v1042 = vpop.permute.xlu0 %1041
    %v1044 = vmul.f32 %v1026, %v1042
    %1046 = vrot.lane.b32.xlu0 %v1044, 32
    %v1047 = vpop.permute.xlu0 %1046
    %v1048 = vsel %vm248, %v1047, 0
    %1050 = vmatprep.subr.mxu0 0.0
    %1051 = vmatpush1.msra.mxu0 %v86
    %1052 = vmatprep.subr.mxu0 0.0
    %1053 = vmatpush1.msra.mxu0 %v87
    %1054 = vmatprep.subr.mxu0 0.0
    %1055 = vmatpush1.msra.mxu0 %v88
    %1056 = vmatprep.subr.mxu0 0.0
    %1057 = vmatpush1.msra.mxu0 %v89
    %1058 = vmatprep.subr.mxu0 0.0
    %1059 = vmatpush1.msra.mxu0 0.0
    %1060 = vmatprep.subr.mxu0 0.0
    %1061 = vmatpush1.msra.mxu0 0.0
    %1062 = vmatprep.subr.mxu0 0.0
    %1063 = vmatpush1.msra.mxu0 0.0
    %1064 = vmatprep.subr.mxu0 0.0
    %1065 = vmatpush1.msra.mxu0 0.0
    %1066 = vmatprep.subr.mxu0 0.0
    %1067 = vmatpush1.msra.mxu0 0.0
    %1068 = vmatprep.subr.mxu0 0.0
    %1069 = vmatpush1.msra.mxu0 0.0
    %1070 = vmatprep.subr.mxu0 0.0
    %1071 = vmatpush1.msra.mxu0 0.0
    %1072 = vmatprep.subr.mxu0 0.0
    %1073 = vmatpush1.msra.mxu0 0.0
    %1074 = vmatprep.subr.mxu0 0.0
    %1075 = vmatpush1.msra.mxu0 0.0
    %1076 = vmatprep.subr.mxu0 0.0
    %1077 = vmatpush1.msra.mxu0 0.0
    %1078 = vmatprep.subr.mxu0 0.0
    %1079 = vmatpush1.msra.mxu0 0.0
    %1080 = vmatprep.subr.mxu0 0.0
    %1081 = vmatpush1.msra.mxu0 0.0
    %1082 = vmatprep.subr.mxu0 0.0
    %1083 = vmatpush1.msra.mxu0 0.0
    %1084 = vmatprep.subr.mxu0 0.0
    %1085 = vmatpush1.msra.mxu0 0.0
    %1086 = vmatprep.subr.mxu0 0.0
    %1087 = vmatpush1.msra.mxu0 0.0
    %1088 = vmatprep.subr.mxu0 0.0
    %1089 = vmatpush1.msra.mxu0 0.0
    %1090 = vmatprep.subr.mxu0 0.0
    %1091 = vmatpush1.msra.mxu0 0.0
    %1092 = vmatprep.subr.mxu0 0.0
    %1093 = vmatpush1.msra.mxu0 0.0
    %1094 = vmatprep.subr.mxu0 0.0
    %1095 = vmatpush1.msra.mxu0 0.0
    %1096 = vmatprep.subr.mxu0 0.0
    %1097 = vmatpush1.msra.mxu0 0.0
    %1098 = vmatprep.subr.mxu0 0.0
    %1099 = vmatpush1.msra.mxu0 0.0
    %1100 = vmatprep.subr.mxu0 0.0
    %1101 = vmatpush1.msra.mxu0 0.0
    %1102 = vmatprep.subr.mxu0 0.0
    %1103 = vmatpush1.msra.mxu0 0.0
    %1104 = vmatprep.subr.mxu0 0.0
    %1105 = vmatpush1.msra.mxu0 0.0
    %1106 = vmatprep.subr.mxu0 0.0
    %1107 = vmatpush1.msra.mxu0 0.0
    %1108 = vmatprep.subr.mxu0 0.0
    %1109 = vmatpush1.msra.mxu0 0.0
    %1110 = vmatprep.subr.mxu0 0.0
    %1111 = vmatpush1.msra.mxu0 0.0
    %1112 = vmatprep.subr.mxu0 0.0
    %1113 = vmatpush1.msra.mxu0 0.0
    %1114 = vmatprep.mubr.f32.mxu0 0.0
    %1115 = vmatmul.mubr.f32.gmra.mrb[0].mxu0 %v1048
    %v1116 = vpop.f32.mrb[0].mxu0
    %v1117 = vadd.f32 %v95, %v1116
    %v1118 = vpop.f32.mrb[0].mxu0
    %1119 = vdwg.mxu0
    %1120 = vmatprep.subr.mxu0 0.0
    %1121 = vmatpush1.msra.mxu0 %v78
    %1122 = vmatprep.subr.mxu0 0.0
    %1123 = vmatpush1.msra.mxu0 %v79
    %1124 = vmatprep.subr.mxu0 0.0
    %1125 = vmatpush1.msra.mxu0 %v80
    %1126 = vmatprep.subr.mxu0 0.0
    %1127 = vmatpush1.msra.mxu0 %v81
    %1128 = vmatprep.subr.mxu0 0.0
    %1129 = vmatpush1.msra.mxu0 0.0
    %1130 = vmatprep.subr.mxu0 0.0
    %1131 = vmatpush1.msra.mxu0 0.0
    %1132 = vmatprep.subr.mxu0 0.0
    %1133 = vmatpush1.msra.mxu0 0.0
    %1134 = vmatprep.subr.mxu0 0.0
    %1135 = vmatpush1.msra.mxu0 0.0
    %1136 = vmatprep.subr.mxu0 0.0
    %1137 = vmatpush1.msra.mxu0 0.0
    %1138 = vmatprep.subr.mxu0 0.0
    %1139 = vmatpush1.msra.mxu0 0.0
    %1140 = vmatprep.subr.mxu0 0.0
    %1141 = vmatpush1.msra.mxu0 0.0
    %1142 = vmatprep.subr.mxu0 0.0
    %1143 = vmatpush1.msra.mxu0 0.0
    %1144 = vmatprep.subr.mxu0 0.0
    %1145 = vmatpush1.msra.mxu0 0.0
    %1146 = vmatprep.subr.mxu0 0.0
    %1147 = vmatpush1.msra.mxu0 0.0
    %1148 = vmatprep.subr.mxu0 0.0
    %1149 = vmatpush1.msra.mxu0 0.0
    %1150 = vmatprep.subr.mxu0 0.0
    %1151 = vmatpush1.msra.mxu0 0.0
    %1152 = vmatprep.subr.mxu0 0.0
    %1153 = vmatpush1.msra.mxu0 0.0
    %1154 = vmatprep.subr.mxu0 0.0
    %1155 = vmatpush1.msra.mxu0 0.0
    %1156 = vmatprep.subr.mxu0 0.0
    %1157 = vmatpush1.msra.mxu0 0.0
    %1158 = vmatprep.subr.mxu0 0.0
    %1159 = vmatpush1.msra.mxu0 0.0
    %1160 = vmatprep.subr.mxu0 0.0
    %1161 = vmatpush1.msra.mxu0 0.0
    %1162 = vmatprep.subr.mxu0 0.0
    %1163 = vmatpush1.msra.mxu0 0.0
    %1164 = vmatprep.subr.mxu0 0.0
    %1165 = vmatpush1.msra.mxu0 0.0
    %1166 = vmatprep.subr.mxu0 0.0
    %1167 = vmatpush1.msra.mxu0 0.0
    %1168 = vmatprep.subr.mxu0 0.0
    %1169 = vmatpush1.msra.mxu0 0.0
    %1170 = vmatprep.subr.mxu0 0.0
    %1171 = vmatpush1.msra.mxu0 0.0
    %1172 = vmatprep.subr.mxu0 0.0
    %1173 = vmatpush1.msra.mxu0 0.0
    %1174 = vmatprep.subr.mxu0 0.0
    %1175 = vmatpush1.msra.mxu0 0.0
    %1176 = vmatprep.subr.mxu0 0.0
    %1177 = vmatpush1.msra.mxu0 0.0
    %1178 = vmatprep.subr.mxu0 0.0
    %1179 = vmatpush1.msra.mxu0 0.0
    %1180 = vmatprep.subr.mxu0 0.0
    %1181 = vmatpush1.msra.mxu0 0.0
    %1182 = vmatprep.subr.mxu0 0.0
    %1183 = vmatpush1.msra.mxu0 0.0
    %1184 = vmatprep.mubr.f32.mxu0 0.0
    %1185 = vmatmul.mubr.f32.gmra.mrb[0].mxu0 %v950
    %v1186 = vpop.f32.mrb[0].mxu0
    %v1187 = vadd.f32 0.0, %v1186
    %v1188 = vpop.f32.mrb[0].mxu0
    %1189 = vdwg.mxu0
    %v1190 = vadd.f32 %v225, %v1187
    %v1191 = vmul.f32 %v1190, 0.5
    %v1192 = vtanh.pop %v1191
    %v1193 = vmul.f32 %v1192, 0.5
    %v1194 = vadd.f32 %v1193, 0.5
    %v1195 = vtanh.pop %v1190
    %v1196 = vmul.f32 %v1194, %v940
    %1198 = vrot.lane.b32.xlu0 %v1195, 64
    %v1199 = vpop.permute.xlu0 %1198
    %v1201 = vmul.f32 %v1194, %v1199
    %1203 = vrot.lane.b32.xlu0 %v1201, 32
    %v1204 = vpop.permute.xlu0 %1203
    %v1206 = vadd.f32 %v1196, %v1204
    %v1207 = vtanh.pop %v1206
    %1209 = vrot.lane.b32.xlu0 %v1207, 64
    %v1210 = vpop.permute.xlu0 %1209
    %v1212 = vmul.f32 %v1194, %v1210
    %1214 = vrot.lane.b32.xlu0 %v1212, 32
    %v1215 = vpop.permute.xlu0 %1214
    %v1216 = vsel %vm248, %v1215, 0
    %1218 = vmatprep.subr.mxu0 0.0
    %1219 = vmatpush1.msra.mxu0 %v82
    %1220 = vmatprep.subr.mxu0 0.0
    %1221 = vmatpush1.msra.mxu0 %v83
    %1222 = vmatprep.subr.mxu0 0.0
    %1223 = vmatpush1.msra.mxu0 %v84
    %1224 = vmatprep.subr.mxu0 0.0
    %1225 = vmatpush1.msra.mxu0 %v85
    %1226 = vmatprep.subr.mxu0 0.0
    %1227 = vmatpush1.msra.mxu0 0.0
    %1228 = vmatprep.subr.mxu0 0.0
    %1229 = vmatpush1.msra.mxu0 0.0
    %1230 = vmatprep.subr.mxu0 0.0
    %1231 = vmatpush1.msra.mxu0 0.0
    %1232 = vmatprep.subr.mxu0 0.0
    %1233 = vmatpush1.msra.mxu0 0.0
    %1234 = vmatprep.subr.mxu0 0.0
    %1235 = vmatpush1.msra.mxu0 0.0
    %1236 = vmatprep.subr.mxu0 0.0
    %1237 = vmatpush1.msra.mxu0 0.0
    %1238 = vmatprep.subr.mxu0 0.0
    %1239 = vmatpush1.msra.mxu0 0.0
    %1240 = vmatprep.subr.mxu0 0.0
    %1241 = vmatpush1.msra.mxu0 0.0
    %1242 = vmatprep.subr.mxu0 0.0
    %1243 = vmatpush1.msra.mxu0 0.0
    %1244 = vmatprep.subr.mxu0 0.0
    %1245 = vmatpush1.msra.mxu0 0.0
    %1246 = vmatprep.subr.mxu0 0.0
    %1247 = vmatpush1.msra.mxu0 0.0
    %1248 = vmatprep.subr.mxu0 0.0
    %1249 = vmatpush1.msra.mxu0 0.0
    %1250 = vmatprep.subr.mxu0 0.0
    %1251 = vmatpush1.msra.mxu0 0.0
    %1252 = vmatprep.subr.mxu0 0.0
    %1253 = vmatpush1.msra.mxu0 0.0
    %1254 = vmatprep.subr.mxu0 0.0
    %1255 = vmatpush1.msra.mxu0 0.0
    %1256 = vmatprep.subr.mxu0 0.0
    %1257 = vmatpush1.msra.mxu0 0.0
    %1258 = vmatprep.subr.mxu0 0.0
    %1259 = vmatpush1.msra.mxu0 0.0
    %1260 = vmatprep.subr.mxu0 0.0
    %1261 = vmatpush1.msra.mxu0 0.0
    %1262 = vmatprep.subr.mxu0 0.0
    %1263 = vmatpush1.msra.mxu0 0.0
    %1264 = vmatprep.subr.mxu0 0.0
    %1265 = vmatpush1.msra.mxu0 0.0
    %1266 = vmatprep.subr.mxu0 0.0
    %1267 = vmatpush1.msra.mxu0 0.0
    %1268 = vmatprep.subr.mxu0 0.0
    %1269 = vmatpush1.msra.mxu0 0.0
    %1270 = vmatprep.subr.mxu0 0.0
    %1271 = vmatpush1.msra.mxu0 0.0
    %1272 = vmatprep.subr.mxu0 0.0
    %1273 = vmatpush1.msra.mxu0 0.0
    %1274 = vmatprep.subr.mxu0 0.0
    %1275 = vmatpush1.msra.mxu0 0.0
    %1276 = vmatprep.subr.mxu0 0.0
    %1277 = vmatpush1.msra.mxu0 0.0
    %1278 = vmatprep.subr.mxu0 0.0
    %1279 = vmatpush1.msra.mxu0 0.0
    %1280 = vmatprep.subr.mxu0 0.0
    %1281 = vmatpush1.msra.mxu0 0.0
    %1282 = vmatprep.mubr.f32.mxu0 0.0
    %1283 = vmatmul.mubr.f32.gmra.mrb[0].mxu0 %v1216
    %v1284 = vpop.f32.mrb[0].mxu0
    %v1285 = vadd.f32 0.0, %v1284
    %v1286 = vpop.f32.mrb[0].mxu0
    %1287 = vdwg.mxu0
    %v1288 = vadd.f32 %v1117, %v1285
    %v1289 = vmul.f32 %v1288, 0.5
    %v1290 = vtanh.pop %v1289
    %v1291 = vmul.f32 %v1290, 0.5
    %v1292 = vadd.f32 %v1291, 0.5
    %v1293 = vtanh.pop %v1288
    %v1294 = vmul.f32 %v1292, %v1038
    %1296 = vrot.lane.b32.xlu0 %v1293, 64
    %v1297 = vpop.permute.xlu0 %1296
    %v1299 = vmul.f32 %v1292, %v1297
    %1301 = vrot.lane.b32.xlu0 %v1299, 32
    %v1302 = vpop.permute.xlu0 %1301
    %v1304 = vadd.f32 %v1294, %v1302
    %v1305 = vtanh.pop %v1304
    %1307 = vrot.lane.b32.xlu0 %v1305, 64
    %v1308 = vpop.permute.xlu0 %1307
    %v1310 = vmul.f32 %v1292, %v1308
    %1312 = vrot.lane.b32.xlu0 %v1310, 32
    %v1313 = vpop.permute.xlu0 %1312
    %v1314 = vsel %vm248, %v1313, 0
    %1316 = vmatprep.subr.mxu0 0.0
    %1317 = vmatpush1.msra.mxu0 %v86
    %1318 = vmatprep.subr.mxu0 0.0
    %1319 = vmatpush1.msra.mxu0 %v87
    %1320 = vmatprep.subr.mxu0 0.0
    %1321 = vmatpush1.msra.mxu0 %v88
    %1322 = vmatprep.subr.mxu0 0.0
    %1323 = vmatpush1.msra.mxu0 %v89
    %1324 = vmatprep.subr.mxu0 0.0
    %1325 = vmatpush1.msra.mxu0 0.0
    %1326 = vmatprep.subr.mxu0 0.0
    %1327 = vmatpush1.msra.mxu0 0.0
    %1328 = vmatprep.subr.mxu0 0.0
    %1329 = vmatpush1.msra.mxu0 0.0
    %1330 = vmatprep.subr.mxu0 0.0
    %1331 = vmatpush1.msra.mxu0 0.0
    %1332 = vmatprep.subr.mxu0 0.0
    %1333 = vmatpush1.msra.mxu0 0.0
    %1334 = vmatprep.subr.mxu0 0.0
    %1335 = vmatpush1.msra.mxu0 0.0
    %1336 = vmatprep.subr.mxu0 0.0
    %1337 = vmatpush1.msra.mxu0 0.0
    %1338 = vmatprep.subr.mxu0 0.0
    %1339 = vmatpush1.msra.mxu0 0.0
    %1340 = vmatprep.subr.mxu0 0.0
    %1341 = vmatpush1.msra.mxu0 0.0
    %1342 = vmatprep.subr.mxu0 0.0
    %1343 = vmatpush1.msra.mxu0 0.0
    %1344 = vmatprep.subr.mxu0 0.0
    %1345 = vmatpush1.msra.mxu0 0.0
    %1346 = vmatprep.subr.mxu0 0.0
    %1347 = vmatpush1.msra.mxu0 0.0
    %1348 = vmatprep.subr.mxu0 0.0
    %1349 = vmatpush1.msra.mxu0 0.0
    %1350 = vmatprep.subr.mxu0 0.0
    %1351 = vmatpush1.msra.mxu0 0.0
    %1352 = vmatprep.subr.mxu0 0.0
    %1353 = vmatpush1.msra.mxu0 0.0
    %1354 = vmatprep.subr.mxu0 0.0
    %1355 = vmatpush1.msra.mxu0 0.0
    %1356 = vmatprep.subr.mxu0 0.0
    %1357 = vmatpush1.msra.mxu0 0.0
    %1358 = vmatprep.subr.mxu0 0.0
    %1359 = vmatpush1.msra.mxu0 0.0
    %1360 = vmatprep.subr.mxu0 0.0
    %1361 = vmatpush1.msra.mxu0 0.0
    %1362 = vmatprep.subr.mxu0 0.0
    %1363 = vmatpush1.msra.mxu0 0.0
    %1364 = vmatprep.subr.mxu0 0.0
    %1365 = vmatpush1.msra.mxu0 0.0
    %1366 = vmatprep.subr.mxu0 0.0
    %1367 = vmatpush1.msra.mxu0 0.0
    %1368 = vmatprep.subr.mxu0 0.0
    %1369 = vmatpush1.msra.mxu0 0.0
    %1370 = vmatprep.subr.mxu0 0.0
    %1371 = vmatpush1.msra.mxu0 0.0
    %1372 = vmatprep.subr.mxu0 0.0
    %1373 = vmatpush1.msra.mxu0 0.0
    %1374 = vmatprep.subr.mxu0 0.0
    %1375 = vmatpush1.msra.mxu0 0.0
    %1376 = vmatprep.subr.mxu0 0.0
    %1377 = vmatpush1.msra.mxu0 0.0
    %1378 = vmatprep.subr.mxu0 0.0
    %1379 = vmatpush1.msra.mxu0 0.0
    %1380 = vmatprep.mubr.f32.mxu0 0.0
    %1381 = vmatmul.mubr.f32.gmra.mrb[0].mxu0 %v1314
    %v1382 = vpop.f32.mrb[0].mxu0
    %v1383 = vadd.f32 %v95, %v1382
    %v1384 = vpop.f32.mrb[0].mxu0
    %1385 = vdwg.mxu0
    %1386 = vmatprep.subr.mxu0 0.0
    %1387 = vmatpush1.msra.mxu0 %v78
    %1388 = vmatprep.subr.mxu0 0.0
    %1389 = vmatpush1.msra.mxu0 %v79
    %1390 = vmatprep.subr.mxu0 0.0
    %1391 = vmatpush1.msra.mxu0 %v80
    %1392 = vmatprep.subr.mxu0 0.0
    %1393 = vmatpush1.msra.mxu0 %v81
    %1394 = vmatprep.subr.mxu0 0.0
    %1395 = vmatpush1.msra.mxu0 0.0
    %1396 = vmatprep.subr.mxu0 0.0
    %1397 = vmatpush1.msra.mxu0 0.0
    %1398 = vmatprep.subr.mxu0 0.0
    %1399 = vmatpush1.msra.mxu0 0.0
    %1400 = vmatprep.subr.mxu0 0.0
    %1401 = vmatpush1.msra.mxu0 0.0
    %1402 = vmatprep.subr.mxu0 0.0
    %1403 = vmatpush1.msra.mxu0 0.0
    %1404 = vmatprep.subr.mxu0 0.0
    %1405 = vmatpush1.msra.mxu0 0.0
    %1406 = vmatprep.subr.mxu0 0.0
    %1407 = vmatpush1.msra.mxu0 0.0
    %1408 = vmatprep.subr.mxu0 0.0
    %1409 = vmatpush1.msra.mxu0 0.0
    %1410 = vmatprep.subr.mxu0 0.0
    %1411 = vmatpush1.msra.mxu0 0.0
    %1412 = vmatprep.subr.mxu0 0.0
    %1413 = vmatpush1.msra.mxu0 0.0
    %1414 = vmatprep.subr.mxu0 0.0
    %1415 = vmatpush1.msra.mxu0 0.0
    %1416 = vmatprep.subr.mxu0 0.0
    %1417 = vmatpush1.msra.mxu0 0.0
    %1418 = vmatprep.subr.mxu0 0.0
    %1419 = vmatpush1.msra.mxu0 0.0
    %1420 = vmatprep.subr.mxu0 0.0
    %1421 = vmatpush1.msra.mxu0 0.0
    %1422 = vmatprep.subr.mxu0 0.0
    %1423 = vmatpush1.msra.mxu0 0.0
    %1424 = vmatprep.subr.mxu0 0.0
    %1425 = vmatpush1.msra.mxu0 0.0
    %1426 = vmatprep.subr.mxu0 0.0
    %1427 = vmatpush1.msra.mxu0 0.0
    %1428 = vmatprep.subr.mxu0 0.0
    %1429 = vmatpush1.msra.mxu0 0.0
    %1430 = vmatprep.subr.mxu0 0.0
    %1431 = vmatpush1.msra.mxu0 0.0
    %1432 = vmatprep.subr.mxu0 0.0
    %1433 = vmatpush1.msra.mxu0 0.0
    %1434 = vmatprep.subr.mxu0 0.0
    %1435 = vmatpush1.msra.mxu0 0.0
    %1436 = vmatprep.subr.mxu0 0.0
    %1437 = vmatpush1.msra.mxu0 0.0
    %1438 = vmatprep.subr.mxu0 0.0
    %1439 = vmatpush1.msra.mxu0 0.0
    %1440 = vmatprep.subr.mxu0 0.0
    %1441 = vmatpush1.msra.mxu0 0.0
    %1442 = vmatprep.subr.mxu0 0.0
    %1443 = vmatpush1.msra.mxu0 0.0
    %1444 = vmatprep.subr.mxu0 0.0
    %1445 = vmatpush1.msra.mxu0 0.0
    %1446 = vmatprep.subr.mxu0 0.0
    %1447 = vmatpush1.msra.mxu0 0.0
    %1448 = vmatprep.subr.mxu0 0.0
    %1449 = vmatpush1.msra.mxu0 0.0
    %1450 = vmatprep.mubr.f32.mxu0 0.0
    %1451 = vmatmul.mubr.f32.gmra.mrb[0].mxu0 %v1216
    %v1452 = vpop.f32.mrb[0].mxu0
    %v1453 = vadd.f32 0.0, %v1452
    %v1454 = vpop.f32.mrb[0].mxu0
    %1455 = vdwg.mxu0
    %v1456 = vadd.f32 %v230, %v1453
    %v1457 = vmul.f32 %v1456, 0.5
    %v1458 = vtanh.pop %v1457
    %v1459 = vmul.f32 %v1458, 0.5
    %v1460 = vadd.f32 %v1459, 0.5
    %v1461 = vtanh.pop %v1456
    %v1462 = vmul.f32 %v1460, %v1206
    %1464 = vrot.lane.b32.xlu0 %v1461, 64
    %v1465 = vpop.permute.xlu0 %1464
    %v1467 = vmul.f32 %v1460, %v1465
    %1469 = vrot.lane.b32.xlu0 %v1467, 32
    %v1470 = vpop.permute.xlu0 %1469
    %v1472 = vadd.f32 %v1462, %v1470
    %v1473 = vtanh.pop %v1472
    %1475 = vrot.lane.b32.xlu0 %v1473, 64
    %v1476 = vpop.permute.xlu0 %1475
    %v1478 = vmul.f32 %v1460, %v1476
    %1480 = vrot.lane.b32.xlu0 %v1478, 32
    %v1481 = vpop.permute.xlu0 %1480
    %v1482 = vsel %vm248, %v1481, 0
    %1484 = vmatprep.subr.mxu0 0.0
    %1485 = vmatpush1.msra.mxu0 %v82
    %1486 = vmatprep.subr.mxu0 0.0
    %1487 = vmatpush1.msra.mxu0 %v83
    %1488 = vmatprep.subr.mxu0 0.0
    %1489 = vmatpush1.msra.mxu0 %v84
    %1490 = vmatprep.subr.mxu0 0.0
    %1491 = vmatpush1.msra.mxu0 %v85
    %1492 = vmatprep.subr.mxu0 0.0
    %1493 = vmatpush1.msra.mxu0 0.0
    %1494 = vmatprep.subr.mxu0 0.0
    %1495 = vmatpush1.msra.mxu0 0.0
    %1496 = vmatprep.subr.mxu0 0.0
    %1497 = vmatpush1.msra.mxu0 0.0
    %1498 = vmatprep.subr.mxu0 0.0
    %1499 = vmatpush1.msra.mxu0 0.0
    %1500 = vmatprep.subr.mxu0 0.0
    %1501 = vmatpush1.msra.mxu0 0.0
    %1502 = vmatprep.subr.mxu0 0.0
    %1503 = vmatpush1.msra.mxu0 0.0
    %1504 = vmatprep.subr.mxu0 0.0
    %1505 = vmatpush1.msra.mxu0 0.0
    %1506 = vmatprep.subr.mxu0 0.0
    %1507 = vmatpush1.msra.mxu0 0.0
    %1508 = vmatprep.subr.mxu0 0.0
    %1509 = vmatpush1.msra.mxu0 0.0
    %1510 = vmatprep.subr.mxu0 0.0
    %1511 = vmatpush1.msra.mxu0 0.0
    %1512 = vmatprep.subr.mxu0 0.0
    %1513 = vmatpush1.msra.mxu0 0.0
    %1514 = vmatprep.subr.mxu0 0.0
    %1515 = vmatpush1.msra.mxu0 0.0
    %1516 = vmatprep.subr.mxu0 0.0
    %1517 = vmatpush1.msra.mxu0 0.0
    %1518 = vmatprep.subr.mxu0 0.0
    %1519 = vmatpush1.msra.mxu0 0.0
    %1520 = vmatprep.subr.mxu0 0.0
    %1521 = vmatpush1.msra.mxu0 0.0
    %1522 = vmatprep.subr.mxu0 0.0
    %1523 = vmatpush1.msra.mxu0 0.0
    %1524 = vmatprep.subr.mxu0 0.0
    %1525 = vmatpush1.msra.mxu0 0.0
    %1526 = vmatprep.subr.mxu0 0.0
    %1527 = vmatpush1.msra.mxu0 0.0
    %1528 = vmatprep.subr.mxu0 0.0
    %1529 = vmatpush1.msra.mxu0 0.0
    %1530 = vmatprep.subr.mxu0 0.0
    %1531 = vmatpush1.msra.mxu0 0.0
    %1532 = vmatprep.subr.mxu0 0.0
    %1533 = vmatpush1.msra.mxu0 0.0
    %1534 = vmatprep.subr.mxu0 0.0
    %1535 = vmatpush1.msra.mxu0 0.0
    %1536 = vmatprep.subr.mxu0 0.0
    %1537 = vmatpush1.msra.mxu0 0.0
    %1538 = vmatprep.subr.mxu0 0.0
    %1539 = vmatpush1.msra.mxu0 0.0
    %1540 = vmatprep.subr.mxu0 0.0
    %1541 = vmatpush1.msra.mxu0 0.0
    %1542 = vmatprep.subr.mxu0 0.0
    %1543 = vmatpush1.msra.mxu0 0.0
    %1544 = vmatprep.subr.mxu0 0.0
    %1545 = vmatpush1.msra.mxu0 0.0
    %1546 = vmatprep.subr.mxu0 0.0
    %1547 = vmatpush1.msra.mxu0 0.0
    %1548 = vmatprep.mubr.f32.mxu0 0.0
    %1549 = vmatmul.mubr.f32.gmra.mrb[0].mxu0 %v1482
    %v1550 = vpop.f32.mrb[0].mxu0
    %v1551 = vadd.f32 0.0, %v1550
    %v1552 = vpop.f32.mrb[0].mxu0
    %1553 = vdwg.mxu0
    %v1554 = vadd.f32 %v1383, %v1551
    %v1555 = vmul.f32 %v1554, 0.5
    %v1556 = vtanh.pop %v1555
    %v1557 = vmul.f32 %v1556, 0.5
    %v1558 = vadd.f32 %v1557, 0.5
    %v1559 = vtanh.pop %v1554
    %v1560 = vmul.f32 %v1558, %v1304
    %1562 = vrot.lane.b32.xlu0 %v1559, 64
    %v1563 = vpop.permute.xlu0 %1562
    %v1565 = vmul.f32 %v1558, %v1563
    %1567 = vrot.lane.b32.xlu0 %v1565, 32
    %v1568 = vpop.permute.xlu0 %1567
    %v1570 = vadd.f32 %v1560, %v1568
    %v1571 = vtanh.pop %v1570
    %1573 = vrot.lane.b32.xlu0 %v1571, 64
    %v1574 = vpop.permute.xlu0 %1573
    %v1576 = vmul.f32 %v1558, %v1574
    %1578 = vrot.lane.b32.xlu0 %v1576, 32
    %v1579 = vpop.permute.xlu0 %1578
    %v1580 = vsel %vm248, %v1579, 0
    %1582 = vmatprep.subr.mxu0 0.0
    %1583 = vmatpush1.msra.mxu0 %v86
    %1584 = vmatprep.subr.mxu0 0.0
    %1585 = vmatpush1.msra.mxu0 %v87
    %1586 = vmatprep.subr.mxu0 0.0
    %1587 = vmatpush1.msra.mxu0 %v88
    %1588 = vmatprep.subr.mxu0 0.0
    %1589 = vmatpush1.msra.mxu0 %v89
    %1590 = vmatprep.subr.mxu0 0.0
    %1591 = vmatpush1.msra.mxu0 0.0
    %1592 = vmatprep.subr.mxu0 0.0
    %1593 = vmatpush1.msra.mxu0 0.0
    %1594 = vmatprep.subr.mxu0 0.0
    %1595 = vmatpush1.msra.mxu0 0.0
    %1596 = vmatprep.subr.mxu0 0.0
    %1597 = vmatpush1.msra.mxu0 0.0
    %1598 = vmatprep.subr.mxu0 0.0
    %1599 = vmatpush1.msra.mxu0 0.0
    %1600 = vmatprep.subr.mxu0 0.0
    %1601 = vmatpush1.msra.mxu0 0.0
    %1602 = vmatprep.subr.mxu0 0.0
    %1603 = vmatpush1.msra.mxu0 0.0
    %1604 = vmatprep.subr.mxu0 0.0
    %1605 = vmatpush1.msra.mxu0 0.0
    %1606 = vmatprep.subr.mxu0 0.0
    %1607 = vmatpush1.msra.mxu0 0.0
    %1608 = vmatprep.subr.mxu0 0.0
    %1609 = vmatpush1.msra.mxu0 0.0
    %1610 = vmatprep.subr.mxu0 0.0
    %1611 = vmatpush1.msra.mxu0 0.0
    %1612 = vmatprep.subr.mxu0 0.0
    %1613 = vmatpush1.msra.mxu0 0.0
    %1614 = vmatprep.subr.mxu0 0.0
    %1615 = vmatpush1.msra.mxu0 0.0
    %1616 = vmatprep.subr.mxu0 0.0
    %1617 = vmatpush1.msra.mxu0 0.0
    %1618 = vmatprep.subr.mxu0 0.0
    %1619 = vmatpush1.msra.mxu0 0.0
    %1620 = vmatprep.subr.mxu0 0.0
    %1621 = vmatpush1.msra.mxu0 0.0
    %1622 = vmatprep.subr.mxu0 0.0
    %1623 = vmatpush1.msra.mxu0 0.0
    %1624 = vmatprep.subr.mxu0 0.0
    %1625 = vmatpush1.msra.mxu0 0.0
    %1626 = vmatprep.subr.mxu0 0.0
    %1627 = vmatpush1.msra.mxu0 0.0
    %1628 = vmatprep.subr.mxu0 0.0
    %1629 = vmatpush1.msra.mxu0 0.0
    %1630 = vmatprep.subr.mxu0 0.0
    %1631 = vmatpush1.msra.mxu0 0.0
    %1632 = vmatprep.subr.mxu0 0.0
    %1633 = vmatpush1.msra.mxu0 0.0
    %1634 = vmatprep.subr.mxu0 0.0
    %1635 = vmatpush1.msra.mxu0 0.0
    %1636 = vmatprep.subr.mxu0 0.0
    %1637 = vmatpush1.msra.mxu0 0.0
    %1638 = vmatprep.subr.mxu0 0.0
    %1639 = vmatpush1.msra.mxu0 0.0
    %1640 = vmatprep.subr.mxu0 0.0
    %1641 = vmatpush1.msra.mxu0 0.0
    %1642 = vmatprep.subr.mxu0 0.0
    %1643 = vmatpush1.msra.mxu0 0.0
    %1644 = vmatprep.subr.mxu0 0.0
    %1645 = vmatpush1.msra.mxu0 0.0
    %1646 = vmatprep.mubr.f32.mxu0 0.0
    %1647 = vmatmul.mubr.f32.gmra.mrb[0].mxu0 %v1580
    %v1648 = vpop.f32.mrb[0].mxu0
    %v1649 = vadd.f32 %v95, %v1648
    %v1650 = vpop.f32.mrb[0].mxu0
    %1651 = vdwg.mxu0
    %1652 = vmatprep.subr.mxu0 0.0
    %1653 = vmatpush1.msra.mxu0 %v78
    %1654 = vmatprep.subr.mxu0 0.0
    %1655 = vmatpush1.msra.mxu0 %v79
    %1656 = vmatprep.subr.mxu0 0.0
    %1657 = vmatpush1.msra.mxu0 %v80
    %1658 = vmatprep.subr.mxu0 0.0
    %1659 = vmatpush1.msra.mxu0 %v81
    %1660 = vmatprep.subr.mxu0 0.0
    %1661 = vmatpush1.msra.mxu0 0.0
    %1662 = vmatprep.subr.mxu0 0.0
    %1663 = vmatpush1.msra.mxu0 0.0
    %1664 = vmatprep.subr.mxu0 0.0
    %1665 = vmatpush1.msra.mxu0 0.0
    %1666 = vmatprep.subr.mxu0 0.0
    %1667 = vmatpush1.msra.mxu0 0.0
    %1668 = vmatprep.subr.mxu0 0.0
    %1669 = vmatpush1.msra.mxu0 0.0
    %1670 = vmatprep.subr.mxu0 0.0
    %1671 = vmatpush1.msra.mxu0 0.0
    %1672 = vmatprep.subr.mxu0 0.0
    %1673 = vmatpush1.msra.mxu0 0.0
    %1674 = vmatprep.subr.mxu0 0.0
    %1675 = vmatpush1.msra.mxu0 0.0
    %1676 = vmatprep.subr.mxu0 0.0
    %1677 = vmatpush1.msra.mxu0 0.0
    %1678 = vmatprep.subr.mxu0 0.0
    %1679 = vmatpush1.msra.mxu0 0.0
    %1680 = vmatprep.subr.mxu0 0.0
    %1681 = vmatpush1.msra.mxu0 0.0
    %1682 = vmatprep.subr.mxu0 0.0
    %1683 = vmatpush1.msra.mxu0 0.0
    %1684 = vmatprep.subr.mxu0 0.0
    %1685 = vmatpush1.msra.mxu0 0.0
    %1686 = vmatprep.subr.mxu0 0.0
    %1687 = vmatpush1.msra.mxu0 0.0
    %1688 = vmatprep.subr.mxu0 0.0
    %1689 = vmatpush1.msra.mxu0 0.0
    %1690 = vmatprep.subr.mxu0 0.0
    %1691 = vmatpush1.msra.mxu0 0.0
    %1692 = vmatprep.subr.mxu0 0.0
    %1693 = vmatpush1.msra.mxu0 0.0
    %1694 = vmatprep.subr.mxu0 0.0
    %1695 = vmatpush1.msra.mxu0 0.0
    %1696 = vmatprep.subr.mxu0 0.0
    %1697 = vmatpush1.msra.mxu0 0.0
    %1698 = vmatprep.subr.mxu0 0.0
    %1699 = vmatpush1.msra.mxu0 0.0
    %1700 = vmatprep.subr.mxu0 0.0
    %1701 = vmatpush1.msra.mxu0 0.0
    %1702 = vmatprep.subr.mxu0 0.0
    %1703 = vmatpush1.msra.mxu0 0.0
    %1704 = vmatprep.subr.mxu0 0.0
    %1705 = vmatpush1.msra.mxu0 0.0
    %1706 = vmatprep.subr.mxu0 0.0
    %1707 = vmatpush1.msra.mxu0 0.0
    %1708 = vmatprep.subr.mxu0 0.0
    %1709 = vmatpush1.msra.mxu0 0.0
    %1710 = vmatprep.subr.mxu0 0.0
    %1711 = vmatpush1.msra.mxu0 0.0
    %1712 = vmatprep.subr.mxu0 0.0
    %1713 = vmatpush1.msra.mxu0 0.0
    %1714 = vmatprep.subr.mxu0 0.0
    %1715 = vmatpush1.msra.mxu0 0.0
    %1716 = vmatprep.mubr.f32.mxu0 0.0
    %1717 = vmatmul.mubr.f32.gmra.mrb[0].mxu0 %v1482
    %v1718 = vpop.f32.mrb[0].mxu0
    %v1719 = vadd.f32 0.0, %v1718
    %v1720 = vpop.f32.mrb[0].mxu0
    %1721 = vdwg.mxu0
    %v1722 = vadd.f32 %v235, %v1719
    %v1723 = vmul.f32 %v1722, 0.5
    %v1724 = vtanh.pop %v1723
    %v1725 = vmul.f32 %v1724, 0.5
    %v1726 = vadd.f32 %v1725, 0.5
    %v1727 = vtanh.pop %v1722
    %v1728 = vmul.f32 %v1726, %v1472
    %1730 = vrot.lane.b32.xlu0 %v1727, 64
    %v1731 = vpop.permute.xlu0 %1730
    %v1733 = vmul.f32 %v1726, %v1731
    %1735 = vrot.lane.b32.xlu0 %v1733, 32
    %v1736 = vpop.permute.xlu0 %1735
    %v1738 = vadd.f32 %v1728, %v1736
    %v1739 = vtanh.pop %v1738
    %1741 = vrot.lane.b32.xlu0 %v1739, 64
    %v1742 = vpop.permute.xlu0 %1741
    %v1744 = vmul.f32 %v1726, %v1742
    %1746 = vrot.lane.b32.xlu0 %v1744, 32
    %v1747 = vpop.permute.xlu0 %1746
    %v1748 = vsel %vm248, %v1747, 0
    %1750 = vmatprep.subr.mxu0 0.0
    %1751 = vmatpush1.msra.mxu0 %v82
    %1752 = vmatprep.subr.mxu0 0.0
    %1753 = vmatpush1.msra.mxu0 %v83
    %1754 = vmatprep.subr.mxu0 0.0
    %1755 = vmatpush1.msra.mxu0 %v84
    %1756 = vmatprep.subr.mxu0 0.0
    %1757 = vmatpush1.msra.mxu0 %v85
    %1758 = vmatprep.subr.mxu0 0.0
    %1759 = vmatpush1.msra.mxu0 0.0
    %1760 = vmatprep.subr.mxu0 0.0
    %1761 = vmatpush1.msra.mxu0 0.0
    %1762 = vmatprep.subr.mxu0 0.0
    %1763 = vmatpush1.msra.mxu0 0.0
    %1764 = vmatprep.subr.mxu0 0.0
    %1765 = vmatpush1.msra.mxu0 0.0
    %1766 = vmatprep.subr.mxu0 0.0
    %1767 = vmatpush1.msra.mxu0 0.0
    %1768 = vmatprep.subr.mxu0 0.0
    %1769 = vmatpush1.msra.mxu0 0.0
    %1770 = vmatprep.subr.mxu0 0.0
    %1771 = vmatpush1.msra.mxu0 0.0
    %1772 = vmatprep.subr.mxu0 0.0
    %1773 = vmatpush1.msra.mxu0 0.0
    %1774 = vmatprep.subr.mxu0 0.0
    %1775 = vmatpush1.msra.mxu0 0.0
    %1776 = vmatprep.subr.mxu0 0.0
    %1777 = vmatpush1.msra.mxu0 0.0
    %1778 = vmatprep.subr.mxu0 0.0
    %1779 = vmatpush1.msra.mxu0 0.0
    %1780 = vmatprep.subr.mxu0 0.0
    %1781 = vmatpush1.msra.mxu0 0.0
    %1782 = vmatprep.subr.mxu0 0.0
    %1783 = vmatpush1.msra.mxu0 0.0
    %1784 = vmatprep.subr.mxu0 0.0
    %1785 = vmatpush1.msra.mxu0 0.0
    %1786 = vmatprep.subr.mxu0 0.0
    %1787 = vmatpush1.msra.mxu0 0.0
    %1788 = vmatprep.subr.mxu0 0.0
    %1789 = vmatpush1.msra.mxu0 0.0
    %1790 = vmatprep.subr.mxu0 0.0
    %1791 = vmatpush1.msra.mxu0 0.0
    %1792 = vmatprep.subr.mxu0 0.0
    %1793 = vmatpush1.msra.mxu0 0.0
    %1794 = vmatprep.subr.mxu0 0.0
    %1795 = vmatpush1.msra.mxu0 0.0
    %1796 = vmatprep.subr.mxu0 0.0
    %1797 = vmatpush1.msra.mxu0 0.0
    %1798 = vmatprep.subr.mxu0 0.0
    %1799 = vmatpush1.msra.mxu0 0.0
    %1800 = vmatprep.subr.mxu0 0.0
    %1801 = vmatpush1.msra.mxu0 0.0
    %1802 = vmatprep.subr.mxu0 0.0
    %1803 = vmatpush1.msra.mxu0 0.0
    %1804 = vmatprep.subr.mxu0 0.0
    %1805 = vmatpush1.msra.mxu0 0.0
    %1806 = vmatprep.subr.mxu0 0.0
    %1807 = vmatpush1.msra.mxu0 0.0
    %1808 = vmatprep.subr.mxu0 0.0
    %1809 = vmatpush1.msra.mxu0 0.0
    %1810 = vmatprep.subr.mxu0 0.0
    %1811 = vmatpush1.msra.mxu0 0.0
    %1812 = vmatprep.subr.mxu0 0.0
    %1813 = vmatpush1.msra.mxu0 0.0
    %1814 = vmatprep.mubr.f32.mxu0 0.0
    %1815 = vmatmul.mubr.f32.gmra.mrb[0].mxu0 %v1748
    %v1816 = vpop.f32.mrb[0].mxu0
    %v1817 = vadd.f32 0.0, %v1816
    %v1818 = vpop.f32.mrb[0].mxu0
    %1819 = vdwg.mxu0
    %v1820 = vadd.f32 %v1649, %v1817
    %v1821 = vmul.f32 %v1820, 0.5
    %v1822 = vtanh.pop %v1821
    %v1823 = vmul.f32 %v1822, 0.5
    %v1824 = vadd.f32 %v1823, 0.5
    %v1825 = vtanh.pop %v1820
    %v1826 = vmul.f32 %v1824, %v1570
    %1828 = vrot.lane.b32.xlu0 %v1825, 64
    %v1829 = vpop.permute.xlu0 %1828
    %v1831 = vmul.f32 %v1824, %v1829
    %1833 = vrot.lane.b32.xlu0 %v1831, 32
    %v1834 = vpop.permute.xlu0 %1833
    %v1836 = vadd.f32 %v1826, %v1834
    %v1837 = vtanh.pop %v1836
    %1839 = vrot.lane.b32.xlu0 %v1837, 64
    %v1840 = vpop.permute.xlu0 %1839
    %v1842 = vmul.f32 %v1824, %v1840
    %1844 = vrot.lane.b32.xlu0 %v1842, 32
    %v1845 = vpop.permute.xlu0 %1844
    %v1846 = vsel %vm248, %v1845, 0
    %1848 = vmatprep.subr.mxu0 0.0
    %1849 = vmatpush1.msra.mxu0 %v86
    %1850 = vmatprep.subr.mxu0 0.0
    %1851 = vmatpush1.msra.mxu0 %v87
    %1852 = vmatprep.subr.mxu0 0.0
    %1853 = vmatpush1.msra.mxu0 %v88
    %1854 = vmatprep.subr.mxu0 0.0
    %1855 = vmatpush1.msra.mxu0 %v89
    %1856 = vmatprep.subr.mxu0 0.0
    %1857 = vmatpush1.msra.mxu0 0.0
    %1858 = vmatprep.subr.mxu0 0.0
    %1859 = vmatpush1.msra.mxu0 0.0
    %1860 = vmatprep.subr.mxu0 0.0
    %1861 = vmatpush1.msra.mxu0 0.0
    %1862 = vmatprep.subr.mxu0 0.0
    %1863 = vmatpush1.msra.mxu0 0.0
    %1864 = vmatprep.subr.mxu0 0.0
    %1865 = vmatpush1.msra.mxu0 0.0
    %1866 = vmatprep.subr.mxu0 0.0
    %1867 = vmatpush1.msra.mxu0 0.0
    %1868 = vmatprep.subr.mxu0 0.0
    %1869 = vmatpush1.msra.mxu0 0.0
    %1870 = vmatprep.subr.mxu0 0.0
    %1871 = vmatpush1.msra.mxu0 0.0
    %1872 = vmatprep.subr.mxu0 0.0
    %1873 = vmatpush1.msra.mxu0 0.0
    %1874 = vmatprep.subr.mxu0 0.0
    %1875 = vmatpush1.msra.mxu0 0.0
    %1876 = vmatprep.subr.mxu0 0.0
    %1877 = vmatpush1.msra.mxu0 0.0
    %1878 = vmatprep.subr.mxu0 0.0
    %1879 = vmatpush1.msra.mxu0 0.0
    %1880 = vmatprep.subr.mxu0 0.0
    %1881 = vmatpush1.msra.mxu0 0.0
    %1882 = vmatprep.subr.mxu0 0.0
    %1883 = vmatpush1.msra.mxu0 0.0
    %1884 = vmatprep.subr.mxu0 0.0
    %1885 = vmatpush1.msra.mxu0 0.0
    %1886 = vmatprep.subr.mxu0 0.0
    %1887 = vmatpush1.msra.mxu0 0.0
    %1888 = vmatprep.subr.mxu0 0.0
    %1889 = vmatpush1.msra.mxu0 0.0
    %1890 = vmatprep.subr.mxu0 0.0
    %1891 = vmatpush1.msra.mxu0 0.0
    %1892 = vmatprep.subr.mxu0 0.0
    %1893 = vmatpush1.msra.mxu0 0.0
    %1894 = vmatprep.subr.mxu0 0.0
    %1895 = vmatpush1.msra.mxu0 0.0
    %1896 = vmatprep.subr.mxu0 0.0
    %1897 = vmatpush1.msra.mxu0 0.0
    %1898 = vmatprep.subr.mxu0 0.0
    %1899 = vmatpush1.msra.mxu0 0.0
    %1900 = vmatprep.subr.mxu0 0.0
    %1901 = vmatpush1.msra.mxu0 0.0
    %1902 = vmatprep.subr.mxu0 0.0
    %1903 = vmatpush1.msra.mxu0 0.0
    %1904 = vmatprep.subr.mxu0 0.0
    %1905 = vmatpush1.msra.mxu0 0.0
    %1906 = vmatprep.subr.mxu0 0.0
    %1907 = vmatpush1.msra.mxu0 0.0
    %1908 = vmatprep.subr.mxu0 0.0
    %1909 = vmatpush1.msra.mxu0 0.0
    %1910 = vmatprep.subr.mxu0 0.0
    %1911 = vmatpush1.msra.mxu0 0.0
    %1912 = vmatprep.mubr.f32.mxu0 0.0
    %1913 = vmatmul.mubr.f32.gmra.mrb[0].mxu0 %v1846
    %v1914 = vpop.f32.mrb[0].mxu0
    %v1915 = vadd.f32 %v95, %v1914
    %v1916 = vpop.f32.mrb[0].mxu0
    %1917 = vdwg.mxu0
    %1918 = vmatprep.subr.mxu0 0.0
    %1919 = vmatpush1.msra.mxu0 %v78
    %1920 = vmatprep.subr.mxu0 0.0
    %1921 = vmatpush1.msra.mxu0 %v79
    %1922 = vmatprep.subr.mxu0 0.0
    %1923 = vmatpush1.msra.mxu0 %v80
    %1924 = vmatprep.subr.mxu0 0.0
    %1925 = vmatpush1.msra.mxu0 %v81
    %1926 = vmatprep.subr.mxu0 0.0
    %1927 = vmatpush1.msra.mxu0 0.0
    %1928 = vmatprep.subr.mxu0 0.0
    %1929 = vmatpush1.msra.mxu0 0.0
    %1930 = vmatprep.subr.mxu0 0.0
    %1931 = vmatpush1.msra.mxu0 0.0
    %1932 = vmatprep.subr.mxu0 0.0
    %1933 = vmatpush1.msra.mxu0 0.0
    %1934 = vmatprep.subr.mxu0 0.0
    %1935 = vmatpush1.msra.mxu0 0.0
    %1936 = vmatprep.subr.mxu0 0.0
    %1937 = vmatpush1.msra.mxu0 0.0
    %1938 = vmatprep.subr.mxu0 0.0
    %1939 = vmatpush1.msra.mxu0 0.0
    %1940 = vmatprep.subr.mxu0 0.0
    %1941 = vmatpush1.msra.mxu0 0.0
    %1942 = vmatprep.subr.mxu0 0.0
    %1943 = vmatpush1.msra.mxu0 0.0
    %1944 = vmatprep.subr.mxu0 0.0
    %1945 = vmatpush1.msra.mxu0 0.0
    %1946 = vmatprep.subr.mxu0 0.0
    %1947 = vmatpush1.msra.mxu0 0.0
    %1948 = vmatprep.subr.mxu0 0.0
    %1949 = vmatpush1.msra.mxu0 0.0
    %1950 = vmatprep.subr.mxu0 0.0
    %1951 = vmatpush1.msra.mxu0 0.0
    %1952 = vmatprep.subr.mxu0 0.0
    %1953 = vmatpush1.msra.mxu0 0.0
    %1954 = vmatprep.subr.mxu0 0.0
    %1955 = vmatpush1.msra.mxu0 0.0
    %1956 = vmatprep.subr.mxu0 0.0
    %1957 = vmatpush1.msra.mxu0 0.0
    %1958 = vmatprep.subr.mxu0 0.0
    %1959 = vmatpush1.msra.mxu0 0.0
    %1960 = vmatprep.subr.mxu0 0.0
    %1961 = vmatpush1.msra.mxu0 0.0
    %1962 = vmatprep.subr.mxu0 0.0
    %1963 = vmatpush1.msra.mxu0 0.0
    %1964 = vmatprep.subr.mxu0 0.0
    %1965 = vmatpush1.msra.mxu0 0.0
    %1966 = vmatprep.subr.mxu0 0.0
    %1967 = vmatpush1.msra.mxu0 0.0
    %1968 = vmatprep.subr.mxu0 0.0
    %1969 = vmatpush1.msra.mxu0 0.0
    %1970 = vmatprep.subr.mxu0 0.0
    %1971 = vmatpush1.msra.mxu0 0.0
    %1972 = vmatprep.subr.mxu0 0.0
    %1973 = vmatpush1.msra.mxu0 0.0
    %1974 = vmatprep.subr.mxu0 0.0
    %1975 = vmatpush1.msra.mxu0 0.0
    %1976 = vmatprep.subr.mxu0 0.0
    %1977 = vmatpush1.msra.mxu0 0.0
    %1978 = vmatprep.subr.mxu0 0.0
    %1979 = vmatpush1.msra.mxu0 0.0
    %1980 = vmatprep.subr.mxu0 0.0
    %1981 = vmatpush1.msra.mxu0 0.0
    %1982 = vmatprep.mubr.f32.mxu0 0.0
    %1983 = vmatmul.mubr.f32.gmra.mrb[0].mxu0 %v1748
    %v1984 = vpop.f32.mrb[0].mxu0
    %v1985 = vadd.f32 0.0, %v1984
    %v1986 = vpop.f32.mrb[0].mxu0
    %1987 = vdwg.mxu0
    %v1988 = vadd.f32 %v240, %v1985
    %v1989 = vmul.f32 %v1988, 0.5
    %v1990 = vtanh.pop %v1989
    %v1991 = vmul.f32 %v1990, 0.5
    %v1992 = vadd.f32 %v1991, 0.5
    %v1993 = vtanh.pop %v1988
    %v1994 = vmul.f32 %v1992, %v1738
    %1996 = vrot.lane.b32.xlu0 %v1993, 64
    %v1997 = vpop.permute.xlu0 %1996
    %v1999 = vmul.f32 %v1992, %v1997
    %2001 = vrot.lane.b32.xlu0 %v1999, 32
    %v2002 = vpop.permute.xlu0 %2001
    %v2004 = vadd.f32 %v1994, %v2002
    %v2005 = vtanh.pop %v2004
    %2007 = vrot.lane.b32.xlu0 %v2005, 64
    %v2008 = vpop.permute.xlu0 %2007
    %v2010 = vmul.f32 %v1992, %v2008
    %2012 = vrot.lane.b32.xlu0 %v2010, 32
    %v2013 = vpop.permute.xlu0 %2012
    %v2014 = vsel %vm248, %v2013, 0
    %2016 = vmatprep.subr.mxu0 0.0
    %2017 = vmatpush1.msra.mxu0 %v82
    %2018 = vmatprep.subr.mxu0 0.0
    %2019 = vmatpush1.msra.mxu0 %v83
    %2020 = vmatprep.subr.mxu0 0.0
    %2021 = vmatpush1.msra.mxu0 %v84
    %2022 = vmatprep.subr.mxu0 0.0
    %2023 = vmatpush1.msra.mxu0 %v85
    %2024 = vmatprep.subr.mxu0 0.0
    %2025 = vmatpush1.msra.mxu0 0.0
    %2026 = vmatprep.subr.mxu0 0.0
    %2027 = vmatpush1.msra.mxu0 0.0
    %2028 = vmatprep.subr.mxu0 0.0
    %2029 = vmatpush1.msra.mxu0 0.0
    %2030 = vmatprep.subr.mxu0 0.0
    %2031 = vmatpush1.msra.mxu0 0.0
    %2032 = vmatprep.subr.mxu0 0.0
    %2033 = vmatpush1.msra.mxu0 0.0
    %2034 = vmatprep.subr.mxu0 0.0
    %2035 = vmatpush1.msra.mxu0 0.0
    %2036 = vmatprep.subr.mxu0 0.0
    %2037 = vmatpush1.msra.mxu0 0.0
    %2038 = vmatprep.subr.mxu0 0.0
    %2039 = vmatpush1.msra.mxu0 0.0
    %2040 = vmatprep.subr.mxu0 0.0
    %2041 = vmatpush1.msra.mxu0 0.0
    %2042 = vmatprep.subr.mxu0 0.0
    %2043 = vmatpush1.msra.mxu0 0.0
    %2044 = vmatprep.subr.mxu0 0.0
    %2045 = vmatpush1.msra.mxu0 0.0
    %2046 = vmatprep.subr.mxu0 0.0
    %2047 = vmatpush1.msra.mxu0 0.0
    %2048 = vmatprep.subr.mxu0 0.0
    %2049 = vmatpush1.msra.mxu0 0.0
    %2050 = vmatprep.subr.mxu0 0.0
    %2051 = vmatpush1.msra.mxu0 0.0
    %2052 = vmatprep.subr.mxu0 0.0
    %2053 = vmatpush1.msra.mxu0 0.0
    %2054 = vmatprep.subr.mxu0 0.0
    %2055 = vmatpush1.msra.mxu0 0.0
    %2056 = vmatprep.subr.mxu0 0.0
    %2057 = vmatpush1.msra.mxu0 0.0
    %2058 = vmatprep.subr.mxu0 0.0
    %2059 = vmatpush1.msra.mxu0 0.0
    %2060 = vmatprep.subr.mxu0 0.0
    %2061 = vmatpush1.msra.mxu0 0.0
    %2062 = vmatprep.subr.mxu0 0.0
    %2063 = vmatpush1.msra.mxu0 0.0
    %2064 = vmatprep.subr.mxu0 0.0
    %2065 = vmatpush1.msra.mxu0 0.0
    %2066 = vmatprep.subr.mxu0 0.0
    %2067 = vmatpush1.msra.mxu0 0.0
    %2068 = vmatprep.subr.mxu0 0.0
    %2069 = vmatpush1.msra.mxu0 0.0
    %2070 = vmatprep.subr.mxu0 0.0
    %2071 = vmatpush1.msra.mxu0 0.0
    %2072 = vmatprep.subr.mxu0 0.0
    %2073 = vmatpush1.msra.mxu0 0.0
    %2074 = vmatprep.subr.mxu0 0.0
    %2075 = vmatpush1.msra.mxu0 0.0
    %2076 = vmatprep.subr.mxu0 0.0
    %2077 = vmatpush1.msra.mxu0 0.0
    %2078 = vmatprep.subr.mxu0 0.0
    %2079 = vmatpush1.msra.mxu0 0.0
    %2080 = vmatprep.mubr.f32.mxu0 0.0
    %2081 = vmatmul.mubr.f32.gmra.mrb[0].mxu0 %v2014
    %v2082 = vpop.f32.mrb[0].mxu0
    %v2083 = vadd.f32 0.0, %v2082
    %v2084 = vpop.f32.mrb[0].mxu0
    %2085 = vdwg.mxu0
    %v2086 = vadd.f32 %v1915, %v2083
    %v2087 = vmul.f32 %v2086, 0.5
    %v2088 = vtanh.pop %v2087
    %v2089 = vmul.f32 %v2088, 0.5
    %v2090 = vadd.f32 %v2089, 0.5
    %v2091 = vtanh.pop %v2086
    %v2092 = vmul.f32 %v2090, %v1836
    %2094 = vrot.lane.b32.xlu0 %v2091, 64
    %v2095 = vpop.permute.xlu0 %2094
    %v2097 = vmul.f32 %v2090, %v2095
    %2099 = vrot.lane.b32.xlu0 %v2097, 32
    %v2100 = vpop.permute.xlu0 %2099
    %v2102 = vadd.f32 %v2092, %v2100
    %v2103 = vtanh.pop %v2102
    %2105 = vrot.lane.b32.xlu0 %v2103, 64
    %v2106 = vpop.permute.xlu0 %2105
    %v2108 = vmul.f32 %v2090, %v2106
    %2110 = vrot.lane.b32.xlu0 %v2108, 32
    %v2111 = vpop.permute.xlu0 %2110
    %v2112 = vsel %vm248, %v2111, 0
    %2114 = vmatprep.subr.mxu0 0.0
    %2115 = vmatpush1.msra.mxu0 %v86
    %2116 = vmatprep.subr.mxu0 0.0
    %2117 = vmatpush1.msra.mxu0 %v87
    %2118 = vmatprep.subr.mxu0 0.0
    %2119 = vmatpush1.msra.mxu0 %v88
    %2120 = vmatprep.subr.mxu0 0.0
    %2121 = vmatpush1.msra.mxu0 %v89
    %2122 = vmatprep.subr.mxu0 0.0
    %2123 = vmatpush1.msra.mxu0 0.0
    %2124 = vmatprep.subr.mxu0 0.0
    %2125 = vmatpush1.msra.mxu0 0.0
    %2126 = vmatprep.subr.mxu0 0.0
    %2127 = vmatpush1.msra.mxu0 0.0
    %2128 = vmatprep.subr.mxu0 0.0
    %2129 = vmatpush1.msra.mxu0 0.0
    %2130 = vmatprep.subr.mxu0 0.0
    %2131 = vmatpush1.msra.mxu0 0.0
    %2132 = vmatprep.subr.mxu0 0.0
    %2133 = vmatpush1.msra.mxu0 0.0
    %2134 = vmatprep.subr.mxu0 0.0
    %2135 = vmatpush1.msra.mxu0 0.0
    %2136 = vmatprep.subr.mxu0 0.0
    %2137 = vmatpush1.msra.mxu0 0.0
    %2138 = vmatprep.subr.mxu0 0.0
    %2139 = vmatpush1.msra.mxu0 0.0
    %2140 = vmatprep.subr.mxu0 0.0
    %2141 = vmatpush1.msra.mxu0 0.0
    %2142 = vmatprep.subr.mxu0 0.0
    %2143 = vmatpush1.msra.mxu0 0.0
    %2144 = vmatprep.subr.mxu0 0.0
    %2145 = vmatpush1.msra.mxu0 0.0
    %2146 = vmatprep.subr.mxu0 0.0
    %2147 = vmatpush1.msra.mxu0 0.0
    %2148 = vmatprep.subr.mxu0 0.0
    %2149 = vmatpush1.msra.mxu0 0.0
    %2150 = vmatprep.subr.mxu0 0.0
    %2151 = vmatpush1.msra.mxu0 0.0
    %2152 = vmatprep.subr.mxu0 0.0
    %2153 = vmatpush1.msra.mxu0 0.0
    %2154 = vmatprep.subr.mxu0 0.0
    %2155 = vmatpush1.msra.mxu0 0.0
    %2156 = vmatprep.subr.mxu0 0.0
    %2157 = vmatpush1.msra.mxu0 0.0
    %2158 = vmatprep.subr.mxu0 0.0
    %2159 = vmatpush1.msra.mxu0 0.0
    %2160 = vmatprep.subr.mxu0 0.0
    %2161 = vmatpush1.msra.mxu0 0.0
    %2162 = vmatprep.subr.mxu0 0.0
    %2163 = vmatpush1.msra.mxu0 0.0
    %2164 = vmatprep.subr.mxu0 0.0
    %2165 = vmatpush1.msra.mxu0 0.0
    %2166 = vmatprep.subr.mxu0 0.0
    %2167 = vmatpush1.msra.mxu0 0.0
    %2168 = vmatprep.subr.mxu0 0.0
    %2169 = vmatpush1.msra.mxu0 0.0
    %2170 = vmatprep.subr.mxu0 0.0
    %2171 = vmatpush1.msra.mxu0 0.0
    %2172 = vmatprep.subr.mxu0 0.0
    %2173 = vmatpush1.msra.mxu0 0.0
    %2174 = vmatprep.subr.mxu0 0.0
    %2175 = vmatpush1.msra.mxu0 0.0
    %2176 = vmatprep.subr.mxu0 0.0
    %2177 = vmatpush1.msra.mxu0 0.0
    %2178 = vmatprep.mubr.f32.mxu0 0.0
    %2179 = vmatmul.mubr.f32.gmra.mrb[0].mxu0 %v2112
    %v2180 = vpop.f32.mrb[0].mxu0
    %v2181 = vadd.f32 %v95, %v2180
    %v2182 = vpop.f32.mrb[0].mxu0
    %2183 = vdwg.mxu0
    %2184 = vmatprep.subr.mxu0 0.0
    %2185 = vmatpush1.msra.mxu0 %v78
    %2186 = vmatprep.subr.mxu0 0.0
    %2187 = vmatpush1.msra.mxu0 %v79
    %2188 = vmatprep.subr.mxu0 0.0
    %2189 = vmatpush1.msra.mxu0 %v80
    %2190 = vmatprep.subr.mxu0 0.0
    %2191 = vmatpush1.msra.mxu0 %v81
    %2192 = vmatprep.subr.mxu0 0.0
    %2193 = vmatpush1.msra.mxu0 0.0
    %2194 = vmatprep.subr.mxu0 0.0
    %2195 = vmatpush1.msra.mxu0 0.0
    %2196 = vmatprep.subr.mxu0 0.0
    %2197 = vmatpush1.msra.mxu0 0.0
    %2198 = vmatprep.subr.mxu0 0.0
    %2199 = vmatpush1.msra.mxu0 0.0
    %2200 = vmatprep.subr.mxu0 0.0
    %2201 = vmatpush1.msra.mxu0 0.0
    %2202 = vmatprep.subr.mxu0 0.0
    %2203 = vmatpush1.msra.mxu0 0.0
    %2204 = vmatprep.subr.mxu0 0.0
    %2205 = vmatpush1.msra.mxu0 0.0
    %2206 = vmatprep.subr.mxu0 0.0
    %2207 = vmatpush1.msra.mxu0 0.0
    %2208 = vmatprep.subr.mxu0 0.0
    %2209 = vmatpush1.msra.mxu0 0.0
    %2210 = vmatprep.subr.mxu0 0.0
    %2211 = vmatpush1.msra.mxu0 0.0
    %2212 = vmatprep.subr.mxu0 0.0
    %2213 = vmatpush1.msra.mxu0 0.0
    %2214 = vmatprep.subr.mxu0 0.0
    %2215 = vmatpush1.msra.mxu0 0.0
    %2216 = vmatprep.subr.mxu0 0.0
    %2217 = vmatpush1.msra.mxu0 0.0
    %2218 = vmatprep.subr.mxu0 0.0
    %2219 = vmatpush1.msra.mxu0 0.0
    %2220 = vmatprep.subr.mxu0 0.0
    %2221 = vmatpush1.msra.mxu0 0.0
    %2222 = vmatprep.subr.mxu0 0.0
    %2223 = vmatpush1.msra.mxu0 0.0
    %2224 = vmatprep.subr.mxu0 0.0
    %2225 = vmatpush1.msra.mxu0 0.0
    %2226 = vmatprep.subr.mxu0 0.0
    %2227 = vmatpush1.msra.mxu0 0.0
    %2228 = vmatprep.subr.mxu0 0.0
    %2229 = vmatpush1.msra.mxu0 0.0
    %2230 = vmatprep.subr.mxu0 0.0
    %2231 = vmatpush1.msra.mxu0 0.0
    %2232 = vmatprep.subr.mxu0 0.0
    %2233 = vmatpush1.msra.mxu0 0.0
    %2234 = vmatprep.subr.mxu0 0.0
    %2235 = vmatpush1.msra.mxu0 0.0
    %2236 = vmatprep.subr.mxu0 0.0
    %2237 = vmatpush1.msra.mxu0 0.0
    %2238 = vmatprep.subr.mxu0 0.0
    %2239 = vmatpush1.msra.mxu0 0.0
    %2240 = vmatprep.subr.mxu0 0.0
    %2241 = vmatpush1.msra.mxu0 0.0
    %2242 = vmatprep.subr.mxu0 0.0
    %2243 = vmatpush1.msra.mxu0 0.0
    %2244 = vmatprep.subr.mxu0 0.0
    %2245 = vmatpush1.msra.mxu0 0.0
    %2246 = vmatprep.subr.mxu0 0.0
    %2247 = vmatpush1.msra.mxu0 0.0
    %2248 = vmatprep.mubr.f32.mxu0 0.0
    %2249 = vmatmul.mubr.f32.gmra.mrb[0].mxu0 %v2014
    %v2250 = vpop.f32.mrb[0].mxu0
    %v2251 = vadd.f32 0.0, %v2250
    %v2252 = vpop.f32.mrb[0].mxu0
    %2253 = vdwg.mxu0
    %v2254 = vadd.f32 %v245, %v2251
    %v2255 = vmul.f32 %v2254, 0.5
    %v2256 = vtanh.pop %v2255
    %v2257 = vmul.f32 %v2256, 0.5
    %v2258 = vadd.f32 %v2257, 0.5
    %v2259 = vtanh.pop %v2254
    %v2260 = vmul.f32 %v2258, %v2004
    %2262 = vrot.lane.b32.xlu0 %v2259, 64
    %v2263 = vpop.permute.xlu0 %2262
    %v2265 = vmul.f32 %v2258, %v2263
    %2267 = vrot.lane.b32.xlu0 %v2265, 32
    %v2268 = vpop.permute.xlu0 %2267
    %v2270 = vadd.f32 %v2260, %v2268
    %v2271 = vtanh.pop %v2270
    %2273 = vrot.lane.b32.xlu0 %v2271, 64
    %v2274 = vpop.permute.xlu0 %2273
    %v2276 = vmul.f32 %v2258, %v2274
    %2278 = vrot.lane.b32.xlu0 %v2276, 32
    %v2279 = vpop.permute.xlu0 %2278
    %v2280 = vsel %vm248, %v2279, 0
    %2282 = vmatprep.subr.mxu0 0.0
    %2283 = vmatpush1.msra.mxu0 %v82
    %2284 = vmatprep.subr.mxu0 0.0
    %2285 = vmatpush1.msra.mxu0 %v83
    %2286 = vmatprep.subr.mxu0 0.0
    %2287 = vmatpush1.msra.mxu0 %v84
    %2288 = vmatprep.subr.mxu0 0.0
    %2289 = vmatpush1.msra.mxu0 %v85
    %2290 = vmatprep.subr.mxu0 0.0
    %2291 = vmatpush1.msra.mxu0 0.0
    %2292 = vmatprep.subr.mxu0 0.0
    %2293 = vmatpush1.msra.mxu0 0.0
    %2294 = vmatprep.subr.mxu0 0.0
    %2295 = vmatpush1.msra.mxu0 0.0
    %2296 = vmatprep.subr.mxu0 0.0
    %2297 = vmatpush1.msra.mxu0 0.0
    %2298 = vmatprep.subr.mxu0 0.0
    %2299 = vmatpush1.msra.mxu0 0.0
    %2300 = vmatprep.subr.mxu0 0.0
    %2301 = vmatpush1.msra.mxu0 0.0
    %2302 = vmatprep.subr.mxu0 0.0
    %2303 = vmatpush1.msra.mxu0 0.0
    %2304 = vmatprep.subr.mxu0 0.0
    %2305 = vmatpush1.msra.mxu0 0.0
    %2306 = vmatprep.subr.mxu0 0.0
    %2307 = vmatpush1.msra.mxu0 0.0
    %2308 = vmatprep.subr.mxu0 0.0
    %2309 = vmatpush1.msra.mxu0 0.0
    %2310 = vmatprep.subr.mxu0 0.0
    %2311 = vmatpush1.msra.mxu0 0.0
    %2312 = vmatprep.subr.mxu0 0.0
    %2313 = vmatpush1.msra.mxu0 0.0
    %2314 = vmatprep.subr.mxu0 0.0
    %2315 = vmatpush1.msra.mxu0 0.0
    %2316 = vmatprep.subr.mxu0 0.0
    %2317 = vmatpush1.msra.mxu0 0.0
    %2318 = vmatprep.subr.mxu0 0.0
    %2319 = vmatpush1.msra.mxu0 0.0
    %2320 = vmatprep.subr.mxu0 0.0
    %2321 = vmatpush1.msra.mxu0 0.0
    %2322 = vmatprep.subr.mxu0 0.0
    %2323 = vmatpush1.msra.mxu0 0.0
    %2324 = vmatprep.subr.mxu0 0.0
    %2325 = vmatpush1.msra.mxu0 0.0
    %2326 = vmatprep.subr.mxu0 0.0
    %2327 = vmatpush1.msra.mxu0 0.0
    %2328 = vmatprep.subr.mxu0 0.0
    %2329 = vmatpush1.msra.mxu0 0.0
    %2330 = vmatprep.subr.mxu0 0.0
    %2331 = vmatpush1.msra.mxu0 0.0
    %2332 = vmatprep.subr.mxu0 0.0
    %2333 = vmatpush1.msra.mxu0 0.0
    %2334 = vmatprep.subr.mxu0 0.0
    %2335 = vmatpush1.msra.mxu0 0.0
    %2336 = vmatprep.subr.mxu0 0.0
    %2337 = vmatpush1.msra.mxu0 0.0
    %2338 = vmatprep.subr.mxu0 0.0
    %2339 = vmatpush1.msra.mxu0 0.0
    %2340 = vmatprep.subr.mxu0 0.0
    %2341 = vmatpush1.msra.mxu0 0.0
    %2342 = vmatprep.subr.mxu0 0.0
    %2343 = vmatpush1.msra.mxu0 0.0
    %2344 = vmatprep.subr.mxu0 0.0
    %2345 = vmatpush1.msra.mxu0 0.0
    %2346 = vmatprep.mubr.f32.mxu0 0.0
    %2347 = vmatmul.mubr.f32.gmra.mrb[0].mxu0 %v2280
    %v2348 = vpop.f32.mrb[0].mxu0
    %v2349 = vadd.f32 0.0, %v2348
    %v2350 = vpop.f32.mrb[0].mxu0
    %2351 = vdwg.mxu0
    %v2352 = vadd.f32 %v2181, %v2349
    %v2353 = vmul.f32 %v2352, 0.5
    %v2354 = vtanh.pop %v2353
    %v2355 = vmul.f32 %v2354, 0.5
    %v2356 = vadd.f32 %v2355, 0.5
    %v2357 = vtanh.pop %v2352
    %v2358 = vmul.f32 %v2356, %v2102
    %2360 = vrot.lane.b32.xlu0 %v2357, 64
    %v2361 = vpop.permute.xlu0 %2360
    %v2363 = vmul.f32 %v2356, %v2361
    %2365 = vrot.lane.b32.xlu0 %v2363, 32
    %v2366 = vpop.permute.xlu0 %2365
    %v2368 = vadd.f32 %v2358, %v2366
    %v2369 = vtanh.pop %v2368
    %2371 = vrot.lane.b32.xlu0 %v2369, 64
    %v2372 = vpop.permute.xlu0 %2371
    %v2374 = vmul.f32 %v2356, %v2372
    %v2375 = vld [vmem:[%s7] sm:$0xff]
    %v2376 = vld [vmem:[%s7 + $0x8] sm:$0xff]
    %v2377 = vld [vmem:[%s7 + $0x10] sm:$0xff]
    %v2378 = vld [vmem:[%s7 + $0x18] sm:$0xff]
    %v2379 = vld [vmem:[%s8] sm:$0x1]
    %v2381 = vlaneseq
    %v2382 = vshrl.u32 %v2381, 7
    %v2383 = vsub.s32 0, %v2382
    %v2384 = vrot.slane %v2379, %v2383
    %2387 = vrot.lane.b32.xlu0 %v2374, 32
    %v2388 = vpop.permute.xlu0 %2387
    %v2389 = vsel %vm248, %v2388, 0
    %2391 = vmatprep.subr.mxu0 0.0
    %2392 = vmatpush1.msra.mxu0 %v2375
    %2393 = vmatprep.subr.mxu0 0.0
    %2394 = vmatpush1.msra.mxu0 %v2376
    %2395 = vmatprep.subr.mxu0 0.0
    %2396 = vmatpush1.msra.mxu0 %v2377
    %2397 = vmatprep.subr.mxu0 0.0
    %2398 = vmatpush1.msra.mxu0 %v2378
    %2399 = vmatprep.subr.mxu0 0.0
    %2400 = vmatpush1.msra.mxu0 0.0
    %2401 = vmatprep.subr.mxu0 0.0
    %2402 = vmatpush1.msra.mxu0 0.0
    %2403 = vmatprep.subr.mxu0 0.0
    %2404 = vmatpush1.msra.mxu0 0.0
    %2405 = vmatprep.subr.mxu0 0.0
    %2406 = vmatpush1.msra.mxu0 0.0
    %2407 = vmatprep.subr.mxu0 0.0
    %2408 = vmatpush1.msra.mxu0 0.0
    %2409 = vmatprep.subr.mxu0 0.0
    %2410 = vmatpush1.msra.mxu0 0.0
    %2411 = vmatprep.subr.mxu0 0.0
    %2412 = vmatpush1.msra.mxu0 0.0
    %2413 = vmatprep.subr.mxu0 0.0
    %2414 = vmatpush1.msra.mxu0 0.0
    %2415 = vmatprep.subr.mxu0 0.0
    %2416 = vmatpush1.msra.mxu0 0.0
    %2417 = vmatprep.subr.mxu0 0.0
    %2418 = vmatpush1.msra.mxu0 0.0
    %2419 = vmatprep.subr.mxu0 0.0
    %2420 = vmatpush1.msra.mxu0 0.0
    %2421 = vmatprep.subr.mxu0 0.0
    %2422 = vmatpush1.msra.mxu0 0.0
    %2423 = vmatprep.subr.mxu0 0.0
    %2424 = vmatpush1.msra.mxu0 0.0
    %2425 = vmatprep.subr.mxu0 0.0
    %2426 = vmatpush1.msra.mxu0 0.0
    %2427 = vmatprep.subr.mxu0 0.0
    %2428 = vmatpush1.msra.mxu0 0.0
    %2429 = vmatprep.subr.mxu0 0.0
    %2430 = vmatpush1.msra.mxu0 0.0
    %2431 = vmatprep.subr.mxu0 0.0
    %2432 = vmatpush1.msra.mxu0 0.0
    %2433 = vmatprep.subr.mxu0 0.0
    %2434 = vmatpush1.msra.mxu0 0.0
    %2435 = vmatprep.subr.mxu0 0.0
    %2436 = vmatpush1.msra.mxu0 0.0
    %2437 = vmatprep.subr.mxu0 0.0
    %2438 = vmatpush1.msra.mxu0 0.0
    %2439 = vmatprep.subr.mxu0 0.0
    %2440 = vmatpush1.msra.mxu0 0.0
    %2441 = vmatprep.subr.mxu0 0.0
    %2442 = vmatpush1.msra.mxu0 0.0
    %2443 = vmatprep.subr.mxu0 0.0
    %2444 = vmatpush1.msra.mxu0 0.0
    %2445 = vmatprep.subr.mxu0 0.0
    %2446 = vmatpush1.msra.mxu0 0.0
    %2447 = vmatprep.subr.mxu0 0.0
    %2448 = vmatpush1.msra.mxu0 0.0
    %2449 = vmatprep.subr.mxu0 0.0
    %2450 = vmatpush1.msra.mxu0 0.0
    %2451 = vmatprep.subr.mxu0 0.0
    %2452 = vmatpush1.msra.mxu0 0.0
    %2453 = vmatprep.subr.mxu0 0.0
    %2454 = vmatpush1.msra.mxu0 0.0
    %2455 = vmatprep.mubr.f32.mxu0 0.0
    %2456 = vmatmul.mubr.f32.gmra.mrb[0].mxu0 %v2389
    %v2457 = vpop.f32.mrb[0].mxu0
    %v2458 = vadd.f32 %v2384, %v2457
    %v2459 = vpop.f32.mrb[0].mxu0
    %2460 = vdwg.mxu0
    %v2461 = vmax.f32 %v2458, 0.0
    %v2462 = vld [vmem:[%s9] sm:$0xff]
    %v2463 = vld [vmem:[%s9 + $0x8] sm:$0xff]
    %v2464 = vld [vmem:[%s9 + $0x10] sm:$0xff]
    %v2465 = vld [vmem:[%s9 + $0x18] sm:$0xff]
    %v2466 = vld [vmem:[%s10] sm:$0x1]
    %v2468 = vlaneseq
    %v2469 = vshrl.u32 %v2468, 7
    %v2470 = vsub.s32 0, %v2469
    %v2471 = vrot.slane %v2466, %v2470
    %v2474 = vsel %vm248, %v2461, 0
    %2476 = vmatprep.subr.mxu0 0.0
    %2477 = vmatpush1.msra.mxu0 %v2462
    %2478 = vmatprep.subr.mxu0 0.0
    %2479 = vmatpush1.msra.mxu0 %v2463
    %2480 = vmatprep.subr.mxu0 0.0
    %2481 = vmatpush1.msra.mxu0 %v2464
    %2482 = vmatprep.subr.mxu0 0.0
    %2483 = vmatpush1.msra.mxu0 %v2465
    %2484 = vmatprep.subr.mxu0 0.0
    %2485 = vmatpush1.msra.mxu0 0.0
    %2486 = vmatprep.subr.mxu0 0.0
    %2487 = vmatpush1.msra.mxu0 0.0
    %2488 = vmatprep.subr.mxu0 0.0
    %2489 = vmatpush1.msra.mxu0 0.0
    %2490 = vmatprep.subr.mxu0 0.0
    %2491 = vmatpush1.msra.mxu0 0.0
    %2492 = vmatprep.subr.mxu0 0.0
    %2493 = vmatpush1.msra.mxu0 0.0
    %2494 = vmatprep.subr.mxu0 0.0
    %2495 = vmatpush1.msra.mxu0 0.0
    %2496 = vmatprep.subr.mxu0 0.0
    %2497 = vmatpush1.msra.mxu0 0.0
    %2498 = vmatprep.subr.mxu0 0.0
    %2499 = vmatpush1.msra.mxu0 0.0
    %2500 = vmatprep.subr.mxu0 0.0
    %2501 = vmatpush1.msra.mxu0 0.0
    %2502 = vmatprep.subr.mxu0 0.0
    %2503 = vmatpush1.msra.mxu0 0.0
    %2504 = vmatprep.subr.mxu0 0.0
    %2505 = vmatpush1.msra.mxu0 0.0
    %2506 = vmatprep.subr.mxu0 0.0
    %2507 = vmatpush1.msra.mxu0 0.0
    %2508 = vmatprep.subr.mxu0 0.0
    %2509 = vmatpush1.msra.mxu0 0.0
    %2510 = vmatprep.subr.mxu0 0.0
    %2511 = vmatpush1.msra.mxu0 0.0
    %2512 = vmatprep.subr.mxu0 0.0
    %2513 = vmatpush1.msra.mxu0 0.0
    %2514 = vmatprep.subr.mxu0 0.0
    %2515 = vmatpush1.msra.mxu0 0.0
    %2516 = vmatprep.subr.mxu0 0.0
    %2517 = vmatpush1.msra.mxu0 0.0
    %2518 = vmatprep.subr.mxu0 0.0
    %2519 = vmatpush1.msra.mxu0 0.0
    %2520 = vmatprep.subr.mxu0 0.0
    %2521 = vmatpush1.msra.mxu0 0.0
    %2522 = vmatprep.subr.mxu0 0.0
    %2523 = vmatpush1.msra.mxu0 0.0
    %2524 = vmatprep.subr.mxu0 0.0
    %2525 = vmatpush1.msra.mxu0 0.0
    %2526 = vmatprep.subr.mxu0 0.0
    %2527 = vmatpush1.msra.mxu0 0.0
    %2528 = vmatprep.subr.mxu0 0.0
    %2529 = vmatpush1.msra.mxu0 0.0
    %2530 = vmatprep.subr.mxu0 0.0
    %2531 = vmatpush1.msra.mxu0 0.0
    %2532 = vmatprep.subr.mxu0 0.0
    %2533 = vmatpush1.msra.mxu0 0.0
    %2534 = vmatprep.subr.mxu0 0.0
    %2535 = vmatpush1.msra.mxu0 0.0
    %2536 = vmatprep.subr.mxu0 0.0
    %2537 = vmatpush1.msra.mxu0 0.0
    %2538 = vmatprep.subr.mxu0 0.0
    %2539 = vmatpush1.msra.mxu0 0.0
    %2540 = vmatprep.mubr.f32.mxu0 0.0
    %2541 = vmatmul.mubr.f32.gmra.mrb[0].mxu0 %v2474
    %v2542 = vpop.f32.mrb[0].mxu0
    %v2543 = vadd.f32 %v2471, %v2542
    %v2544 = vpop.f32.mrb[0].mxu0
    %2545 = vdwg.mxu0
    %vm2546 = vcmask 41984
    %2547 = vst.msk [vmem:[#allocation8] sm:$0x3] %vm2546, %v2543
    // Predicated region
    $region58: #{robot_arm_forward.1} parent=1 // pred_check
      _
    $region59: #{robot_arm_forward.1} parent=1 // pred_check_branch
      %2549 = sbr.rel (0) target = $region61
    $region60: #{robot_arm_forward.1} parent=1 // pred_region
      %s2551 = ssub.s32 32, 32
      %2552 = vsyncadd [#allocation4], %s2551
      %s2554 = sshll.u32 [#allocation8], 4
      %s2555 = int_to_ptr.vmem [resolvable:$true] %s2554
      %2557 = dma.vmem_to_hbm [thread:$0]  %s2555, 32, %s11, [#allocation4]
    $region61: #{robot_arm_forward.1} parent=1 // pred_fallthru
      _
    // Predicated region
    $region62: #{robot_arm_forward.1} parent=1 // pred_check
      _
    $region63: #{robot_arm_forward.1} parent=1 // pred_check_branch
      %2559 = sbr.rel (0) target = $region65
    $region64: #{robot_arm_forward.1} parent=1 // pred_region
      %2560 = dma.done [#allocation4], 32
    $region65: #{robot_arm_forward.1} parent=1 // pred_fallthru
      _
    %2561 = vsyncpa [#allocation3], 1
    %2562 = vsyncpa [#allocation6], 1
    %2563 = vsyncpa [#allocation4], 1

</llo_original>
